<compile_context>
chip_gen: v7x
topology: tpu7x:2x2x1
jax: 0.10.0
libtpu: 0.0.40
codegen_flags: <defaults>
</compile_context>

<pallas_src>
import math

import numpy as np
import jax
import jax.numpy as jnp
from jax import lax
from jax.experimental import pallas as pl

LN_EPS = 1e-5
_NEG_INF = -1e30


# ---------------------------------------------------------------------------
# helpers
# ---------------------------------------------------------------------------
def _ln(x, gamma, beta, eps=LN_EPS):
    """In-kernel layernorm over the last axis (gamma/beta are (1, C) rows)."""
    mean = jnp.mean(x, axis=-1, keepdims=True)
    xc = x - mean
    var = jnp.mean(xc * xc, axis=-1, keepdims=True)
    return xc * lax.rsqrt(var + eps) * gamma + beta


def _fast_recip(x):
    """EUP reciprocal seed + one Newton step -> f32-accurate 1/x off the VALU."""
    r = pl.reciprocal(x, approx=True)
    return r * (2.0 - x * r)


# ---------------------------------------------------------------------------
# fused TimeDecoderLayer kernel (single invocation, everything resident in VMEM)
# ---------------------------------------------------------------------------
def _time_decoder_layer_kernel(x_ref, qk_ref, qpos_ref, memk_ref, memv_ref,
                               gpack_ref, gscat_ref, sbias_ref, cbias_ref, hmask_ref,
                               sa_wqk_ref, sa_bqk_ref, wcc_ref,
                               w1_ref, b1_ref, w2_ref, vecs_ref,
                               out_ref, attw_ref):
    x = x_ref[...]                           # (B*T, C)  tgt, batch-major flattened
    bt, c = x.shape
    b, t = attw_ref.shape[0], attw_ref.shape[1]
    nhead = hmask_ref.shape[0]
    dh = c // nhead
    scale = 1.0 / math.sqrt(dh)

    # consolidated small parameters
    vecs = vecs_ref[...]                     # (13, C)
    sa_bv, sa_bo = vecs[0:1], vecs[1:2]
    ca_bq, ca_bk, ca_bv, ca_bo = vecs[2:3], vecs[3:4], vecs[4:5], vecs[5:6]
    b2 = vecs[6:7]
    g1, bn1 = vecs[7:8], vecs[8:9]
    g3, bn3 = vecs[9:10], vecs[10:11]
    g4, bn4 = vecs[11:12], vecs[12:13]

    sa_wv, sa_wo = wcc_ref[0], wcc_ref[1]
    ca_wq, ca_wk, ca_wv, ca_wo = wcc_ref[2], wcc_ref[3], wcc_ref[4], wcc_ref[5]

    hmask = hmask_ref[...]                   # (nhead, C) 0/1 head selectors

    # ---- self attention: fused Q/K projection, head-masked batched scores ----
    qk_in = qk_ref[...]                      # (B*T, C)  tgt + query_pos + query_time_pos
    qkp = jnp.dot(qk_in, sa_wqk_ref[...],
                  preferred_element_type=jnp.float32) + sa_bqk_ref[...]   # (B*T, 2C)
    q = qkp[:, :c]
    k = qkp[:, c:]
    v = jnp.dot(x, sa_wv, preferred_element_type=jnp.float32) + sa_bv     # value = tgt

    sbias = sbias_ref[...]                   # (B*T, B*T) additive clip-block mask
    o_acc = jnp.zeros((bt, c), jnp.float32)
    p_sum = jnp.zeros((bt, bt), jnp.float32)
    for h in range(nhead):                   # full-width per-head ops, no relayouts/concat
        hm = hmask[h:h + 1, :]               # (1, C)
        s = jnp.dot(q * hm, (k * hm).T,
                    preferred_element_type=jnp.float32) * scale + sbias
        s = s - jnp.max(s, axis=-1, keepdims=True)
        e = jnp.exp(s)
        p = e * _fast_recip(jnp.sum(e, axis=-1, keepdims=True))
        p_sum = p_sum + p
        o_acc = o_acc + jnp.dot(p, v * hm, preferred_element_type=jnp.float32)

    attn_out = jnp.dot(o_acc, sa_wo, preferred_element_type=jnp.float32) + sa_bo
    normed1 = _ln(x + attn_out, g1, bn1)     # dropout1 = identity, norm1

    # head-averaged attention weights; per-clip (t, t) diagonal blocks
    p_avg = p_sum * (1.0 / nhead)
    for i in range(b):
        attw_ref[i] = p_avg[i * t:(i + 1) * t, i * t:(i + 1) * t]

    # ---- cross attention: all frames batched, pack/scatter via 0/1 matmuls ----
    qc_in = jnp.dot(gpack_ref[...], normed1 + qpos_ref[...],
                    preferred_element_type=jnp.float32)                    # (bs, C)
    qc = jnp.dot(qc_in, ca_wq, preferred_element_type=jnp.float32) + ca_bq
    kc = jnp.dot(memk_ref[...], ca_wk, preferred_element_type=jnp.float32) + ca_bk  # (bs*S, C)
    vc = jnp.dot(memv_ref[...], ca_wv, preferred_element_type=jnp.float32) + ca_bv  # (bs*S, C)

    cbias = cbias_ref[...]                   # (bs, bs*S) additive frame-block mask
    bs = qc.shape[0]
    oc = jnp.zeros((bs, c), jnp.float32)
    for h in range(nhead):
        hm = hmask[h:h + 1, :]
        s = jnp.dot(qc * hm, (kc * hm).T,
                    preferred_element_type=jnp.float32) * scale + cbias
        s = s - jnp.max(s, axis=-1, keepdims=True)
        e = jnp.exp(s)
        p = e * _fast_recip(jnp.sum(e, axis=-1, keepdims=True))
        oc = oc + jnp.dot(p, vc * hm, preferred_element_type=jnp.float32)

    cross = jnp.dot(oc, ca_wo, preferred_element_type=jnp.float32) + ca_bo          # (bs, C)
    tgt2 = jnp.dot(gscat_ref[...], cross, preferred_element_type=jnp.float32)       # (B*T, C) zero padded

    # ---- norm3 + FFN + norm4 ----
    n3 = _ln(normed1 + tgt2, g3, bn3)                                     # dropout3 = identity
    hid = jnp.maximum(
        jnp.dot(n3, w1_ref[...], preferred_element_type=jnp.float32) + b1_ref[...], 0.0)
    ffn = jnp.dot(hid, w2_ref[...], preferred_element_type=jnp.float32) + b2
    out_ref[...] = _ln(n3 + ffn, g4, bn4)                                 # dropout4 = identity


# ---------------------------------------------------------------------------
# wrapper: layout plumbing + static (durations-derived) operators + one pallas_call
# ---------------------------------------------------------------------------
def time_decoder_layer_forward(tgt, memory, query_pos, query_time_pos, pos,
                               durations, p, nhead):
    t, b, c = tgt.shape
    s, bs, _ = memory.shape
    assert sum(durations) == bs
    assert c % nhead == 0
    bt = b * t
    dh = c // nhead

    # batch-major, flattened activation slabs
    x2d = jnp.transpose(tgt, (1, 0, 2)).reshape(bt, c)
    qk2d = jnp.transpose(tgt + query_pos + query_time_pos, (1, 0, 2)).reshape(bt, c)
    qpos2d = jnp.transpose(query_pos, (1, 0, 2)).reshape(bt, c)
    memk2d = jnp.transpose(memory + pos, (1, 0, 2)).reshape(bs * s, c)
    memv2d = jnp.transpose(memory, (1, 0, 2)).reshape(bs * s, c)

    # static (durations-derived) pack/scatter operators and attention biases
    g_np = np.zeros((bs, bt), np.float32)            # pack: frame k <- row (clip_i, time_j)
    off = 0
    for i, dlen in enumerate(durations):
        for j in range(dlen):
            g_np[off + j, i * t + j] = 1.0
        off += dlen
    sbias_np = np.full((bt, bt), _NEG_INF, np.float32)   # self-attn: attend within own clip
    for i in range(b):
        sbias_np[i * t:(i + 1) * t, i * t:(i + 1) * t] = 0.0
    cbias_np = np.full((bs, bs * s), _NEG_INF, np.float32)  # cross-attn: frame -> own memory
    for f in range(bs):
        cbias_np[f, f * s:(f + 1) * s] = 0.0
    hmask_np = np.zeros((nhead, c), np.float32)          # 0/1 head column selectors
    for h in range(nhead):
        hmask_np[h, h * dh:(h + 1) * dh] = 1.0

    g_pack = jnp.asarray(g_np)
    g_scat = jnp.asarray(np.ascontiguousarray(g_np.T))
    sbias = jnp.asarray(sbias_np)
    cbias = jnp.asarray(cbias_np)
    hmask = jnp.asarray(hmask_np)

    # weight plumbing: fuse self-attn Q/K, stack (C,C) weights, stack (C,) vectors
    sa_wq, sa_wk, sa_wv = p['sa_in_w'][:c], p['sa_in_w'][c:2 * c], p['sa_in_w'][2 * c:]
    sa_bq, sa_bk, sa_bv = p['sa_in_b'][:c], p['sa_in_b'][c:2 * c], p['sa_in_b'][2 * c:]
    ca_wq, ca_wk, ca_wv = p['ca_in_w'][:c], p['ca_in_w'][c:2 * c], p['ca_in_w'][2 * c:]
    ca_bq, ca_bk, ca_bv = p['ca_in_b'][:c], p['ca_in_b'][c:2 * c], p['ca_in_b'][2 * c:]

    sa_wqk = jnp.concatenate([sa_wq.T, sa_wk.T], axis=1)          # (c, 2c)
    sa_bqk = jnp.concatenate([sa_bq, sa_bk])[None, :]             # (1, 2c)
    w_cc = jnp.stack([sa_wv.T, p['sa_out_w'].T,
                      ca_wq.T, ca_wk.T, ca_wv.T, p['ca_out_w'].T])  # (6, c, c)
    vecs = jnp.stack([sa_bv, p['sa_out_b'],
                      ca_bq, ca_bk, ca_bv, p['ca_out_b'],
                      p['b2'],
                      p['g1'], p['bn1'], p['g3'], p['bn3'], p['g4'], p['bn4']])  # (13, c)

    out2d, attw = pl.pallas_call(
        _time_decoder_layer_kernel,
        out_shape=[jax.ShapeDtypeStruct((bt, c), jnp.float32),
                   jax.ShapeDtypeStruct((b, t, t), jnp.float32)],
    )(x2d, qk2d, qpos2d, memk2d, memv2d,
      g_pack, g_scat, sbias, cbias, hmask,
      sa_wqk, sa_bqk, w_cc,
      p['w1'].T, p['b1'][None, :], p['w2'].T, vecs)

    out = jnp.transpose(out2d.reshape(b, t, c), (1, 0, 2))   # back to (t, b, c)
    return out, attw


# ---------------------------------------------------------------------------
# Pure-JAX reference (mirrors PyTorch semantics) for verification
# ---------------------------------------------------------------------------
def _layernorm_ref(x, gamma, beta, eps=LN_EPS):
    mean = jnp.mean(x, axis=-1, keepdims=True)
    var = jnp.mean((x - mean) ** 2, axis=-1, keepdims=True)
    return (x - mean) / jnp.sqrt(var + eps) * gamma + beta


def _mha_ref(q_in, k_in, v_in, in_w, in_b, out_w, out_b, nhead):
    L, N, C = q_in.shape
    S = k_in.shape[0]
    dh = C // nhead
    scale = 1.0 / math.sqrt(dh)
    wq, wk, wv = in_w[:C], in_w[C:2 * C], in_w[2 * C:]
    bq, bk, bv = in_b[:C], in_b[C:2 * C], in_b[2 * C:]
    q = q_in @ wq.T + bq
    k = k_in @ wk.T + bk
    v = v_in @ wv.T + bv
    qh = q.reshape(L, N, nhead, dh).transpose(1, 2, 0, 3)
    kh = k.reshape(S, N, nhead, dh).transpose(1, 2, 0, 3)
    vh = v.reshape(S, N, nhead, dh).transpose(1, 2, 0, 3)
    sc = jnp.einsum('nhld,nhsd->nhls', qh, kh) * scale
    pattn = jax.nn.softmax(sc, axis=-1)
    o = jnp.einsum('nhls,nhsd->nhld', pattn, vh)
    o = o.transpose(2, 0, 1, 3).reshape(L, N, C)
    return o @ out_w.T + out_b, pattn.mean(axis=1)


def reference_forward(tgt, memory, query_pos, query_time_pos, pos, durations, p, nhead):
    t, b, c = tgt.shape
    _, bs, _ = memory.shape
    qk = tgt + query_pos + query_time_pos
    tgt2, weights = _mha_ref(qk, qk, tgt, p['sa_in_w'], p['sa_in_b'],
                             p['sa_out_w'], p['sa_out_b'], nhead)
    x = _layernorm_ref(tgt + tgt2, p['g1'], p['bn1'])
    tgt_cross = jnp.concatenate([x[:durations[i], i, :] for i in range(b)], 0)[None]
    qp_cross = jnp.concatenate([query_pos[:durations[i], i, :] for i in range(b)], 0)[None]
    tgt2c, _ = _mha_ref(tgt_cross + qp_cross, memory + pos, memory,
                        p['ca_in_w'], p['ca_in_b'], p['ca_out_w'], p['ca_out_b'], nhead)
    pad = jnp.zeros((b, t, c), jnp.float32)
    start = 0
    for i in range(b):
        d = durations[i]
        pad = pad.at[i, :d].set(tgt2c[0, start:start + d])
        start += d
    tgt2s = jnp.transpose(pad, (1, 0, 2))
    x2 = _layernorm_ref(x + tgt2s, p['g3'], p['bn3'])
    ffn = jnp.maximum(x2 @ p['w1'].T + p['b1'], 0.0) @ p['w2'].T + p['b2']
    out = _layernorm_ref(x2 + ffn, p['g4'], p['bn4'])
    return out, weights


def init_params(key, c, dff):
    keys = jax.random.split(key, 12)
    s = 0.05
    p = {
        'sa_in_w': jax.random.normal(keys[0], (3 * c, c), jnp.float32) * s,
        'sa_in_b': jax.random.normal(keys[1], (3 * c,), jnp.float32) * s,
        'sa_out_w': jax.random.normal(keys[2], (c, c), jnp.float32) * s,
        'sa_out_b': jax.random.normal(keys[3], (c,), jnp.float32) * s,
        'ca_in_w': jax.random.normal(keys[4], (3 * c, c), jnp.float32) * s,
        'ca_in_b': jax.random.normal(keys[5], (3 * c,), jnp.float32) * s,
        'ca_out_w': jax.random.normal(keys[6], (c, c), jnp.float32) * s,
        'ca_out_b': jax.random.normal(keys[7], (c,), jnp.float32) * s,
        'w1': jax.random.normal(keys[8], (dff, c), jnp.float32) * s,
        'b1': jax.random.normal(keys[9], (dff,), jnp.float32) * s,
        'w2': jax.random.normal(keys[10], (c, dff), jnp.float32) * s,
        'b2': jax.random.normal(keys[11], (c,), jnp.float32) * s,
        'g1': jnp.ones((c,), jnp.float32), 'bn1': jnp.zeros((c,), jnp.float32),
        'g3': jnp.full((c,), 1.1, jnp.float32), 'bn3': jnp.full((c,), 0.05, jnp.float32),
        'g4': jnp.full((c,), 0.9, jnp.float32), 'bn4': jnp.full((c,), -0.02, jnp.float32),
    }
    return p


if __name__ == "__main__":
    T, B, C = 8, 2, 32           # t queries, b clips, d_model
    NHEAD = 4
    DFF = 64
    S = 16                       # n_tokens in memory
    durations = [5, 3]           # per-clip lengths; sum == bs
    BS = sum(durations)

    key = jax.random.PRNGKey(0)
    kt, km, kqp, kqtp, kpos, kp = jax.random.split(key, 6)
    tgt = jax.random.normal(kt, (T, B, C), jnp.float32)
    memory = jax.random.normal(km, (S, BS, C), jnp.float32)
    query_pos = jax.random.normal(kqp, (T, B, C), jnp.float32) * 0.1
    query_time_pos = jax.random.normal(kqtp, (T, B, C), jnp.float32) * 0.1
    pos = jax.random.normal(kpos, (S, BS, C), jnp.float32) * 0.1
    params = init_params(kp, C, DFF)

    out, attw = time_decoder_layer_forward(tgt, memory, query_pos, query_time_pos,
                                           pos, durations, params, NHEAD)
    out = jax.block_until_ready(out)
    attw = jax.block_until_ready(attw)

    ref_out, ref_w = reference_forward(tgt, memory, query_pos, query_time_pos,
                                       pos, durations, params, NHEAD)

    assert out.shape == (T, B, C) and attw.shape == (B, T, T)
    assert jnp.allclose(out, ref_out, atol=1e-3, rtol=1e-3), "output mismatch vs reference"
    assert jnp.allclose(attw, ref_w, atol=1e-3, rtol=1e-3), "attn weights mismatch vs reference"
    print("KERNEL_OK")
</pallas_src>

<mosaic_0001>
module attributes {stable_mosaic.version = 11 : i64} {
  func.func @_time_decoder_layer_kernel(%arg0: memref<16x32xf32, #tpu.memory_space<vmem>>, %arg1: memref<16x32xf32, #tpu.memory_space<vmem>>, %arg2: memref<16x32xf32, #tpu.memory_space<vmem>>, %arg3: memref<128x32xf32, #tpu.memory_space<vmem>>, %arg4: memref<128x32xf32, #tpu.memory_space<vmem>>, %arg5: memref<8x16xf32, #tpu.memory_space<vmem>>, %arg6: memref<16x8xf32, #tpu.memory_space<vmem>>, %arg7: memref<16x16xf32, #tpu.memory_space<vmem>>, %arg8: memref<8x128xf32, #tpu.memory_space<vmem>>, %arg9: memref<4x32xf32, #tpu.memory_space<vmem>>, %arg10: memref<32x64xf32, #tpu.memory_space<vmem>>, %arg11: memref<1x64xf32, #tpu.memory_space<vmem>>, %arg12: memref<6x32x32xf32, #tpu.memory_space<vmem>>, %arg13: memref<32x64xf32, #tpu.memory_space<vmem>>, %arg14: memref<1x64xf32, #tpu.memory_space<vmem>>, %arg15: memref<64x32xf32, #tpu.memory_space<vmem>>, %arg16: memref<13x32xf32, #tpu.memory_space<vmem>>, %arg17: memref<16x32xf32, #tpu.memory_space<vmem>>, %arg18: memref<2x8x8xf32, #tpu.memory_space<vmem>>) attributes {dimension_semantics = [], scalar_prefetch = 0 : i64, scratch_operands = 0 : i64, tpu.core_type = #tpu.core_type<tc>} {
    %c0 = arith.constant 0 : index
    %c0_0 = arith.constant 0 : index
    %0 = vector.load %arg0[%c0, %c0_0] : memref<16x32xf32, #tpu.memory_space<vmem>>, vector<16x32xf32>
    %c0_1 = arith.constant 0 : index
    %c0_2 = arith.constant 0 : index
    %1 = vector.load %arg16[%c0_1, %c0_2] : memref<13x32xf32, #tpu.memory_space<vmem>>, vector<13x32xf32>
    %2 = vector.extract_strided_slice %1 {offsets = [0, 0], sizes = [1, 32], strides = [1, 1]} : vector<13x32xf32> to vector<1x32xf32>
    %3 = vector.extract_strided_slice %1 {offsets = [1, 0], sizes = [1, 32], strides = [1, 1]} : vector<13x32xf32> to vector<1x32xf32>
    %4 = vector.extract_strided_slice %1 {offsets = [2, 0], sizes = [1, 32], strides = [1, 1]} : vector<13x32xf32> to vector<1x32xf32>
    %5 = vector.extract_strided_slice %1 {offsets = [3, 0], sizes = [1, 32], strides = [1, 1]} : vector<13x32xf32> to vector<1x32xf32>
    %6 = vector.extract_strided_slice %1 {offsets = [4, 0], sizes = [1, 32], strides = [1, 1]} : vector<13x32xf32> to vector<1x32xf32>
    %7 = vector.extract_strided_slice %1 {offsets = [5, 0], sizes = [1, 32], strides = [1, 1]} : vector<13x32xf32> to vector<1x32xf32>
    %8 = vector.extract_strided_slice %1 {offsets = [6, 0], sizes = [1, 32], strides = [1, 1]} : vector<13x32xf32> to vector<1x32xf32>
    %9 = vector.extract_strided_slice %1 {offsets = [7, 0], sizes = [1, 32], strides = [1, 1]} : vector<13x32xf32> to vector<1x32xf32>
    %10 = vector.extract_strided_slice %1 {offsets = [8, 0], sizes = [1, 32], strides = [1, 1]} : vector<13x32xf32> to vector<1x32xf32>
    %11 = vector.extract_strided_slice %1 {offsets = [9, 0], sizes = [1, 32], strides = [1, 1]} : vector<13x32xf32> to vector<1x32xf32>
    %12 = vector.extract_strided_slice %1 {offsets = [10, 0], sizes = [1, 32], strides = [1, 1]} : vector<13x32xf32> to vector<1x32xf32>
    %13 = vector.extract_strided_slice %1 {offsets = [11, 0], sizes = [1, 32], strides = [1, 1]} : vector<13x32xf32> to vector<1x32xf32>
    %14 = vector.extract_strided_slice %1 {offsets = [12, 0], sizes = [1, 32], strides = [1, 1]} : vector<13x32xf32> to vector<1x32xf32>
    %c0_3 = arith.constant 0 : index
    %c0_4 = arith.constant 0 : index
    %c0_5 = arith.constant 0 : index
    %15 = vector.load %arg12[%c0_3, %c0_4, %c0_5] : memref<6x32x32xf32, #tpu.memory_space<vmem>>, vector<1x32x32xf32>
    %16 = vector.shape_cast %15 : vector<1x32x32xf32> to vector<32x32xf32>
    %c1 = arith.constant 1 : index
    %c0_6 = arith.constant 0 : index
    %c0_7 = arith.constant 0 : index
    %17 = vector.load %arg12[%c1, %c0_6, %c0_7] : memref<6x32x32xf32, #tpu.memory_space<vmem>>, vector<1x32x32xf32>
    %18 = vector.shape_cast %17 : vector<1x32x32xf32> to vector<32x32xf32>
    %c2 = arith.constant 2 : index
    %c0_8 = arith.constant 0 : index
    %c0_9 = arith.constant 0 : index
    %19 = vector.load %arg12[%c2, %c0_8, %c0_9] : memref<6x32x32xf32, #tpu.memory_space<vmem>>, vector<1x32x32xf32>
    %20 = vector.shape_cast %19 : vector<1x32x32xf32> to vector<32x32xf32>
    %c3 = arith.constant 3 : index
    %c0_10 = arith.constant 0 : index
    %c0_11 = arith.constant 0 : index
    %21 = vector.load %arg12[%c3, %c0_10, %c0_11] : memref<6x32x32xf32, #tpu.memory_space<vmem>>, vector<1x32x32xf32>
    %22 = vector.shape_cast %21 : vector<1x32x32xf32> to vector<32x32xf32>
    %c4 = arith.constant 4 : index
    %c0_12 = arith.constant 0 : index
    %c0_13 = arith.constant 0 : index
    %23 = vector.load %arg12[%c4, %c0_12, %c0_13] : memref<6x32x32xf32, #tpu.memory_space<vmem>>, vector<1x32x32xf32>
    %24 = vector.shape_cast %23 : vector<1x32x32xf32> to vector<32x32xf32>
    %c5 = arith.constant 5 : index
    %c0_14 = arith.constant 0 : index
    %c0_15 = arith.constant 0 : index
    %25 = vector.load %arg12[%c5, %c0_14, %c0_15] : memref<6x32x32xf32, #tpu.memory_space<vmem>>, vector<1x32x32xf32>
    %26 = vector.shape_cast %25 : vector<1x32x32xf32> to vector<32x32xf32>
    %c0_16 = arith.constant 0 : index
    %c0_17 = arith.constant 0 : index
    %27 = vector.load %arg9[%c0_16, %c0_17] : memref<4x32xf32, #tpu.memory_space<vmem>>, vector<4x32xf32>
    %c0_18 = arith.constant 0 : index
    %c0_19 = arith.constant 0 : index
    %28 = vector.load %arg1[%c0_18, %c0_19] : memref<16x32xf32, #tpu.memory_space<vmem>>, vector<16x32xf32>
    %c0_20 = arith.constant 0 : index
    %c0_21 = arith.constant 0 : index
    %29 = vector.load %arg10[%c0_20, %c0_21] : memref<32x64xf32, #tpu.memory_space<vmem>>, vector<32x64xf32>
    %cst = arith.constant dense<0.000000e+00> : vector<16x64xf32>
    %30 = tpu.matmul %28, %29, %cst {dimension_numbers = #tpu.dot_dimension_numbers<[1], [0], [0], [1], [0, 0, 1, 1], [], []>} : vector<16x32xf32>, vector<32x64xf32>, vector<16x64xf32> -> vector<16x64xf32>
    %c0_22 = arith.constant 0 : index
    %c0_23 = arith.constant 0 : index
    %31 = vector.load %arg11[%c0_22, %c0_23] : memref<1x64xf32, #tpu.memory_space<vmem>>, vector<1x64xf32>
    %32 = vector.broadcast %31 : vector<1x64xf32> to vector<16x64xf32>
    %33 = arith.addf %30, %32 : vector<16x64xf32>
    %34 = vector.extract_strided_slice %33 {offsets = [0, 0], sizes = [16, 32], strides = [1, 1]} : vector<16x64xf32> to vector<16x32xf32>
    %35 = vector.extract_strided_slice %33 {offsets = [0, 32], sizes = [16, 32], strides = [1, 1]} : vector<16x64xf32> to vector<16x32xf32>
    %cst_24 = arith.constant dense<0.000000e+00> : vector<16x32xf32>
    %36 = tpu.matmul %0, %16, %cst_24 {dimension_numbers = #tpu.dot_dimension_numbers<[1], [0], [0], [1], [0, 0, 1, 1], [], []>} : vector<16x32xf32>, vector<32x32xf32>, vector<16x32xf32> -> vector<16x32xf32>
    %37 = vector.broadcast %2 : vector<1x32xf32> to vector<16x32xf32>
    %38 = arith.addf %36, %37 : vector<16x32xf32>
    %c0_25 = arith.constant 0 : index
    %c0_26 = arith.constant 0 : index
    %39 = vector.load %arg7[%c0_25, %c0_26] : memref<16x16xf32, #tpu.memory_space<vmem>>, vector<16x16xf32>
    %cst_27 = arith.constant 0.000000e+00 : f32
    %40 = vector.broadcast %cst_27 : f32 to vector<16x32xf32>
    %cst_28 = arith.constant 0.000000e+00 : f32
    %41 = vector.broadcast %cst_28 : f32 to vector<16x16xf32>
    %42 = vector.extract_strided_slice %27 {offsets = [0, 0], sizes = [1, 32], strides = [1, 1]} : vector<4x32xf32> to vector<1x32xf32>
    %43 = vector.broadcast %42 : vector<1x32xf32> to vector<16x32xf32>
    %44 = arith.mulf %34, %43 : vector<16x32xf32>
    %45 = vector.broadcast %42 : vector<1x32xf32> to vector<16x32xf32>
    %46 = arith.mulf %35, %45 : vector<16x32xf32>
    %47 = tpu.transpose %46, [1, 0] : vector<16x32xf32> -> vector<32x16xf32>
    %cst_29 = arith.constant dense<0.000000e+00> : vector<16x16xf32>
    %48 = tpu.matmul %44, %47, %cst_29 {dimension_numbers = #tpu.dot_dimension_numbers<[1], [0], [0], [1], [0, 0, 1, 1], [], []>} : vector<16x32xf32>, vector<32x16xf32>, vector<16x16xf32> -> vector<16x16xf32>
    %cst_30 = arith.constant 0.353553385 : f32
    %49 = vector.broadcast %cst_30 : f32 to vector<16x16xf32>
    %50 = arith.mulf %48, %49 : vector<16x16xf32>
    %51 = arith.addf %50, %39 : vector<16x16xf32>
    %cst_31 = arith.constant dense<0xFF800000> : vector<16xf32>
    %52 = vector.multi_reduction <maximumf>, %51, %cst_31 [1] : vector<16x16xf32> to vector<16xf32>
    %53 = vector.shape_cast %52 : vector<16xf32> to vector<16x1xf32>
    %54 = vector.broadcast %53 : vector<16x1xf32> to vector<16x16xf32>
    %55 = arith.subf %51, %54 : vector<16x16xf32>
    %56 = math.exp %55 : vector<16x16xf32>
    %cst_32 = arith.constant dense<0.000000e+00> : vector<16xf32>
    %57 = vector.multi_reduction <add>, %56, %cst_32 [1] : vector<16x16xf32> to vector<16xf32>
    %58 = vector.shape_cast %57 : vector<16xf32> to vector<16x1xf32>
    %59 = tpu.reciprocal %58 {approx = true} : vector<16x1xf32> -> vector<16x1xf32>
    %60 = arith.mulf %58, %59 : vector<16x1xf32>
    %cst_33 = arith.constant 2.000000e+00 : f32
    %61 = vector.broadcast %cst_33 : f32 to vector<16x1xf32>
    %62 = arith.subf %61, %60 : vector<16x1xf32>
    %63 = arith.mulf %59, %62 : vector<16x1xf32>
    %64 = vector.broadcast %63 : vector<16x1xf32> to vector<16x16xf32>
    %65 = arith.mulf %56, %64 : vector<16x16xf32>
    %66 = arith.addf %41, %65 : vector<16x16xf32>
    %67 = vector.broadcast %42 : vector<1x32xf32> to vector<16x32xf32>
    %68 = arith.mulf %38, %67 : vector<16x32xf32>
    %cst_34 = arith.constant dense<0.000000e+00> : vector<16x32xf32>
    %69 = tpu.matmul %65, %68, %cst_34 {dimension_numbers = #tpu.dot_dimension_numbers<[1], [0], [0], [1], [0, 0, 1, 1], [], []>} : vector<16x16xf32>, vector<16x32xf32>, vector<16x32xf32> -> vector<16x32xf32>
    %70 = arith.addf %40, %69 : vector<16x32xf32>
    %71 = vector.extract_strided_slice %27 {offsets = [1, 0], sizes = [1, 32], strides = [1, 1]} : vector<4x32xf32> to vector<1x32xf32>
    %72 = vector.broadcast %71 : vector<1x32xf32> to vector<16x32xf32>
    %73 = arith.mulf %34, %72 : vector<16x32xf32>
    %74 = vector.broadcast %71 : vector<1x32xf32> to vector<16x32xf32>
    %75 = arith.mulf %35, %74 : vector<16x32xf32>
    %76 = tpu.transpose %75, [1, 0] : vector<16x32xf32> -> vector<32x16xf32>
    %cst_35 = arith.constant dense<0.000000e+00> : vector<16x16xf32>
    %77 = tpu.matmul %73, %76, %cst_35 {dimension_numbers = #tpu.dot_dimension_numbers<[1], [0], [0], [1], [0, 0, 1, 1], [], []>} : vector<16x32xf32>, vector<32x16xf32>, vector<16x16xf32> -> vector<16x16xf32>
    %cst_36 = arith.constant 0.353553385 : f32
    %78 = vector.broadcast %cst_36 : f32 to vector<16x16xf32>
    %79 = arith.mulf %77, %78 : vector<16x16xf32>
    %80 = arith.addf %79, %39 : vector<16x16xf32>
    %cst_37 = arith.constant dense<0xFF800000> : vector<16xf32>
    %81 = vector.multi_reduction <maximumf>, %80, %cst_37 [1] : vector<16x16xf32> to vector<16xf32>
    %82 = vector.shape_cast %81 : vector<16xf32> to vector<16x1xf32>
    %83 = vector.broadcast %82 : vector<16x1xf32> to vector<16x16xf32>
    %84 = arith.subf %80, %83 : vector<16x16xf32>
    %85 = math.exp %84 : vector<16x16xf32>
    %cst_38 = arith.constant dense<0.000000e+00> : vector<16xf32>
    %86 = vector.multi_reduction <add>, %85, %cst_38 [1] : vector<16x16xf32> to vector<16xf32>
    %87 = vector.shape_cast %86 : vector<16xf32> to vector<16x1xf32>
    %88 = tpu.reciprocal %87 {approx = true} : vector<16x1xf32> -> vector<16x1xf32>
    %89 = arith.mulf %87, %88 : vector<16x1xf32>
    %cst_39 = arith.constant 2.000000e+00 : f32
    %90 = vector.broadcast %cst_39 : f32 to vector<16x1xf32>
    %91 = arith.subf %90, %89 : vector<16x1xf32>
    %92 = arith.mulf %88, %91 : vector<16x1xf32>
    %93 = vector.broadcast %92 : vector<16x1xf32> to vector<16x16xf32>
    %94 = arith.mulf %85, %93 : vector<16x16xf32>
    %95 = arith.addf %66, %94 : vector<16x16xf32>
    %96 = vector.broadcast %71 : vector<1x32xf32> to vector<16x32xf32>
    %97 = arith.mulf %38, %96 : vector<16x32xf32>
    %cst_40 = arith.constant dense<0.000000e+00> : vector<16x32xf32>
    %98 = tpu.matmul %94, %97, %cst_40 {dimension_numbers = #tpu.dot_dimension_numbers<[1], [0], [0], [1], [0, 0, 1, 1], [], []>} : vector<16x16xf32>, vector<16x32xf32>, vector<16x32xf32> -> vector<16x32xf32>
    %99 = arith.addf %70, %98 : vector<16x32xf32>
    %100 = vector.extract_strided_slice %27 {offsets = [2, 0], sizes = [1, 32], strides = [1, 1]} : vector<4x32xf32> to vector<1x32xf32>
    %101 = vector.broadcast %100 : vector<1x32xf32> to vector<16x32xf32>
    %102 = arith.mulf %34, %101 : vector<16x32xf32>
    %103 = vector.broadcast %100 : vector<1x32xf32> to vector<16x32xf32>
    %104 = arith.mulf %35, %103 : vector<16x32xf32>
    %105 = tpu.transpose %104, [1, 0] : vector<16x32xf32> -> vector<32x16xf32>
    %cst_41 = arith.constant dense<0.000000e+00> : vector<16x16xf32>
    %106 = tpu.matmul %102, %105, %cst_41 {dimension_numbers = #tpu.dot_dimension_numbers<[1], [0], [0], [1], [0, 0, 1, 1], [], []>} : vector<16x32xf32>, vector<32x16xf32>, vector<16x16xf32> -> vector<16x16xf32>
    %cst_42 = arith.constant 0.353553385 : f32
    %107 = vector.broadcast %cst_42 : f32 to vector<16x16xf32>
    %108 = arith.mulf %106, %107 : vector<16x16xf32>
    %109 = arith.addf %108, %39 : vector<16x16xf32>
    %cst_43 = arith.constant dense<0xFF800000> : vector<16xf32>
    %110 = vector.multi_reduction <maximumf>, %109, %cst_43 [1] : vector<16x16xf32> to vector<16xf32>
    %111 = vector.shape_cast %110 : vector<16xf32> to vector<16x1xf32>
    %112 = vector.broadcast %111 : vector<16x1xf32> to vector<16x16xf32>
    %113 = arith.subf %109, %112 : vector<16x16xf32>
    %114 = math.exp %113 : vector<16x16xf32>
    %cst_44 = arith.constant dense<0.000000e+00> : vector<16xf32>
    %115 = vector.multi_reduction <add>, %114, %cst_44 [1] : vector<16x16xf32> to vector<16xf32>
    %116 = vector.shape_cast %115 : vector<16xf32> to vector<16x1xf32>
    %117 = tpu.reciprocal %116 {approx = true} : vector<16x1xf32> -> vector<16x1xf32>
    %118 = arith.mulf %116, %117 : vector<16x1xf32>
    %cst_45 = arith.constant 2.000000e+00 : f32
    %119 = vector.broadcast %cst_45 : f32 to vector<16x1xf32>
    %120 = arith.subf %119, %118 : vector<16x1xf32>
    %121 = arith.mulf %117, %120 : vector<16x1xf32>
    %122 = vector.broadcast %121 : vector<16x1xf32> to vector<16x16xf32>
    %123 = arith.mulf %114, %122 : vector<16x16xf32>
    %124 = arith.addf %95, %123 : vector<16x16xf32>
    %125 = vector.broadcast %100 : vector<1x32xf32> to vector<16x32xf32>
    %126 = arith.mulf %38, %125 : vector<16x32xf32>
    %cst_46 = arith.constant dense<0.000000e+00> : vector<16x32xf32>
    %127 = tpu.matmul %123, %126, %cst_46 {dimension_numbers = #tpu.dot_dimension_numbers<[1], [0], [0], [1], [0, 0, 1, 1], [], []>} : vector<16x16xf32>, vector<16x32xf32>, vector<16x32xf32> -> vector<16x32xf32>
    %128 = arith.addf %99, %127 : vector<16x32xf32>
    %129 = vector.extract_strided_slice %27 {offsets = [3, 0], sizes = [1, 32], strides = [1, 1]} : vector<4x32xf32> to vector<1x32xf32>
    %130 = vector.broadcast %129 : vector<1x32xf32> to vector<16x32xf32>
    %131 = arith.mulf %34, %130 : vector<16x32xf32>
    %132 = vector.broadcast %129 : vector<1x32xf32> to vector<16x32xf32>
    %133 = arith.mulf %35, %132 : vector<16x32xf32>
    %134 = tpu.transpose %133, [1, 0] : vector<16x32xf32> -> vector<32x16xf32>
    %cst_47 = arith.constant dense<0.000000e+00> : vector<16x16xf32>
    %135 = tpu.matmul %131, %134, %cst_47 {dimension_numbers = #tpu.dot_dimension_numbers<[1], [0], [0], [1], [0, 0, 1, 1], [], []>} : vector<16x32xf32>, vector<32x16xf32>, vector<16x16xf32> -> vector<16x16xf32>
    %cst_48 = arith.constant 0.353553385 : f32
    %136 = vector.broadcast %cst_48 : f32 to vector<16x16xf32>
    %137 = arith.mulf %135, %136 : vector<16x16xf32>
    %138 = arith.addf %137, %39 : vector<16x16xf32>
    %cst_49 = arith.constant dense<0xFF800000> : vector<16xf32>
    %139 = vector.multi_reduction <maximumf>, %138, %cst_49 [1] : vector<16x16xf32> to vector<16xf32>
    %140 = vector.shape_cast %139 : vector<16xf32> to vector<16x1xf32>
    %141 = vector.broadcast %140 : vector<16x1xf32> to vector<16x16xf32>
    %142 = arith.subf %138, %141 : vector<16x16xf32>
    %143 = math.exp %142 : vector<16x16xf32>
    %cst_50 = arith.constant dense<0.000000e+00> : vector<16xf32>
    %144 = vector.multi_reduction <add>, %143, %cst_50 [1] : vector<16x16xf32> to vector<16xf32>
    %145 = vector.shape_cast %144 : vector<16xf32> to vector<16x1xf32>
    %146 = tpu.reciprocal %145 {approx = true} : vector<16x1xf32> -> vector<16x1xf32>
    %147 = arith.mulf %145, %146 : vector<16x1xf32>
    %cst_51 = arith.constant 2.000000e+00 : f32
    %148 = vector.broadcast %cst_51 : f32 to vector<16x1xf32>
    %149 = arith.subf %148, %147 : vector<16x1xf32>
    %150 = arith.mulf %146, %149 : vector<16x1xf32>
    %151 = vector.broadcast %150 : vector<16x1xf32> to vector<16x16xf32>
    %152 = arith.mulf %143, %151 : vector<16x16xf32>
    %153 = arith.addf %124, %152 : vector<16x16xf32>
    %154 = vector.broadcast %129 : vector<1x32xf32> to vector<16x32xf32>
    %155 = arith.mulf %38, %154 : vector<16x32xf32>
    %cst_52 = arith.constant dense<0.000000e+00> : vector<16x32xf32>
    %156 = tpu.matmul %152, %155, %cst_52 {dimension_numbers = #tpu.dot_dimension_numbers<[1], [0], [0], [1], [0, 0, 1, 1], [], []>} : vector<16x16xf32>, vector<16x32xf32>, vector<16x32xf32> -> vector<16x32xf32>
    %157 = arith.addf %128, %156 : vector<16x32xf32>
    %cst_53 = arith.constant dense<0.000000e+00> : vector<16x32xf32>
    %158 = tpu.matmul %157, %18, %cst_53 {dimension_numbers = #tpu.dot_dimension_numbers<[1], [0], [0], [1], [0, 0, 1, 1], [], []>} : vector<16x32xf32>, vector<32x32xf32>, vector<16x32xf32> -> vector<16x32xf32>
    %159 = vector.broadcast %3 : vector<1x32xf32> to vector<16x32xf32>
    %160 = arith.addf %158, %159 : vector<16x32xf32>
    %161 = arith.addf %0, %160 : vector<16x32xf32>
    %cst_54 = arith.constant dense<0.000000e+00> : vector<16xf32>
    %162 = vector.multi_reduction <add>, %161, %cst_54 [1] : vector<16x32xf32> to vector<16xf32>
    %163 = vector.shape_cast %162 : vector<16xf32> to vector<16x1xf32>
    %cst_55 = arith.constant 3.200000e+01 : f32
    %164 = vector.broadcast %cst_55 : f32 to vector<16x1xf32>
    %165 = arith.divf %163, %164 : vector<16x1xf32>
    %166 = vector.broadcast %165 : vector<16x1xf32> to vector<16x32xf32>
    %167 = arith.subf %161, %166 : vector<16x32xf32>
    %168 = arith.mulf %167, %167 : vector<16x32xf32>
    %cst_56 = arith.constant dense<0.000000e+00> : vector<16xf32>
    %169 = vector.multi_reduction <add>, %168, %cst_56 [1] : vector<16x32xf32> to vector<16xf32>
    %170 = vector.shape_cast %169 : vector<16xf32> to vector<16x1xf32>
    %cst_57 = arith.constant 3.200000e+01 : f32
    %171 = vector.broadcast %cst_57 : f32 to vector<16x1xf32>
    %172 = arith.divf %170, %171 : vector<16x1xf32>
    %cst_58 = arith.constant 9.99999974E-6 : f32
    %173 = vector.broadcast %cst_58 : f32 to vector<16x1xf32>
    %174 = arith.addf %172, %173 : vector<16x1xf32>
    %175 = math.rsqrt %174 : vector<16x1xf32>
    %176 = vector.broadcast %175 : vector<16x1xf32> to vector<16x32xf32>
    %177 = arith.mulf %167, %176 : vector<16x32xf32>
    %178 = vector.broadcast %9 : vector<1x32xf32> to vector<16x32xf32>
    %179 = arith.mulf %177, %178 : vector<16x32xf32>
    %180 = vector.broadcast %10 : vector<1x32xf32> to vector<16x32xf32>
    %181 = arith.addf %179, %180 : vector<16x32xf32>
    %cst_59 = arith.constant 2.500000e-01 : f32
    %182 = vector.broadcast %cst_59 : f32 to vector<16x16xf32>
    %183 = arith.mulf %153, %182 : vector<16x16xf32>
    %184 = vector.extract_strided_slice %183 {offsets = [0, 0], sizes = [8, 8], strides = [1, 1]} : vector<16x16xf32> to vector<8x8xf32>
    %c0_60 = arith.constant 0 : index
    %c0_61 = arith.constant 0 : index
    %c0_62 = arith.constant 0 : index
    %185 = vector.load %arg18[%c0_60, %c0_61, %c0_62] : memref<2x8x8xf32, #tpu.memory_space<vmem>>, vector<1x8x8xf32>
    %186 = vector.shape_cast %185 : vector<1x8x8xf32> to vector<8x8xf32>
    %187 = vector.shape_cast %184 : vector<8x8xf32> to vector<1x8x8xf32>
    tpu.vector_store %arg18[%c0_60, %c0_61, %c0_62], %187 {strides = array<i32>} : memref<2x8x8xf32, #tpu.memory_space<vmem>>, vector<1x8x8xf32>,
    %188 = vector.extract_strided_slice %183 {offsets = [8, 8], sizes = [8, 8], strides = [1, 1]} : vector<16x16xf32> to vector<8x8xf32>
    %c1_63 = arith.constant 1 : index
    %c0_64 = arith.constant 0 : index
    %c0_65 = arith.constant 0 : index
    %189 = vector.load %arg18[%c1_63, %c0_64, %c0_65] : memref<2x8x8xf32, #tpu.memory_space<vmem>>, vector<1x8x8xf32>
    %190 = vector.shape_cast %189 : vector<1x8x8xf32> to vector<8x8xf32>
    %191 = vector.shape_cast %188 : vector<8x8xf32> to vector<1x8x8xf32>
    tpu.vector_store %arg18[%c1_63, %c0_64, %c0_65], %191 {strides = array<i32>} : memref<2x8x8xf32, #tpu.memory_space<vmem>>, vector<1x8x8xf32>,
    %c0_66 = arith.constant 0 : index
    %c0_67 = arith.constant 0 : index
    %192 = vector.load %arg5[%c0_66, %c0_67] : memref<8x16xf32, #tpu.memory_space<vmem>>, vector<8x16xf32>
    %c0_68 = arith.constant 0 : index
    %c0_69 = arith.constant 0 : index
    %193 = vector.load %arg2[%c0_68, %c0_69] : memref<16x32xf32, #tpu.memory_space<vmem>>, vector<16x32xf32>
    %194 = arith.addf %181, %193 : vector<16x32xf32>
    %cst_70 = arith.constant dense<0.000000e+00> : vector<8x32xf32>
    %195 = tpu.matmul %192, %194, %cst_70 {dimension_numbers = #tpu.dot_dimension_numbers<[1], [0], [0], [1], [0, 0, 1, 1], [], []>} : vector<8x16xf32>, vector<16x32xf32>, vector<8x32xf32> -> vector<8x32xf32>
    %cst_71 = arith.constant dense<0.000000e+00> : vector<8x32xf32>
    %196 = tpu.matmul %195, %20, %cst_71 {dimension_numbers = #tpu.dot_dimension_numbers<[1], [0], [0], [1], [0, 0, 1, 1], [], []>} : vector<8x32xf32>, vector<32x32xf32>, vector<8x32xf32> -> vector<8x32xf32>
    %197 = vector.broadcast %4 : vector<1x32xf32> to vector<8x32xf32>
    %198 = arith.addf %196, %197 : vector<8x32xf32>
    %c0_72 = arith.constant 0 : index
    %c0_73 = arith.constant 0 : index
    %199 = vector.load %arg3[%c0_72, %c0_73] : memref<128x32xf32, #tpu.memory_space<vmem>>, vector<128x32xf32>
    %cst_74 = arith.constant dense<0.000000e+00> : vector<128x32xf32>
    %200 = tpu.matmul %199, %22, %cst_74 {dimension_numbers = #tpu.dot_dimension_numbers<[1], [0], [0], [1], [0, 0, 1, 1], [], []>} : vector<128x32xf32>, vector<32x32xf32>, vector<128x32xf32> -> vector<128x32xf32>
    %201 = vector.broadcast %5 : vector<1x32xf32> to vector<128x32xf32>
    %202 = arith.addf %200, %201 : vector<128x32xf32>
    %c0_75 = arith.constant 0 : index
    %c0_76 = arith.constant 0 : index
    %203 = vector.load %arg4[%c0_75, %c0_76] : memref<128x32xf32, #tpu.memory_space<vmem>>, vector<128x32xf32>
    %cst_77 = arith.constant dense<0.000000e+00> : vector<128x32xf32>
    %204 = tpu.matmul %203, %24, %cst_77 {dimension_numbers = #tpu.dot_dimension_numbers<[1], [0], [0], [1], [0, 0, 1, 1], [], []>} : vector<128x32xf32>, vector<32x32xf32>, vector<128x32xf32> -> vector<128x32xf32>
    %205 = vector.broadcast %6 : vector<1x32xf32> to vector<128x32xf32>
    %206 = arith.addf %204, %205 : vector<128x32xf32>
    %c0_78 = arith.constant 0 : index
    %c0_79 = arith.constant 0 : index
    %207 = vector.load %arg8[%c0_78, %c0_79] : memref<8x128xf32, #tpu.memory_space<vmem>>, vector<8x128xf32>
    %cst_80 = arith.constant 0.000000e+00 : f32
    %208 = vector.broadcast %cst_80 : f32 to vector<8x32xf32>
    %209 = vector.extract_strided_slice %27 {offsets = [0, 0], sizes = [1, 32], strides = [1, 1]} : vector<4x32xf32> to vector<1x32xf32>
    %210 = vector.broadcast %209 : vector<1x32xf32> to vector<8x32xf32>
    %211 = arith.mulf %198, %210 : vector<8x32xf32>
    %212 = vector.broadcast %209 : vector<1x32xf32> to vector<128x32xf32>
    %213 = arith.mulf %202, %212 : vector<128x32xf32>
    %214 = tpu.transpose %213, [1, 0] : vector<128x32xf32> -> vector<32x128xf32>
    %cst_81 = arith.constant dense<0.000000e+00> : vector<8x128xf32>
    %215 = tpu.matmul %211, %214, %cst_81 {dimension_numbers = #tpu.dot_dimension_numbers<[1], [0], [0], [1], [0, 0, 1, 1], [], []>} : vector<8x32xf32>, vector<32x128xf32>, vector<8x128xf32> -> vector<8x128xf32>
    %cst_82 = arith.constant 0.353553385 : f32
    %216 = vector.broadcast %cst_82 : f32 to vector<8x128xf32>
    %217 = arith.mulf %215, %216 : vector<8x128xf32>
    %218 = arith.addf %217, %207 : vector<8x128xf32>
    %cst_83 = arith.constant dense<0xFF800000> : vector<8xf32>
    %219 = vector.multi_reduction <maximumf>, %218, %cst_83 [1] : vector<8x128xf32> to vector<8xf32>
    %220 = vector.shape_cast %219 : vector<8xf32> to vector<8x1xf32>
    %221 = vector.broadcast %220 : vector<8x1xf32> to vector<8x128xf32>
    %222 = arith.subf %218, %221 : vector<8x128xf32>
    %223 = math.exp %222 : vector<8x128xf32>
    %cst_84 = arith.constant dense<0.000000e+00> : vector<8xf32>
    %224 = vector.multi_reduction <add>, %223, %cst_84 [1] : vector<8x128xf32> to vector<8xf32>
    %225 = vector.shape_cast %224 : vector<8xf32> to vector<8x1xf32>
    %226 = tpu.reciprocal %225 {approx = true} : vector<8x1xf32> -> vector<8x1xf32>
    %227 = arith.mulf %225, %226 : vector<8x1xf32>
    %cst_85 = arith.constant 2.000000e+00 : f32
    %228 = vector.broadcast %cst_85 : f32 to vector<8x1xf32>
    %229 = arith.subf %228, %227 : vector<8x1xf32>
    %230 = arith.mulf %226, %229 : vector<8x1xf32>
    %231 = vector.broadcast %230 : vector<8x1xf32> to vector<8x128xf32>
    %232 = arith.mulf %223, %231 : vector<8x128xf32>
    %233 = vector.broadcast %209 : vector<1x32xf32> to vector<128x32xf32>
    %234 = arith.mulf %206, %233 : vector<128x32xf32>
    %cst_86 = arith.constant dense<0.000000e+00> : vector<8x32xf32>
    %235 = tpu.matmul %232, %234, %cst_86 {dimension_numbers = #tpu.dot_dimension_numbers<[1], [0], [0], [1], [0, 0, 1, 1], [], []>} : vector<8x128xf32>, vector<128x32xf32>, vector<8x32xf32> -> vector<8x32xf32>
    %236 = arith.addf %208, %235 : vector<8x32xf32>
    %237 = vector.extract_strided_slice %27 {offsets = [1, 0], sizes = [1, 32], strides = [1, 1]} : vector<4x32xf32> to vector<1x32xf32>
    %238 = vector.broadcast %237 : vector<1x32xf32> to vector<8x32xf32>
    %239 = arith.mulf %198, %238 : vector<8x32xf32>
    %240 = vector.broadcast %237 : vector<1x32xf32> to vector<128x32xf32>
    %241 = arith.mulf %202, %240 : vector<128x32xf32>
    %242 = tpu.transpose %241, [1, 0] : vector<128x32xf32> -> vector<32x128xf32>
    %cst_87 = arith.constant dense<0.000000e+00> : vector<8x128xf32>
    %243 = tpu.matmul %239, %242, %cst_87 {dimension_numbers = #tpu.dot_dimension_numbers<[1], [0], [0], [1], [0, 0, 1, 1], [], []>} : vector<8x32xf32>, vector<32x128xf32>, vector<8x128xf32> -> vector<8x128xf32>
    %cst_88 = arith.constant 0.353553385 : f32
    %244 = vector.broadcast %cst_88 : f32 to vector<8x128xf32>
    %245 = arith.mulf %243, %244 : vector<8x128xf32>
    %246 = arith.addf %245, %207 : vector<8x128xf32>
    %cst_89 = arith.constant dense<0xFF800000> : vector<8xf32>
    %247 = vector.multi_reduction <maximumf>, %246, %cst_89 [1] : vector<8x128xf32> to vector<8xf32>
    %248 = vector.shape_cast %247 : vector<8xf32> to vector<8x1xf32>
    %249 = vector.broadcast %248 : vector<8x1xf32> to vector<8x128xf32>
    %250 = arith.subf %246, %249 : vector<8x128xf32>
    %251 = math.exp %250 : vector<8x128xf32>
    %cst_90 = arith.constant dense<0.000000e+00> : vector<8xf32>
    %252 = vector.multi_reduction <add>, %251, %cst_90 [1] : vector<8x128xf32> to vector<8xf32>
    %253 = vector.shape_cast %252 : vector<8xf32> to vector<8x1xf32>
    %254 = tpu.reciprocal %253 {approx = true} : vector<8x1xf32> -> vector<8x1xf32>
    %255 = arith.mulf %253, %254 : vector<8x1xf32>
    %cst_91 = arith.constant 2.000000e+00 : f32
    %256 = vector.broadcast %cst_91 : f32 to vector<8x1xf32>
    %257 = arith.subf %256, %255 : vector<8x1xf32>
    %258 = arith.mulf %254, %257 : vector<8x1xf32>
    %259 = vector.broadcast %258 : vector<8x1xf32> to vector<8x128xf32>
    %260 = arith.mulf %251, %259 : vector<8x128xf32>
    %261 = vector.broadcast %237 : vector<1x32xf32> to vector<128x32xf32>
    %262 = arith.mulf %206, %261 : vector<128x32xf32>
    %cst_92 = arith.constant dense<0.000000e+00> : vector<8x32xf32>
    %263 = tpu.matmul %260, %262, %cst_92 {dimension_numbers = #tpu.dot_dimension_numbers<[1], [0], [0], [1], [0, 0, 1, 1], [], []>} : vector<8x128xf32>, vector<128x32xf32>, vector<8x32xf32> -> vector<8x32xf32>
    %264 = arith.addf %236, %263 : vector<8x32xf32>
    %265 = vector.extract_strided_slice %27 {offsets = [2, 0], sizes = [1, 32], strides = [1, 1]} : vector<4x32xf32> to vector<1x32xf32>
    %266 = vector.broadcast %265 : vector<1x32xf32> to vector<8x32xf32>
    %267 = arith.mulf %198, %266 : vector<8x32xf32>
    %268 = vector.broadcast %265 : vector<1x32xf32> to vector<128x32xf32>
    %269 = arith.mulf %202, %268 : vector<128x32xf32>
    %270 = tpu.transpose %269, [1, 0] : vector<128x32xf32> -> vector<32x128xf32>
    %cst_93 = arith.constant dense<0.000000e+00> : vector<8x128xf32>
    %271 = tpu.matmul %267, %270, %cst_93 {dimension_numbers = #tpu.dot_dimension_numbers<[1], [0], [0], [1], [0, 0, 1, 1], [], []>} : vector<8x32xf32>, vector<32x128xf32>, vector<8x128xf32> -> vector<8x128xf32>
    %cst_94 = arith.constant 0.353553385 : f32
    %272 = vector.broadcast %cst_94 : f32 to vector<8x128xf32>
    %273 = arith.mulf %271, %272 : vector<8x128xf32>
    %274 = arith.addf %273, %207 : vector<8x128xf32>
    %cst_95 = arith.constant dense<0xFF800000> : vector<8xf32>
    %275 = vector.multi_reduction <maximumf>, %274, %cst_95 [1] : vector<8x128xf32> to vector<8xf32>
    %276 = vector.shape_cast %275 : vector<8xf32> to vector<8x1xf32>
    %277 = vector.broadcast %276 : vector<8x1xf32> to vector<8x128xf32>
    %278 = arith.subf %274, %277 : vector<8x128xf32>
    %279 = math.exp %278 : vector<8x128xf32>
    %cst_96 = arith.constant dense<0.000000e+00> : vector<8xf32>
    %280 = vector.multi_reduction <add>, %279, %cst_96 [1] : vector<8x128xf32> to vector<8xf32>
    %281 = vector.shape_cast %280 : vector<8xf32> to vector<8x1xf32>
    %282 = tpu.reciprocal %281 {approx = true} : vector<8x1xf32> -> vector<8x1xf32>
    %283 = arith.mulf %281, %282 : vector<8x1xf32>
    %cst_97 = arith.constant 2.000000e+00 : f32
    %284 = vector.broadcast %cst_97 : f32 to vector<8x1xf32>
    %285 = arith.subf %284, %283 : vector<8x1xf32>
    %286 = arith.mulf %282, %285 : vector<8x1xf32>
    %287 = vector.broadcast %286 : vector<8x1xf32> to vector<8x128xf32>
    %288 = arith.mulf %279, %287 : vector<8x128xf32>
    %289 = vector.broadcast %265 : vector<1x32xf32> to vector<128x32xf32>
    %290 = arith.mulf %206, %289 : vector<128x32xf32>
    %cst_98 = arith.constant dense<0.000000e+00> : vector<8x32xf32>
    %291 = tpu.matmul %288, %290, %cst_98 {dimension_numbers = #tpu.dot_dimension_numbers<[1], [0], [0], [1], [0, 0, 1, 1], [], []>} : vector<8x128xf32>, vector<128x32xf32>, vector<8x32xf32> -> vector<8x32xf32>
    %292 = arith.addf %264, %291 : vector<8x32xf32>
    %293 = vector.extract_strided_slice %27 {offsets = [3, 0], sizes = [1, 32], strides = [1, 1]} : vector<4x32xf32> to vector<1x32xf32>
    %294 = vector.broadcast %293 : vector<1x32xf32> to vector<8x32xf32>
    %295 = arith.mulf %198, %294 : vector<8x32xf32>
    %296 = vector.broadcast %293 : vector<1x32xf32> to vector<128x32xf32>
    %297 = arith.mulf %202, %296 : vector<128x32xf32>
    %298 = tpu.transpose %297, [1, 0] : vector<128x32xf32> -> vector<32x128xf32>
    %cst_99 = arith.constant dense<0.000000e+00> : vector<8x128xf32>
    %299 = tpu.matmul %295, %298, %cst_99 {dimension_numbers = #tpu.dot_dimension_numbers<[1], [0], [0], [1], [0, 0, 1, 1], [], []>} : vector<8x32xf32>, vector<32x128xf32>, vector<8x128xf32> -> vector<8x128xf32>
    %cst_100 = arith.constant 0.353553385 : f32
    %300 = vector.broadcast %cst_100 : f32 to vector<8x128xf32>
    %301 = arith.mulf %299, %300 : vector<8x128xf32>
    %302 = arith.addf %301, %207 : vector<8x128xf32>
    %cst_101 = arith.constant dense<0xFF800000> : vector<8xf32>
    %303 = vector.multi_reduction <maximumf>, %302, %cst_101 [1] : vector<8x128xf32> to vector<8xf32>
    %304 = vector.shape_cast %303 : vector<8xf32> to vector<8x1xf32>
    %305 = vector.broadcast %304 : vector<8x1xf32> to vector<8x128xf32>
    %306 = arith.subf %302, %305 : vector<8x128xf32>
    %307 = math.exp %306 : vector<8x128xf32>
    %cst_102 = arith.constant dense<0.000000e+00> : vector<8xf32>
    %308 = vector.multi_reduction <add>, %307, %cst_102 [1] : vector<8x128xf32> to vector<8xf32>
    %309 = vector.shape_cast %308 : vector<8xf32> to vector<8x1xf32>
    %310 = tpu.reciprocal %309 {approx = true} : vector<8x1xf32> -> vector<8x1xf32>
    %311 = arith.mulf %309, %310 : vector<8x1xf32>
    %cst_103 = arith.constant 2.000000e+00 : f32
    %312 = vector.broadcast %cst_103 : f32 to vector<8x1xf32>
    %313 = arith.subf %312, %311 : vector<8x1xf32>
    %314 = arith.mulf %310, %313 : vector<8x1xf32>
    %315 = vector.broadcast %314 : vector<8x1xf32> to vector<8x128xf32>
    %316 = arith.mulf %307, %315 : vector<8x128xf32>
    %317 = vector.broadcast %293 : vector<1x32xf32> to vector<128x32xf32>
    %318 = arith.mulf %206, %317 : vector<128x32xf32>
    %cst_104 = arith.constant dense<0.000000e+00> : vector<8x32xf32>
    %319 = tpu.matmul %316, %318, %cst_104 {dimension_numbers = #tpu.dot_dimension_numbers<[1], [0], [0], [1], [0, 0, 1, 1], [], []>} : vector<8x128xf32>, vector<128x32xf32>, vector<8x32xf32> -> vector<8x32xf32>
    %320 = arith.addf %292, %319 : vector<8x32xf32>
    %cst_105 = arith.constant dense<0.000000e+00> : vector<8x32xf32>
    %321 = tpu.matmul %320, %26, %cst_105 {dimension_numbers = #tpu.dot_dimension_numbers<[1], [0], [0], [1], [0, 0, 1, 1], [], []>} : vector<8x32xf32>, vector<32x32xf32>, vector<8x32xf32> -> vector<8x32xf32>
    %322 = vector.broadcast %7 : vector<1x32xf32> to vector<8x32xf32>
    %323 = arith.addf %321, %322 : vector<8x32xf32>
    %c0_106 = arith.constant 0 : index
    %c0_107 = arith.constant 0 : index
    %324 = vector.load %arg6[%c0_106, %c0_107] : memref<16x8xf32, #tpu.memory_space<vmem>>, vector<16x8xf32>
    %cst_108 = arith.constant dense<0.000000e+00> : vector<16x32xf32>
    %325 = tpu.matmul %324, %323, %cst_108 {dimension_numbers = #tpu.dot_dimension_numbers<[1], [0], [0], [1], [0, 0, 1, 1], [], []>} : vector<16x8xf32>, vector<8x32xf32>, vector<16x32xf32> -> vector<16x32xf32>
    %326 = arith.addf %181, %325 : vector<16x32xf32>
    %cst_109 = arith.constant dense<0.000000e+00> : vector<16xf32>
    %327 = vector.multi_reduction <add>, %326, %cst_109 [1] : vector<16x32xf32> to vector<16xf32>
    %328 = vector.shape_cast %327 : vector<16xf32> to vector<16x1xf32>
    %cst_110 = arith.constant 3.200000e+01 : f32
    %329 = vector.broadcast %cst_110 : f32 to vector<16x1xf32>
    %330 = arith.divf %328, %329 : vector<16x1xf32>
    %331 = vector.broadcast %330 : vector<16x1xf32> to vector<16x32xf32>
    %332 = arith.subf %326, %331 : vector<16x32xf32>
    %333 = arith.mulf %332, %332 : vector<16x32xf32>
    %cst_111 = arith.constant dense<0.000000e+00> : vector<16xf32>
    %334 = vector.multi_reduction <add>, %333, %cst_111 [1] : vector<16x32xf32> to vector<16xf32>
    %335 = vector.shape_cast %334 : vector<16xf32> to vector<16x1xf32>
    %cst_112 = arith.constant 3.200000e+01 : f32
    %336 = vector.broadcast %cst_112 : f32 to vector<16x1xf32>
    %337 = arith.divf %335, %336 : vector<16x1xf32>
    %cst_113 = arith.constant 9.99999974E-6 : f32
    %338 = vector.broadcast %cst_113 : f32 to vector<16x1xf32>
    %339 = arith.addf %337, %338 : vector<16x1xf32>
    %340 = math.rsqrt %339 : vector<16x1xf32>
    %341 = vector.broadcast %340 : vector<16x1xf32> to vector<16x32xf32>
    %342 = arith.mulf %332, %341 : vector<16x32xf32>
    %343 = vector.broadcast %11 : vector<1x32xf32> to vector<16x32xf32>
    %344 = arith.mulf %342, %343 : vector<16x32xf32>
    %345 = vector.broadcast %12 : vector<1x32xf32> to vector<16x32xf32>
    %346 = arith.addf %344, %345 : vector<16x32xf32>
    %c0_114 = arith.constant 0 : index
    %c0_115 = arith.constant 0 : index
    %347 = vector.load %arg13[%c0_114, %c0_115] : memref<32x64xf32, #tpu.memory_space<vmem>>, vector<32x64xf32>
    %cst_116 = arith.constant dense<0.000000e+00> : vector<16x64xf32>
    %348 = tpu.matmul %346, %347, %cst_116 {dimension_numbers = #tpu.dot_dimension_numbers<[1], [0], [0], [1], [0, 0, 1, 1], [], []>} : vector<16x32xf32>, vector<32x64xf32>, vector<16x64xf32> -> vector<16x64xf32>
    %c0_117 = arith.constant 0 : index
    %c0_118 = arith.constant 0 : index
    %349 = vector.load %arg14[%c0_117, %c0_118] : memref<1x64xf32, #tpu.memory_space<vmem>>, vector<1x64xf32>
    %350 = vector.broadcast %349 : vector<1x64xf32> to vector<16x64xf32>
    %351 = arith.addf %348, %350 : vector<16x64xf32>
    %cst_119 = arith.constant 0.000000e+00 : f32
    %352 = vector.broadcast %cst_119 : f32 to vector<16x64xf32>
    %353 = arith.maximumf %351, %352 : vector<16x64xf32>
    %c0_120 = arith.constant 0 : index
    %c0_121 = arith.constant 0 : index
    %354 = vector.load %arg15[%c0_120, %c0_121] : memref<64x32xf32, #tpu.memory_space<vmem>>, vector<64x32xf32>
    %cst_122 = arith.constant dense<0.000000e+00> : vector<16x32xf32>
    %355 = tpu.matmul %353, %354, %cst_122 {dimension_numbers = #tpu.dot_dimension_numbers<[1], [0], [0], [1], [0, 0, 1, 1], [], []>} : vector<16x64xf32>, vector<64x32xf32>, vector<16x32xf32> -> vector<16x32xf32>
    %356 = vector.broadcast %8 : vector<1x32xf32> to vector<16x32xf32>
    %357 = arith.addf %355, %356 : vector<16x32xf32>
    %358 = arith.addf %346, %357 : vector<16x32xf32>
    %cst_123 = arith.constant dense<0.000000e+00> : vector<16xf32>
    %359 = vector.multi_reduction <add>, %358, %cst_123 [1] : vector<16x32xf32> to vector<16xf32>
    %360 = vector.shape_cast %359 : vector<16xf32> to vector<16x1xf32>
    %cst_124 = arith.constant 3.200000e+01 : f32
    %361 = vector.broadcast %cst_124 : f32 to vector<16x1xf32>
    %362 = arith.divf %360, %361 : vector<16x1xf32>
    %363 = vector.broadcast %362 : vector<16x1xf32> to vector<16x32xf32>
    %364 = arith.subf %358, %363 : vector<16x32xf32>
    %365 = arith.mulf %364, %364 : vector<16x32xf32>
    %cst_125 = arith.constant dense<0.000000e+00> : vector<16xf32>
    %366 = vector.multi_reduction <add>, %365, %cst_125 [1] : vector<16x32xf32> to vector<16xf32>
    %367 = vector.shape_cast %366 : vector<16xf32> to vector<16x1xf32>
    %cst_126 = arith.constant 3.200000e+01 : f32
    %368 = vector.broadcast %cst_126 : f32 to vector<16x1xf32>
    %369 = arith.divf %367, %368 : vector<16x1xf32>
    %cst_127 = arith.constant 9.99999974E-6 : f32
    %370 = vector.broadcast %cst_127 : f32 to vector<16x1xf32>
    %371 = arith.addf %369, %370 : vector<16x1xf32>
    %372 = math.rsqrt %371 : vector<16x1xf32>
    %373 = vector.broadcast %372 : vector<16x1xf32> to vector<16x32xf32>
    %374 = arith.mulf %364, %373 : vector<16x32xf32>
    %375 = vector.broadcast %13 : vector<1x32xf32> to vector<16x32xf32>
    %376 = arith.mulf %374, %375 : vector<16x32xf32>
    %377 = vector.broadcast %14 : vector<1x32xf32> to vector<16x32xf32>
    %378 = arith.addf %376, %377 : vector<16x32xf32>
    %c0_128 = arith.constant 0 : index
    %c0_129 = arith.constant 0 : index
    %379 = vector.load %arg17[%c0_128, %c0_129] : memref<16x32xf32, #tpu.memory_space<vmem>>, vector<16x32xf32>
    tpu.vector_store %arg17[%c0_128, %c0_129], %378 {strides = array<i32>} : memref<16x32xf32, #tpu.memory_space<vmem>>, vector<16x32xf32>,
    return
  }
}

</mosaic_0001>

<llo_original>
// kernel: tpu_custom_call.1
$region0: #{tpu_custom_call.1}
  #allocation0 [shape = 'u32[]', space=smem, size = 0x4, offset = 0x4, fixed_abs, tag = 'smem constant byte address 0x4 - core index']
  #allocation1 [shape = 'u32[144,128]{1,0:T(1,128)}', space=vmem, size = 0x12000, scoped, tag = 'internal scratch']
  %s0 = inlined_call_operand.vmem [shape: f32[16,32], index: 0, kind: input, shape index: {}]
  %s1 = inlined_call_operand.vmem [shape: f32[16,32], index: 1, kind: input, shape index: {}]
  %s2 = inlined_call_operand.vmem [shape: f32[16,32], index: 2, kind: input, shape index: {}]
  %s3 = inlined_call_operand.vmem [shape: f32[128,32], index: 3, kind: input, shape index: {}]
  %s4 = inlined_call_operand.vmem [shape: f32[128,32], index: 4, kind: input, shape index: {}]
  %s5 = inlined_call_operand.vmem [shape: f32[8,16], index: 5, kind: input, shape index: {}]
  %s6 = inlined_call_operand.vmem [shape: f32[16,8], index: 6, kind: input, shape index: {}]
  %s7 = inlined_call_operand.vmem [shape: f32[16,16], index: 7, kind: input, shape index: {}]
  %s8 = inlined_call_operand.vmem [shape: f32[8,128], index: 8, kind: input, shape index: {}]
  %s9 = inlined_call_operand.vmem [shape: f32[4,32], index: 9, kind: input, shape index: {}]
  %s10 = inlined_call_operand.vmem [shape: f32[32,64], index: 10, kind: input, shape index: {}]
  %s11 = inlined_call_operand.vmem [shape: f32[1,64], index: 11, kind: input, shape index: {}]
  %s12 = inlined_call_operand.vmem [shape: f32[6,32,32], index: 12, kind: input, shape index: {}]
  %s13 = inlined_call_operand.vmem [shape: f32[32,64], index: 13, kind: input, shape index: {}]
  %s14 = inlined_call_operand.vmem [shape: f32[1,64], index: 14, kind: input, shape index: {}]
  %s15 = inlined_call_operand.vmem [shape: f32[64,32], index: 15, kind: input, shape index: {}]
  %s16 = inlined_call_operand.vmem [shape: f32[13,32], index: 16, kind: input, shape index: {}]
  %s17 = inlined_call_operand.hbm [shape: f32[16,32], index: 17, kind: output, shape index: {0}]
  %s18 = inlined_call_operand.hbm [shape: f32[2,8,8], index: 18, kind: output, shape index: {1}]
  %19 = xla_tuple %s17, %s18
  %s20 = sld [smem:[#allocation0]]
  $region86: #{tpu_custom_call.1} parent=0
    _
  %s22 = ssub.s32 1, %s20
  %s23 = scalar_select 0, %s22, %s20
  $region1: #{tpu_custom_call.1} parent=0
    #allocation2 [shape = 'u8[8192]{0}', space=vmem, size = 0x2000, scoped, tag = 'output window, operand 0, single buffered']
    #allocation3 [shape = 's32[1]{0}', space=sflag, size = 0x4, scoped, tag = 'scoped memory for tpu_custom_call.1']
    #allocation4 [shape = 'u8[8192]{0}', space=vmem, size = 0x2000, scoped, tag = 'output window, operand 1, single buffered']
    #allocation5 [shape = 's32[1]{0}', space=sflag, size = 0x4, scoped, tag = 'scoped memory for tpu_custom_call.1']
    %24 = vsyncpa [#allocation3], 0
    %25 = vsyncpa [#allocation5], 0
    // Predicated region
    $region2: #{tpu_custom_call.1} parent=1 // pred_check
      _
    $region3: #{tpu_custom_call.1} parent=1 // pred_check_branch
      %27 = sbr.rel (0) target = $region5
    $region4: #{tpu_custom_call.1} parent=1 // pred_region
      _
    $region5: #{tpu_custom_call.1} parent=1 // pred_fallthru
      _
    // Predicated region
    $region6: #{tpu_custom_call.1} parent=1 // pred_check
      _
    $region7: #{tpu_custom_call.1} parent=1 // pred_check_branch
      %29 = sbr.rel (0) target = $region9
    $region8: #{tpu_custom_call.1} parent=1 // pred_region
      _
    $region9: #{tpu_custom_call.1} parent=1 // pred_fallthru
      _
    // Predicated region
    $region10: #{tpu_custom_call.1} parent=1 // pred_check
      _
    $region11: #{tpu_custom_call.1} parent=1 // pred_check_branch
      %31 = sbr.rel (0) target = $region13
    $region12: #{tpu_custom_call.1} parent=1 // pred_region
      _
    $region13: #{tpu_custom_call.1} parent=1 // pred_fallthru
      _
    // Predicated region
    $region14: #{tpu_custom_call.1} parent=1 // pred_check
      _
    $region15: #{tpu_custom_call.1} parent=1 // pred_check_branch
      %33 = sbr.rel (0) target = $region17
    $region16: #{tpu_custom_call.1} parent=1 // pred_region
      _
    $region17: #{tpu_custom_call.1} parent=1 // pred_fallthru
      _
    // Predicated region
    $region18: #{tpu_custom_call.1} parent=1 // pred_check
      _
    $region19: #{tpu_custom_call.1} parent=1 // pred_check_branch
      %35 = sbr.rel (0) target = $region21
    $region20: #{tpu_custom_call.1} parent=1 // pred_region
      _
    $region21: #{tpu_custom_call.1} parent=1 // pred_fallthru
      _
    // Predicated region
    $region22: #{tpu_custom_call.1} parent=1 // pred_check
      _
    $region23: #{tpu_custom_call.1} parent=1 // pred_check_branch
      %37 = sbr.rel (0) target = $region25
    $region24: #{tpu_custom_call.1} parent=1 // pred_region
      _
    $region25: #{tpu_custom_call.1} parent=1 // pred_fallthru
      _
    // Predicated region
    $region26: #{tpu_custom_call.1} parent=1 // pred_check
      _
    $region27: #{tpu_custom_call.1} parent=1 // pred_check_branch
      %39 = sbr.rel (0) target = $region29
    $region28: #{tpu_custom_call.1} parent=1 // pred_region
      _
    $region29: #{tpu_custom_call.1} parent=1 // pred_fallthru
      _
    // Predicated region
    $region30: #{tpu_custom_call.1} parent=1 // pred_check
      _
    $region31: #{tpu_custom_call.1} parent=1 // pred_check_branch
      %41 = sbr.rel (0) target = $region33
    $region32: #{tpu_custom_call.1} parent=1 // pred_region
      _
    $region33: #{tpu_custom_call.1} parent=1 // pred_fallthru
      _
    // Predicated region
    $region34: #{tpu_custom_call.1} parent=1 // pred_check
      _
    $region35: #{tpu_custom_call.1} parent=1 // pred_check_branch
      %43 = sbr.rel (0) target = $region37
    $region36: #{tpu_custom_call.1} parent=1 // pred_region
      _
    $region37: #{tpu_custom_call.1} parent=1 // pred_fallthru
      _
    // Predicated region
    $region38: #{tpu_custom_call.1} parent=1 // pred_check
      _
    $region39: #{tpu_custom_call.1} parent=1 // pred_check_branch
      %45 = sbr.rel (0) target = $region41
    $region40: #{tpu_custom_call.1} parent=1 // pred_region
      _
    $region41: #{tpu_custom_call.1} parent=1 // pred_fallthru
      _
    // Predicated region
    $region42: #{tpu_custom_call.1} parent=1 // pred_check
      _
    $region43: #{tpu_custom_call.1} parent=1 // pred_check_branch
      %47 = sbr.rel (0) target = $region45
    $region44: #{tpu_custom_call.1} parent=1 // pred_region
      _
    $region45: #{tpu_custom_call.1} parent=1 // pred_fallthru
      _
    // Predicated region
    $region46: #{tpu_custom_call.1} parent=1 // pred_check
      _
    $region47: #{tpu_custom_call.1} parent=1 // pred_check_branch
      %49 = sbr.rel (0) target = $region49
    $region48: #{tpu_custom_call.1} parent=1 // pred_region
      _
    $region49: #{tpu_custom_call.1} parent=1 // pred_fallthru
      _
    // Predicated region
    $region50: #{tpu_custom_call.1} parent=1 // pred_check
      _
    $region51: #{tpu_custom_call.1} parent=1 // pred_check_branch
      %51 = sbr.rel (0) target = $region53
    $region52: #{tpu_custom_call.1} parent=1 // pred_region
      _
    $region53: #{tpu_custom_call.1} parent=1 // pred_fallthru
      _
    // Predicated region
    $region54: #{tpu_custom_call.1} parent=1 // pred_check
      _
    $region55: #{tpu_custom_call.1} parent=1 // pred_check_branch
      %53 = sbr.rel (0) target = $region57
    $region56: #{tpu_custom_call.1} parent=1 // pred_region
      _
    $region57: #{tpu_custom_call.1} parent=1 // pred_fallthru
      _
    // Predicated region
    $region58: #{tpu_custom_call.1} parent=1 // pred_check
      _
    $region59: #{tpu_custom_call.1} parent=1 // pred_check_branch
      %55 = sbr.rel (0) target = $region61
    $region60: #{tpu_custom_call.1} parent=1 // pred_region
      _
    $region61: #{tpu_custom_call.1} parent=1 // pred_fallthru
      _
    // Predicated region
    $region62: #{tpu_custom_call.1} parent=1 // pred_check
      _
    $region63: #{tpu_custom_call.1} parent=1 // pred_check_branch
      %57 = sbr.rel (0) target = $region65
    $region64: #{tpu_custom_call.1} parent=1 // pred_region
      _
    $region65: #{tpu_custom_call.1} parent=1 // pred_fallthru
      _
    // Predicated region
    $region66: #{tpu_custom_call.1} parent=1 // pred_check
      _
    $region67: #{tpu_custom_call.1} parent=1 // pred_check_branch
      %59 = sbr.rel (0) target = $region69
    $region68: #{tpu_custom_call.1} parent=1 // pred_region
      _
    $region69: #{tpu_custom_call.1} parent=1 // pred_fallthru
      _
    %v60 = vld [vmem:[%s0] sm:$0xff]
    %v61 = vld [vmem:[%s0 + $0x8] sm:$0xff]
    %v62 = vld [vmem:[%s16] sm:$0xff]
    %v63 = vld [vmem:[%s16 + $0x8] sm:$0x1f]
    %v64 = vld [vmem:[%s12] sm:$0xff]
    %v65 = vld [vmem:[%s12 + $0x8] sm:$0xff]
    %v66 = vld [vmem:[%s12 + $0x10] sm:$0xff]
    %v67 = vld [vmem:[%s12 + $0x18] sm:$0xff]
    %s68 = scalar_lea.vmem %s12, 32
    %v69 = vld [vmem:[%s68] sm:$0xff]
    %v70 = vld [vmem:[%s68 + $0x8] sm:$0xff]
    %v71 = vld [vmem:[%s68 + $0x10] sm:$0xff]
    %v72 = vld [vmem:[%s68 + $0x18] sm:$0xff]
    %s73 = scalar_lea.vmem %s12, 64
    %v74 = vld [vmem:[%s73] sm:$0xff]
    %v75 = vld [vmem:[%s73 + $0x8] sm:$0xff]
    %v76 = vld [vmem:[%s73 + $0x10] sm:$0xff]
    %v77 = vld [vmem:[%s73 + $0x18] sm:$0xff]
    %s78 = scalar_lea.vmem %s12, 96
    %v79 = vld [vmem:[%s78] sm:$0xff]
    %v80 = vld [vmem:[%s78 + $0x8] sm:$0xff]
    %v81 = vld [vmem:[%s78 + $0x10] sm:$0xff]
    %v82 = vld [vmem:[%s78 + $0x18] sm:$0xff]
    %s83 = scalar_lea.vmem %s12, 128
    %v84 = vld [vmem:[%s83] sm:$0xff]
    %v85 = vld [vmem:[%s83 + $0x8] sm:$0xff]
    %v86 = vld [vmem:[%s83 + $0x10] sm:$0xff]
    %v87 = vld [vmem:[%s83 + $0x18] sm:$0xff]
    %s88 = scalar_lea.vmem %s12, 160
    %v89 = vld [vmem:[%s88] sm:$0xff]
    %v90 = vld [vmem:[%s88 + $0x8] sm:$0xff]
    %v91 = vld [vmem:[%s88 + $0x10] sm:$0xff]
    %v92 = vld [vmem:[%s88 + $0x18] sm:$0xff]
    %v93 = vld [vmem:[%s9] sm:$0xf]
    %v94 = vld [vmem:[%s1] sm:$0xff]
    %v95 = vld [vmem:[%s1 + $0x8] sm:$0xff]
    %v96 = vld [vmem:[%s10] sm:$0xff]
    %v97 = vld [vmem:[%s10 + $0x8] sm:$0xff]
    %v98 = vld [vmem:[%s10 + $0x10] sm:$0xff]
    %v99 = vld [vmem:[%s10 + $0x18] sm:$0xff]
    %v100 = vld [vmem:[%s11] sm:$0x1]
    %v102 = vlaneseq
    %v103 = vshrl.u32 %v102, 7
    %v104 = vsub.s32 0, %v103
    %v105 = vrot.slane %v100, %v104
    %vm107 = vcmask 261120
    %v109 = vsel %vm107, %v94, 0
    %v112 = vsel %vm107, %v95, 0
    %114 = vmatprep.subr.mxu0 0.0
    %115 = vmatpush1.msra.mxu0 %v96
    %116 = vmatprep.subr.mxu0 0.0
    %117 = vmatpush1.msra.mxu0 %v97
    %118 = vmatprep.subr.mxu0 0.0
    %119 = vmatpush1.msra.mxu0 %v98
    %120 = vmatprep.subr.mxu0 0.0
    %121 = vmatpush1.msra.mxu0 %v99
    %122 = vmatprep.subr.mxu0 0.0
    %123 = vmatpush1.msra.mxu0 0.0
    %124 = vmatprep.subr.mxu0 0.0
    %125 = vmatpush1.msra.mxu0 0.0
    %126 = vmatprep.subr.mxu0 0.0
    %127 = vmatpush1.msra.mxu0 0.0
    %128 = vmatprep.subr.mxu0 0.0
    %129 = vmatpush1.msra.mxu0 0.0
    %130 = vmatprep.subr.mxu0 0.0
    %131 = vmatpush1.msra.mxu0 0.0
    %132 = vmatprep.subr.mxu0 0.0
    %133 = vmatpush1.msra.mxu0 0.0
    %134 = vmatprep.subr.mxu0 0.0
    %135 = vmatpush1.msra.mxu0 0.0
    %136 = vmatprep.subr.mxu0 0.0
    %137 = vmatpush1.msra.mxu0 0.0
    %138 = vmatprep.subr.mxu0 0.0
    %139 = vmatpush1.msra.mxu0 0.0
    %140 = vmatprep.subr.mxu0 0.0
    %141 = vmatpush1.msra.mxu0 0.0
    %142 = vmatprep.subr.mxu0 0.0
    %143 = vmatpush1.msra.mxu0 0.0
    %144 = vmatprep.subr.mxu0 0.0
    %145 = vmatpush1.msra.mxu0 0.0
    %146 = vmatprep.subr.mxu0 0.0
    %147 = vmatpush1.msra.mxu0 0.0
    %148 = vmatprep.subr.mxu0 0.0
    %149 = vmatpush1.msra.mxu0 0.0
    %150 = vmatprep.subr.mxu0 0.0
    %151 = vmatpush1.msra.mxu0 0.0
    %152 = vmatprep.subr.mxu0 0.0
    %153 = vmatpush1.msra.mxu0 0.0
    %154 = vmatprep.subr.mxu0 0.0
    %155 = vmatpush1.msra.mxu0 0.0
    %156 = vmatprep.subr.mxu0 0.0
    %157 = vmatpush1.msra.mxu0 0.0
    %158 = vmatprep.subr.mxu0 0.0
    %159 = vmatpush1.msra.mxu0 0.0
    %160 = vmatprep.subr.mxu0 0.0
    %161 = vmatpush1.msra.mxu0 0.0
    %162 = vmatprep.subr.mxu0 0.0
    %163 = vmatpush1.msra.mxu0 0.0
    %164 = vmatprep.subr.mxu0 0.0
    %165 = vmatpush1.msra.mxu0 0.0
    %166 = vmatprep.subr.mxu0 0.0
    %167 = vmatpush1.msra.mxu0 0.0
    %168 = vmatprep.subr.mxu0 0.0
    %169 = vmatpush1.msra.mxu0 0.0
    %170 = vmatprep.subr.mxu0 0.0
    %171 = vmatpush1.msra.mxu0 0.0
    %172 = vmatprep.subr.mxu0 0.0
    %173 = vmatpush1.msra.mxu0 0.0
    %174 = vmatprep.subr.mxu0 0.0
    %175 = vmatpush1.msra.mxu0 0.0
    %176 = vmatprep.subr.mxu0 0.0
    %177 = vmatpush1.msra.mxu0 0.0
    %178 = vmatprep.mubr.f32.mxu0 0.0
    %179 = vmatmul.mubr.f32.gmra.mrb[0].mxu0 %v109
    %v180 = vpop.f32.mrb[0].mxu0
    %v181 = vadd.f32 %v105, %v180
    %v182 = vpop.f32.mrb[0].mxu0
    %183 = vmatprep.mubr.f32.mxu0 0.0
    %184 = vmatmul.mubr.f32.gmra.mrb[0].mxu0 %v112
    %v185 = vpop.f32.mrb[0].mxu0
    %v186 = vadd.f32 %v105, %v185
    %v187 = vpop.f32.mrb[0].mxu0
    %188 = vdwg.mxu0
    %v189 = vlaneseq
    %v190 = vshrl.u32 %v189, 7
    %v191 = vsub.s32 0, %v190
    %v192 = vrot.slane %v62, %v191
    %v194 = vsel %vm107, %v60, 0
    %v197 = vsel %vm107, %v61, 0
    %199 = vmatprep.subr.mxu0 0.0
    %200 = vmatpush1.msra.mxu0 %v64
    %201 = vmatprep.subr.mxu0 0.0
    %202 = vmatpush1.msra.mxu0 %v65
    %203 = vmatprep.subr.mxu0 0.0
    %204 = vmatpush1.msra.mxu0 %v66
    %205 = vmatprep.subr.mxu0 0.0
    %206 = vmatpush1.msra.mxu0 %v67
    %207 = vmatprep.subr.mxu0 0.0
    %208 = vmatpush1.msra.mxu0 0.0
    %209 = vmatprep.subr.mxu0 0.0
    %210 = vmatpush1.msra.mxu0 0.0
    %211 = vmatprep.subr.mxu0 0.0
    %212 = vmatpush1.msra.mxu0 0.0
    %213 = vmatprep.subr.mxu0 0.0
    %214 = vmatpush1.msra.mxu0 0.0
    %215 = vmatprep.subr.mxu0 0.0
    %216 = vmatpush1.msra.mxu0 0.0
    %217 = vmatprep.subr.mxu0 0.0
    %218 = vmatpush1.msra.mxu0 0.0
    %219 = vmatprep.subr.mxu0 0.0
    %220 = vmatpush1.msra.mxu0 0.0
    %221 = vmatprep.subr.mxu0 0.0
    %222 = vmatpush1.msra.mxu0 0.0
    %223 = vmatprep.subr.mxu0 0.0
    %224 = vmatpush1.msra.mxu0 0.0
    %225 = vmatprep.subr.mxu0 0.0
    %226 = vmatpush1.msra.mxu0 0.0
    %227 = vmatprep.subr.mxu0 0.0
    %228 = vmatpush1.msra.mxu0 0.0
    %229 = vmatprep.subr.mxu0 0.0
    %230 = vmatpush1.msra.mxu0 0.0
    %231 = vmatprep.subr.mxu0 0.0
    %232 = vmatpush1.msra.mxu0 0.0
    %233 = vmatprep.subr.mxu0 0.0
    %234 = vmatpush1.msra.mxu0 0.0
    %235 = vmatprep.subr.mxu0 0.0
    %236 = vmatpush1.msra.mxu0 0.0
    %237 = vmatprep.subr.mxu0 0.0
    %238 = vmatpush1.msra.mxu0 0.0
    %239 = vmatprep.subr.mxu0 0.0
    %240 = vmatpush1.msra.mxu0 0.0
    %241 = vmatprep.subr.mxu0 0.0
    %242 = vmatpush1.msra.mxu0 0.0
    %243 = vmatprep.subr.mxu0 0.0
    %244 = vmatpush1.msra.mxu0 0.0
    %245 = vmatprep.subr.mxu0 0.0
    %246 = vmatpush1.msra.mxu0 0.0
    %247 = vmatprep.subr.mxu0 0.0
    %248 = vmatpush1.msra.mxu0 0.0
    %249 = vmatprep.subr.mxu0 0.0
    %250 = vmatpush1.msra.mxu0 0.0
    %251 = vmatprep.subr.mxu0 0.0
    %252 = vmatpush1.msra.mxu0 0.0
    %253 = vmatprep.subr.mxu0 0.0
    %254 = vmatpush1.msra.mxu0 0.0
    %255 = vmatprep.subr.mxu0 0.0
    %256 = vmatpush1.msra.mxu0 0.0
    %257 = vmatprep.subr.mxu0 0.0
    %258 = vmatpush1.msra.mxu0 0.0
    %259 = vmatprep.subr.mxu0 0.0
    %260 = vmatpush1.msra.mxu0 0.0
    %261 = vmatprep.subr.mxu0 0.0
    %262 = vmatpush1.msra.mxu0 0.0
    %263 = vmatprep.mubr.f32.mxu0 0.0
    %264 = vmatmul.mubr.f32.gmra.mrb[0].mxu0 %v194
    %v265 = vpop.f32.mrb[0].mxu0
    %v266 = vadd.f32 %v192, %v265
    %v267 = vpop.f32.mrb[0].mxu0
    %268 = vmatprep.mubr.f32.mxu0 0.0
    %269 = vmatmul.mubr.f32.gmra.mrb[0].mxu0 %v197
    %v270 = vpop.f32.mrb[0].mxu0
    %v271 = vadd.f32 %v192, %v270
    %v272 = vpop.f32.mrb[0].mxu0
    %273 = vdwg.mxu0
    %v274 = vld [vmem:[%s7] sm:$0xff]
    %v275 = vld [vmem:[%s7 + $0x8] sm:$0xff]
    %v276 = vlaneseq
    %v277 = vshrl.u32 %v276, 7
    %v278 = vsub.s32 0, %v277
    %v279 = vrot.slane %v93, %v278
    %v280 = vmul.f32 %v181, %v279
    %v281 = vmul.f32 %v186, %v279
    %283 = vrot.lane.b32.xlu0 %v279, 32
    %v284 = vpop.permute.xlu0 %283
    %v286 = vmul.f32 %v181, %v284
    %v287 = vmul.f32 %v186, %v284
    %290 = vrot.lane.b32.xlu0 %v286, 96
    %v291 = vpop.permute.xlu0 %290
    %292 = vrot.lane.b32.xlu0 %v287, 96
    %v293 = vpop.permute.xlu0 %292
    %v295 = vsel %vm107, %v280, 0
    %v298 = vsel %vm107, %v281, 0
    %v300 = vsel %vm107, %v291, 0
    %v302 = vsel %vm107, %v293, 0
    %304 = vmatprep.subr.mxu0 0.0
    %305 = vmatpush1.xpose.msra.mxu0 %v300
    %306 = vmatprep.subr.mxu0 0.0
    %307 = vmatpush1.xpose.msra.mxu0 %v302
    %308 = vmatprep.subr.mxu0 0.0
    %309 = vmatpush1.xpose.msra.mxu0 0.0
    %310 = vmatprep.subr.mxu0 0.0
    %311 = vmatpush1.xpose.msra.mxu0 0.0
    %312 = vmatprep.subr.mxu0 0.0
    %313 = vmatpush1.xpose.msra.mxu0 0.0
    %314 = vmatprep.subr.mxu0 0.0
    %315 = vmatpush1.xpose.msra.mxu0 0.0
    %316 = vmatprep.subr.mxu0 0.0
    %317 = vmatpush1.xpose.msra.mxu0 0.0
    %318 = vmatprep.subr.mxu0 0.0
    %319 = vmatpush1.xpose.msra.mxu0 0.0
    %320 = vmatprep.subr.mxu0 0.0
    %321 = vmatpush1.xpose.msra.mxu0 0.0
    %322 = vmatprep.subr.mxu0 0.0
    %323 = vmatpush1.xpose.msra.mxu0 0.0
    %324 = vmatprep.subr.mxu0 0.0
    %325 = vmatpush1.xpose.msra.mxu0 0.0
    %326 = vmatprep.subr.mxu0 0.0
    %327 = vmatpush1.xpose.msra.mxu0 0.0
    %328 = vmatprep.subr.mxu0 0.0
    %329 = vmatpush1.xpose.msra.mxu0 0.0
    %330 = vmatprep.subr.mxu0 0.0
    %331 = vmatpush1.xpose.msra.mxu0 0.0
    %332 = vmatprep.subr.mxu0 0.0
    %333 = vmatpush1.xpose.msra.mxu0 0.0
    %334 = vmatprep.subr.mxu0 0.0
    %335 = vmatpush1.xpose.msra.mxu0 0.0
    %336 = vmatprep.subr.mxu0 0.0
    %337 = vmatpush1.xpose.msra.mxu0 0.0
    %338 = vmatprep.subr.mxu0 0.0
    %339 = vmatpush1.xpose.msra.mxu0 0.0
    %340 = vmatprep.subr.mxu0 0.0
    %341 = vmatpush1.xpose.msra.mxu0 0.0
    %342 = vmatprep.subr.mxu0 0.0
    %343 = vmatpush1.xpose.msra.mxu0 0.0
    %344 = vmatprep.subr.mxu0 0.0
    %345 = vmatpush1.xpose.msra.mxu0 0.0
    %346 = vmatprep.subr.mxu0 0.0
    %347 = vmatpush1.xpose.msra.mxu0 0.0
    %348 = vmatprep.subr.mxu0 0.0
    %349 = vmatpush1.xpose.msra.mxu0 0.0
    %350 = vmatprep.subr.mxu0 0.0
    %351 = vmatpush1.xpose.msra.mxu0 0.0
    %352 = vmatprep.subr.mxu0 0.0
    %353 = vmatpush1.xpose.msra.mxu0 0.0
    %354 = vmatprep.subr.mxu0 0.0
    %355 = vmatpush1.xpose.msra.mxu0 0.0
    %356 = vmatprep.subr.mxu0 0.0
    %357 = vmatpush1.xpose.msra.mxu0 0.0
    %358 = vmatprep.subr.mxu0 0.0
    %359 = vmatpush1.xpose.msra.mxu0 0.0
    %360 = vmatprep.subr.mxu0 0.0
    %361 = vmatpush1.xpose.msra.mxu0 0.0
    %362 = vmatprep.subr.mxu0 0.0
    %363 = vmatpush1.xpose.msra.mxu0 0.0
    %364 = vmatprep.subr.mxu0 0.0
    %365 = vmatpush1.xpose.msra.mxu0 0.0
    %366 = vmatprep.subr.mxu0 0.0
    %367 = vmatpush1.xpose.msra.mxu0 0.0
    %368 = vmatprep.mubr.f32.mxu0 0.0
    %369 = vmatmul.mubr.f32.gmra.mrb[0].mxu0 %v295
    %v370 = vpop.f32.mrb[0].mxu0
    %v371 = vadd.f32 0.0, %v370
    %v372 = vpop.f32.mrb[0].mxu0
    %373 = vmatprep.mubr.f32.mxu0 0.0
    %374 = vmatmul.mubr.f32.gmra.mrb[0].mxu0 %v298
    %v375 = vpop.f32.mrb[0].mxu0
    %v376 = vadd.f32 0.0, %v375
    %v377 = vpop.f32.mrb[0].mxu0
    %378 = vdwg.mxu0
    %v379 = vmul.f32 %v371, 0.35355338
    %v380 = vmul.f32 %v376, 0.35355338
    %v381 = vadd.f32 %v379, %v274
    %v382 = vadd.f32 %v380, %v275
    %vm383 = vcmask 130048
    %v384 = vsel %vm383, %v381, -inf
    %385 = vmax.xlane.f32.xlu0 %v384
    %v386 = vpop.xlane.xlu0 %385
    %v387 = vsel %vm383, %v382, -inf
    %388 = vmax.xlane.f32.xlu0 %v387
    %v389 = vpop.xlane.xlu0 %388
    %v390 = vsub.f32 %v381, %v386
    %v391 = vsub.f32 %v382, %v389
    %v392 = vmul.f32 %v390, 1.442695
    %v393 = vpow.pop %v392
    %v394 = vmul.f32 %v391, 1.442695
    %v395 = vpow.pop %v394
    %v396 = vsel %vm383, %v393, 0.0
    %397 = vadd.xlane.f32.xlu0 %v396
    %v398 = vpop.xlane.xlu0 %397
    %v399 = vsel %vm383, %v395, 0.0
    %400 = vadd.xlane.f32.xlu0 %v399
    %v401 = vpop.xlane.xlu0 %400
    %v402 = vrcp.pop %v398
    %v403 = vrcp.pop %v401
    %v404 = vmul.f32 %v398, %v402
    %v405 = vmul.f32 %v401, %v403
    %v406 = vsub.f32 2.0, %v404
    %v407 = vsub.f32 2.0, %v405
    %v408 = vmul.f32 %v402, %v406
    %v409 = vmul.f32 %v403, %v407
    %v410 = vmul.f32 %v393, %v408
    %v411 = vmul.f32 %v395, %v409
    %v412 = vadd.f32 %v410, 0.0
    %v413 = vadd.f32 %v411, 0.0
    %v414 = vmul.f32 %v266, %v279
    %v415 = vmul.f32 %v271, %v279
    %v416 = vlaneseq
    %v417 = vshrl.u32 %v416, 7
    %v418 = vsub.s32 1, %v417
    %v419 = vrot.slane %v93, %v418
    %v420 = vmul.f32 %v181, %v419
    %v421 = vmul.f32 %v186, %v419
    %423 = vrot.lane.b32.xlu0 %v419, 32
    %v424 = vpop.permute.xlu0 %423
    %v426 = vmul.f32 %v181, %v424
    %v427 = vmul.f32 %v186, %v424
    %430 = vrot.lane.b32.xlu0 %v426, 96
    %v431 = vpop.permute.xlu0 %430
    %432 = vrot.lane.b32.xlu0 %v427, 96
    %v433 = vpop.permute.xlu0 %432
    %v435 = vsel %vm107, %v420, 0
    %v438 = vsel %vm107, %v421, 0
    %v440 = vsel %vm107, %v431, 0
    %v442 = vsel %vm107, %v433, 0
    %444 = vmatprep.subr.mxu0 0.0
    %445 = vmatpush1.xpose.msra.mxu0 %v440
    %446 = vmatprep.subr.mxu0 0.0
    %447 = vmatpush1.xpose.msra.mxu0 %v442
    %448 = vmatprep.subr.mxu0 0.0
    %449 = vmatpush1.xpose.msra.mxu0 0.0
    %450 = vmatprep.subr.mxu0 0.0
    %451 = vmatpush1.xpose.msra.mxu0 0.0
    %452 = vmatprep.subr.mxu0 0.0
    %453 = vmatpush1.xpose.msra.mxu0 0.0
    %454 = vmatprep.subr.mxu0 0.0
    %455 = vmatpush1.xpose.msra.mxu0 0.0
    %456 = vmatprep.subr.mxu0 0.0
    %457 = vmatpush1.xpose.msra.mxu0 0.0
    %458 = vmatprep.subr.mxu0 0.0
    %459 = vmatpush1.xpose.msra.mxu0 0.0
    %460 = vmatprep.subr.mxu0 0.0
    %461 = vmatpush1.xpose.msra.mxu0 0.0
    %462 = vmatprep.subr.mxu0 0.0
    %463 = vmatpush1.xpose.msra.mxu0 0.0
    %464 = vmatprep.subr.mxu0 0.0
    %465 = vmatpush1.xpose.msra.mxu0 0.0
    %466 = vmatprep.subr.mxu0 0.0
    %467 = vmatpush1.xpose.msra.mxu0 0.0
    %468 = vmatprep.subr.mxu0 0.0
    %469 = vmatpush1.xpose.msra.mxu0 0.0
    %470 = vmatprep.subr.mxu0 0.0
    %471 = vmatpush1.xpose.msra.mxu0 0.0
    %472 = vmatprep.subr.mxu0 0.0
    %473 = vmatpush1.xpose.msra.mxu0 0.0
    %474 = vmatprep.subr.mxu0 0.0
    %475 = vmatpush1.xpose.msra.mxu0 0.0
    %476 = vmatprep.subr.mxu0 0.0
    %477 = vmatpush1.xpose.msra.mxu0 0.0
    %478 = vmatprep.subr.mxu0 0.0
    %479 = vmatpush1.xpose.msra.mxu0 0.0
    %480 = vmatprep.subr.mxu0 0.0
    %481 = vmatpush1.xpose.msra.mxu0 0.0
    %482 = vmatprep.subr.mxu0 0.0
    %483 = vmatpush1.xpose.msra.mxu0 0.0
    %484 = vmatprep.subr.mxu0 0.0
    %485 = vmatpush1.xpose.msra.mxu0 0.0
    %486 = vmatprep.subr.mxu0 0.0
    %487 = vmatpush1.xpose.msra.mxu0 0.0
    %488 = vmatprep.subr.mxu0 0.0
    %489 = vmatpush1.xpose.msra.mxu0 0.0
    %490 = vmatprep.subr.mxu0 0.0
    %491 = vmatpush1.xpose.msra.mxu0 0.0
    %492 = vmatprep.subr.mxu0 0.0
    %493 = vmatpush1.xpose.msra.mxu0 0.0
    %494 = vmatprep.subr.mxu0 0.0
    %495 = vmatpush1.xpose.msra.mxu0 0.0
    %496 = vmatprep.subr.mxu0 0.0
    %497 = vmatpush1.xpose.msra.mxu0 0.0
    %498 = vmatprep.subr.mxu0 0.0
    %499 = vmatpush1.xpose.msra.mxu0 0.0
    %500 = vmatprep.subr.mxu0 0.0
    %501 = vmatpush1.xpose.msra.mxu0 0.0
    %502 = vmatprep.subr.mxu0 0.0
    %503 = vmatpush1.xpose.msra.mxu0 0.0
    %504 = vmatprep.subr.mxu0 0.0
    %505 = vmatpush1.xpose.msra.mxu0 0.0
    %506 = vmatprep.subr.mxu0 0.0
    %507 = vmatpush1.xpose.msra.mxu0 0.0
    %508 = vmatprep.mubr.f32.mxu0 0.0
    %509 = vmatmul.mubr.f32.gmra.mrb[0].mxu0 %v435
    %v510 = vpop.f32.mrb[0].mxu0
    %v511 = vadd.f32 0.0, %v510
    %v512 = vpop.f32.mrb[0].mxu0
    %513 = vmatprep.mubr.f32.mxu0 0.0
    %514 = vmatmul.mubr.f32.gmra.mrb[0].mxu0 %v438
    %v515 = vpop.f32.mrb[0].mxu0
    %v516 = vadd.f32 0.0, %v515
    %v517 = vpop.f32.mrb[0].mxu0
    %518 = vdwg.mxu0
    %v519 = vmul.f32 %v511, 0.35355338
    %v520 = vmul.f32 %v516, 0.35355338
    %v521 = vadd.f32 %v519, %v274
    %v522 = vadd.f32 %v520, %v275
    %v523 = vsel %vm383, %v521, -inf
    %524 = vmax.xlane.f32.xlu0 %v523
    %v525 = vpop.xlane.xlu0 %524
    %v526 = vsel %vm383, %v522, -inf
    %527 = vmax.xlane.f32.xlu0 %v526
    %v528 = vpop.xlane.xlu0 %527
    %v529 = vsub.f32 %v521, %v525
    %v530 = vsub.f32 %v522, %v528
    %v531 = vmul.f32 %v529, 1.442695
    %v532 = vpow.pop %v531
    %v533 = vmul.f32 %v530, 1.442695
    %v534 = vpow.pop %v533
    %v535 = vsel %vm383, %v532, 0.0
    %536 = vadd.xlane.f32.xlu0 %v535
    %v537 = vpop.xlane.xlu0 %536
    %v538 = vsel %vm383, %v534, 0.0
    %539 = vadd.xlane.f32.xlu0 %v538
    %v540 = vpop.xlane.xlu0 %539
    %v541 = vrcp.pop %v537
    %v542 = vrcp.pop %v540
    %v543 = vmul.f32 %v537, %v541
    %v544 = vmul.f32 %v540, %v542
    %v545 = vsub.f32 2.0, %v543
    %v546 = vsub.f32 2.0, %v544
    %v547 = vmul.f32 %v541, %v545
    %v548 = vmul.f32 %v542, %v546
    %v549 = vmul.f32 %v532, %v547
    %v550 = vmul.f32 %v534, %v548
    %v551 = vadd.f32 %v412, %v549
    %v552 = vadd.f32 %v413, %v550
    %v553 = vmul.f32 %v266, %v419
    %v554 = vmul.f32 %v271, %v419
    %v556 = vsel %vm383, %v549, 0
    %v559 = vsel %vm383, %v550, 0
    %561 = vmatprep.subr.mxu0 0.0
    %562 = vmatpush1.msra.mxu0 %v553
    %563 = vmatprep.subr.mxu0 0.0
    %564 = vmatpush1.msra.mxu0 %v554
    %565 = vmatprep.subr.mxu0 0.0
    %566 = vmatpush1.msra.mxu0 0.0
    %567 = vmatprep.subr.mxu0 0.0
    %568 = vmatpush1.msra.mxu0 0.0
    %569 = vmatprep.subr.mxu0 0.0
    %570 = vmatpush1.msra.mxu0 0.0
    %571 = vmatprep.subr.mxu0 0.0
    %572 = vmatpush1.msra.mxu0 0.0
    %573 = vmatprep.subr.mxu0 0.0
    %574 = vmatpush1.msra.mxu0 0.0
    %575 = vmatprep.subr.mxu0 0.0
    %576 = vmatpush1.msra.mxu0 0.0
    %577 = vmatprep.subr.mxu0 0.0
    %578 = vmatpush1.msra.mxu0 0.0
    %579 = vmatprep.subr.mxu0 0.0
    %580 = vmatpush1.msra.mxu0 0.0
    %581 = vmatprep.subr.mxu0 0.0
    %582 = vmatpush1.msra.mxu0 0.0
    %583 = vmatprep.subr.mxu0 0.0
    %584 = vmatpush1.msra.mxu0 0.0
    %585 = vmatprep.subr.mxu0 0.0
    %586 = vmatpush1.msra.mxu0 0.0
    %587 = vmatprep.subr.mxu0 0.0
    %588 = vmatpush1.msra.mxu0 0.0
    %589 = vmatprep.subr.mxu0 0.0
    %590 = vmatpush1.msra.mxu0 0.0
    %591 = vmatprep.subr.mxu0 0.0
    %592 = vmatpush1.msra.mxu0 0.0
    %593 = vmatprep.subr.mxu0 0.0
    %594 = vmatpush1.msra.mxu0 0.0
    %595 = vmatprep.subr.mxu0 0.0
    %596 = vmatpush1.msra.mxu0 0.0
    %597 = vmatprep.subr.mxu0 0.0
    %598 = vmatpush1.msra.mxu0 0.0
    %599 = vmatprep.subr.mxu0 0.0
    %600 = vmatpush1.msra.mxu0 0.0
    %601 = vmatprep.subr.mxu0 0.0
    %602 = vmatpush1.msra.mxu0 0.0
    %603 = vmatprep.subr.mxu0 0.0
    %604 = vmatpush1.msra.mxu0 0.0
    %605 = vmatprep.subr.mxu0 0.0
    %606 = vmatpush1.msra.mxu0 0.0
    %607 = vmatprep.subr.mxu0 0.0
    %608 = vmatpush1.msra.mxu0 0.0
    %609 = vmatprep.subr.mxu0 0.0
    %610 = vmatpush1.msra.mxu0 0.0
    %611 = vmatprep.subr.mxu0 0.0
    %612 = vmatpush1.msra.mxu0 0.0
    %613 = vmatprep.subr.mxu0 0.0
    %614 = vmatpush1.msra.mxu0 0.0
    %615 = vmatprep.subr.mxu0 0.0
    %616 = vmatpush1.msra.mxu0 0.0
    %617 = vmatprep.subr.mxu0 0.0
    %618 = vmatpush1.msra.mxu0 0.0
    %619 = vmatprep.subr.mxu0 0.0
    %620 = vmatpush1.msra.mxu0 0.0
    %621 = vmatprep.subr.mxu0 0.0
    %622 = vmatpush1.msra.mxu0 0.0
    %623 = vmatprep.subr.mxu0 0.0
    %624 = vmatpush1.msra.mxu0 0.0
    %625 = vmatprep.mubr.f32.mxu0 0.0
    %626 = vmatmul.mubr.f32.gmra.mrb[0].mxu0 %v556
    %v627 = vpop.f32.mrb[0].mxu0
    %v628 = vadd.f32 0.0, %v627
    %v629 = vpop.f32.mrb[0].mxu0
    %630 = vmatprep.mubr.f32.mxu0 0.0
    %631 = vmatmul.mubr.f32.gmra.mrb[0].mxu0 %v559
    %v632 = vpop.f32.mrb[0].mxu0
    %v633 = vadd.f32 0.0, %v632
    %v634 = vpop.f32.mrb[0].mxu0
    %635 = vdwg.mxu0
    %v637 = vsel %vm383, %v410, 0
    %v640 = vsel %vm383, %v411, 0
    %642 = vmatprep.subr.mxu0 0.0
    %643 = vmatpush1.msra.mxu0 %v414
    %644 = vmatprep.subr.mxu0 0.0
    %645 = vmatpush1.msra.mxu0 %v415
    %646 = vmatprep.subr.mxu0 0.0
    %647 = vmatpush1.msra.mxu0 0.0
    %648 = vmatprep.subr.mxu0 0.0
    %649 = vmatpush1.msra.mxu0 0.0
    %650 = vmatprep.subr.mxu0 0.0
    %651 = vmatpush1.msra.mxu0 0.0
    %652 = vmatprep.subr.mxu0 0.0
    %653 = vmatpush1.msra.mxu0 0.0
    %654 = vmatprep.subr.mxu0 0.0
    %655 = vmatpush1.msra.mxu0 0.0
    %656 = vmatprep.subr.mxu0 0.0
    %657 = vmatpush1.msra.mxu0 0.0
    %658 = vmatprep.subr.mxu0 0.0
    %659 = vmatpush1.msra.mxu0 0.0
    %660 = vmatprep.subr.mxu0 0.0
    %661 = vmatpush1.msra.mxu0 0.0
    %662 = vmatprep.subr.mxu0 0.0
    %663 = vmatpush1.msra.mxu0 0.0
    %664 = vmatprep.subr.mxu0 0.0
    %665 = vmatpush1.msra.mxu0 0.0
    %666 = vmatprep.subr.mxu0 0.0
    %667 = vmatpush1.msra.mxu0 0.0
    %668 = vmatprep.subr.mxu0 0.0
    %669 = vmatpush1.msra.mxu0 0.0
    %670 = vmatprep.subr.mxu0 0.0
    %671 = vmatpush1.msra.mxu0 0.0
    %672 = vmatprep.subr.mxu0 0.0
    %673 = vmatpush1.msra.mxu0 0.0
    %674 = vmatprep.subr.mxu0 0.0
    %675 = vmatpush1.msra.mxu0 0.0
    %676 = vmatprep.subr.mxu0 0.0
    %677 = vmatpush1.msra.mxu0 0.0
    %678 = vmatprep.subr.mxu0 0.0
    %679 = vmatpush1.msra.mxu0 0.0
    %680 = vmatprep.subr.mxu0 0.0
    %681 = vmatpush1.msra.mxu0 0.0
    %682 = vmatprep.subr.mxu0 0.0
    %683 = vmatpush1.msra.mxu0 0.0
    %684 = vmatprep.subr.mxu0 0.0
    %685 = vmatpush1.msra.mxu0 0.0
    %686 = vmatprep.subr.mxu0 0.0
    %687 = vmatpush1.msra.mxu0 0.0
    %688 = vmatprep.subr.mxu0 0.0
    %689 = vmatpush1.msra.mxu0 0.0
    %690 = vmatprep.subr.mxu0 0.0
    %691 = vmatpush1.msra.mxu0 0.0
    %692 = vmatprep.subr.mxu0 0.0
    %693 = vmatpush1.msra.mxu0 0.0
    %694 = vmatprep.subr.mxu0 0.0
    %695 = vmatpush1.msra.mxu0 0.0
    %696 = vmatprep.subr.mxu0 0.0
    %697 = vmatpush1.msra.mxu0 0.0
    %698 = vmatprep.subr.mxu0 0.0
    %699 = vmatpush1.msra.mxu0 0.0
    %700 = vmatprep.subr.mxu0 0.0
    %701 = vmatpush1.msra.mxu0 0.0
    %702 = vmatprep.subr.mxu0 0.0
    %703 = vmatpush1.msra.mxu0 0.0
    %704 = vmatprep.subr.mxu0 0.0
    %705 = vmatpush1.msra.mxu0 0.0
    %706 = vmatprep.mubr.f32.mxu0 0.0
    %707 = vmatmul.mubr.f32.gmra.mrb[0].mxu0 %v637
    %v708 = vpop.f32.mrb[0].mxu0
    %v709 = vadd.f32 %v628, %v708
    %v710 = vpop.f32.mrb[0].mxu0
    %711 = vmatprep.mubr.f32.mxu0 0.0
    %712 = vmatmul.mubr.f32.gmra.mrb[0].mxu0 %v640
    %v713 = vpop.f32.mrb[0].mxu0
    %v714 = vadd.f32 %v633, %v713
    %v715 = vpop.f32.mrb[0].mxu0
    %716 = vdwg.mxu0
    %v717 = vlaneseq
    %v718 = vshrl.u32 %v717, 7
    %v719 = vsub.s32 2, %v718
    %v720 = vrot.slane %v93, %v719
    %v721 = vmul.f32 %v181, %v720
    %v722 = vmul.f32 %v186, %v720
    %724 = vrot.lane.b32.xlu0 %v720, 32
    %v725 = vpop.permute.xlu0 %724
    %v727 = vmul.f32 %v181, %v725
    %v728 = vmul.f32 %v186, %v725
    %731 = vrot.lane.b32.xlu0 %v727, 96
    %v732 = vpop.permute.xlu0 %731
    %733 = vrot.lane.b32.xlu0 %v728, 96
    %v734 = vpop.permute.xlu0 %733
    %v736 = vsel %vm107, %v721, 0
    %v739 = vsel %vm107, %v722, 0
    %v741 = vsel %vm107, %v732, 0
    %v743 = vsel %vm107, %v734, 0
    %745 = vmatprep.subr.mxu0 0.0
    %746 = vmatpush1.xpose.msra.mxu0 %v741
    %747 = vmatprep.subr.mxu0 0.0
    %748 = vmatpush1.xpose.msra.mxu0 %v743
    %749 = vmatprep.subr.mxu0 0.0
    %750 = vmatpush1.xpose.msra.mxu0 0.0
    %751 = vmatprep.subr.mxu0 0.0
    %752 = vmatpush1.xpose.msra.mxu0 0.0
    %753 = vmatprep.subr.mxu0 0.0
    %754 = vmatpush1.xpose.msra.mxu0 0.0
    %755 = vmatprep.subr.mxu0 0.0
    %756 = vmatpush1.xpose.msra.mxu0 0.0
    %757 = vmatprep.subr.mxu0 0.0
    %758 = vmatpush1.xpose.msra.mxu0 0.0
    %759 = vmatprep.subr.mxu0 0.0
    %760 = vmatpush1.xpose.msra.mxu0 0.0
    %761 = vmatprep.subr.mxu0 0.0
    %762 = vmatpush1.xpose.msra.mxu0 0.0
    %763 = vmatprep.subr.mxu0 0.0
    %764 = vmatpush1.xpose.msra.mxu0 0.0
    %765 = vmatprep.subr.mxu0 0.0
    %766 = vmatpush1.xpose.msra.mxu0 0.0
    %767 = vmatprep.subr.mxu0 0.0
    %768 = vmatpush1.xpose.msra.mxu0 0.0
    %769 = vmatprep.subr.mxu0 0.0
    %770 = vmatpush1.xpose.msra.mxu0 0.0
    %771 = vmatprep.subr.mxu0 0.0
    %772 = vmatpush1.xpose.msra.mxu0 0.0
    %773 = vmatprep.subr.mxu0 0.0
    %774 = vmatpush1.xpose.msra.mxu0 0.0
    %775 = vmatprep.subr.mxu0 0.0
    %776 = vmatpush1.xpose.msra.mxu0 0.0
    %777 = vmatprep.subr.mxu0 0.0
    %778 = vmatpush1.xpose.msra.mxu0 0.0
    %779 = vmatprep.subr.mxu0 0.0
    %780 = vmatpush1.xpose.msra.mxu0 0.0
    %781 = vmatprep.subr.mxu0 0.0
    %782 = vmatpush1.xpose.msra.mxu0 0.0
    %783 = vmatprep.subr.mxu0 0.0
    %784 = vmatpush1.xpose.msra.mxu0 0.0
    %785 = vmatprep.subr.mxu0 0.0
    %786 = vmatpush1.xpose.msra.mxu0 0.0
    %787 = vmatprep.subr.mxu0 0.0
    %788 = vmatpush1.xpose.msra.mxu0 0.0
    %789 = vmatprep.subr.mxu0 0.0
    %790 = vmatpush1.xpose.msra.mxu0 0.0
    %791 = vmatprep.subr.mxu0 0.0
    %792 = vmatpush1.xpose.msra.mxu0 0.0
    %793 = vmatprep.subr.mxu0 0.0
    %794 = vmatpush1.xpose.msra.mxu0 0.0
    %795 = vmatprep.subr.mxu0 0.0
    %796 = vmatpush1.xpose.msra.mxu0 0.0
    %797 = vmatprep.subr.mxu0 0.0
    %798 = vmatpush1.xpose.msra.mxu0 0.0
    %799 = vmatprep.subr.mxu0 0.0
    %800 = vmatpush1.xpose.msra.mxu0 0.0
    %801 = vmatprep.subr.mxu0 0.0
    %802 = vmatpush1.xpose.msra.mxu0 0.0
    %803 = vmatprep.subr.mxu0 0.0
    %804 = vmatpush1.xpose.msra.mxu0 0.0
    %805 = vmatprep.subr.mxu0 0.0
    %806 = vmatpush1.xpose.msra.mxu0 0.0
    %807 = vmatprep.subr.mxu0 0.0
    %808 = vmatpush1.xpose.msra.mxu0 0.0
    %809 = vmatprep.mubr.f32.mxu0 0.0
    %810 = vmatmul.mubr.f32.gmra.mrb[0].mxu0 %v736
    %v811 = vpop.f32.mrb[0].mxu0
    %v812 = vadd.f32 0.0, %v811
    %v813 = vpop.f32.mrb[0].mxu0
    %814 = vmatprep.mubr.f32.mxu0 0.0
    %815 = vmatmul.mubr.f32.gmra.mrb[0].mxu0 %v739
    %v816 = vpop.f32.mrb[0].mxu0
    %v817 = vadd.f32 0.0, %v816
    %v818 = vpop.f32.mrb[0].mxu0
    %819 = vdwg.mxu0
    %v820 = vmul.f32 %v812, 0.35355338
    %v821 = vmul.f32 %v817, 0.35355338
    %v822 = vadd.f32 %v820, %v274
    %v823 = vadd.f32 %v821, %v275
    %v824 = vsel %vm383, %v822, -inf
    %825 = vmax.xlane.f32.xlu0 %v824
    %v826 = vpop.xlane.xlu0 %825
    %v827 = vsel %vm383, %v823, -inf
    %828 = vmax.xlane.f32.xlu0 %v827
    %v829 = vpop.xlane.xlu0 %828
    %v830 = vsub.f32 %v822, %v826
    %v831 = vsub.f32 %v823, %v829
    %v832 = vmul.f32 %v830, 1.442695
    %v833 = vpow.pop %v832
    %v834 = vmul.f32 %v831, 1.442695
    %v835 = vpow.pop %v834
    %v836 = vsel %vm383, %v833, 0.0
    %837 = vadd.xlane.f32.xlu0 %v836
    %v838 = vpop.xlane.xlu0 %837
    %v839 = vsel %vm383, %v835, 0.0
    %840 = vadd.xlane.f32.xlu0 %v839
    %v841 = vpop.xlane.xlu0 %840
    %v842 = vrcp.pop %v838
    %v843 = vrcp.pop %v841
    %v844 = vmul.f32 %v838, %v842
    %v845 = vmul.f32 %v841, %v843
    %v846 = vsub.f32 2.0, %v844
    %v847 = vsub.f32 2.0, %v845
    %v848 = vmul.f32 %v842, %v846
    %v849 = vmul.f32 %v843, %v847
    %v850 = vmul.f32 %v833, %v848
    %v851 = vmul.f32 %v835, %v849
    %v852 = vadd.f32 %v551, %v850
    %v853 = vadd.f32 %v552, %v851
    %v854 = vmul.f32 %v266, %v720
    %v855 = vmul.f32 %v271, %v720
    %v857 = vsel %vm383, %v850, 0
    %v860 = vsel %vm383, %v851, 0
    %862 = vmatprep.subr.mxu0 0.0
    %863 = vmatpush1.msra.mxu0 %v854
    %864 = vmatprep.subr.mxu0 0.0
    %865 = vmatpush1.msra.mxu0 %v855
    %866 = vmatprep.subr.mxu0 0.0
    %867 = vmatpush1.msra.mxu0 0.0
    %868 = vmatprep.subr.mxu0 0.0
    %869 = vmatpush1.msra.mxu0 0.0
    %870 = vmatprep.subr.mxu0 0.0
    %871 = vmatpush1.msra.mxu0 0.0
    %872 = vmatprep.subr.mxu0 0.0
    %873 = vmatpush1.msra.mxu0 0.0
    %874 = vmatprep.subr.mxu0 0.0
    %875 = vmatpush1.msra.mxu0 0.0
    %876 = vmatprep.subr.mxu0 0.0
    %877 = vmatpush1.msra.mxu0 0.0
    %878 = vmatprep.subr.mxu0 0.0
    %879 = vmatpush1.msra.mxu0 0.0
    %880 = vmatprep.subr.mxu0 0.0
    %881 = vmatpush1.msra.mxu0 0.0
    %882 = vmatprep.subr.mxu0 0.0
    %883 = vmatpush1.msra.mxu0 0.0
    %884 = vmatprep.subr.mxu0 0.0
    %885 = vmatpush1.msra.mxu0 0.0
    %886 = vmatprep.subr.mxu0 0.0
    %887 = vmatpush1.msra.mxu0 0.0
    %888 = vmatprep.subr.mxu0 0.0
    %889 = vmatpush1.msra.mxu0 0.0
    %890 = vmatprep.subr.mxu0 0.0
    %891 = vmatpush1.msra.mxu0 0.0
    %892 = vmatprep.subr.mxu0 0.0
    %893 = vmatpush1.msra.mxu0 0.0
    %894 = vmatprep.subr.mxu0 0.0
    %895 = vmatpush1.msra.mxu0 0.0
    %896 = vmatprep.subr.mxu0 0.0
    %897 = vmatpush1.msra.mxu0 0.0
    %898 = vmatprep.subr.mxu0 0.0
    %899 = vmatpush1.msra.mxu0 0.0
    %900 = vmatprep.subr.mxu0 0.0
    %901 = vmatpush1.msra.mxu0 0.0
    %902 = vmatprep.subr.mxu0 0.0
    %903 = vmatpush1.msra.mxu0 0.0
    %904 = vmatprep.subr.mxu0 0.0
    %905 = vmatpush1.msra.mxu0 0.0
    %906 = vmatprep.subr.mxu0 0.0
    %907 = vmatpush1.msra.mxu0 0.0
    %908 = vmatprep.subr.mxu0 0.0
    %909 = vmatpush1.msra.mxu0 0.0
    %910 = vmatprep.subr.mxu0 0.0
    %911 = vmatpush1.msra.mxu0 0.0
    %912 = vmatprep.subr.mxu0 0.0
    %913 = vmatpush1.msra.mxu0 0.0
    %914 = vmatprep.subr.mxu0 0.0
    %915 = vmatpush1.msra.mxu0 0.0
    %916 = vmatprep.subr.mxu0 0.0
    %917 = vmatpush1.msra.mxu0 0.0
    %918 = vmatprep.subr.mxu0 0.0
    %919 = vmatpush1.msra.mxu0 0.0
    %920 = vmatprep.subr.mxu0 0.0
    %921 = vmatpush1.msra.mxu0 0.0
    %922 = vmatprep.subr.mxu0 0.0
    %923 = vmatpush1.msra.mxu0 0.0
    %924 = vmatprep.subr.mxu0 0.0
    %925 = vmatpush1.msra.mxu0 0.0
    %926 = vmatprep.mubr.f32.mxu0 0.0
    %927 = vmatmul.mubr.f32.gmra.mrb[0].mxu0 %v857
    %v928 = vpop.f32.mrb[0].mxu0
    %v929 = vadd.f32 0.0, %v928
    %v930 = vpop.f32.mrb[0].mxu0
    %931 = vmatprep.mubr.f32.mxu0 0.0
    %932 = vmatmul.mubr.f32.gmra.mrb[0].mxu0 %v860
    %v933 = vpop.f32.mrb[0].mxu0
    %v934 = vadd.f32 0.0, %v933
    %v935 = vpop.f32.mrb[0].mxu0
    %936 = vdwg.mxu0
    %v937 = vadd.f32 %v709, %v929
    %v938 = vadd.f32 %v714, %v934
    %v939 = vlaneseq
    %v940 = vshrl.u32 %v939, 7
    %v941 = vsub.s32 3, %v940
    %v942 = vrot.slane %v93, %v941
    %v943 = vmul.f32 %v181, %v942
    %v944 = vmul.f32 %v186, %v942
    %946 = vrot.lane.b32.xlu0 %v942, 32
    %v947 = vpop.permute.xlu0 %946
    %v949 = vmul.f32 %v181, %v947
    %v950 = vmul.f32 %v186, %v947
    %953 = vrot.lane.b32.xlu0 %v949, 96
    %v954 = vpop.permute.xlu0 %953
    %955 = vrot.lane.b32.xlu0 %v950, 96
    %v956 = vpop.permute.xlu0 %955
    %v958 = vsel %vm107, %v943, 0
    %v961 = vsel %vm107, %v944, 0
    %v963 = vsel %vm107, %v954, 0
    %v965 = vsel %vm107, %v956, 0
    %967 = vmatprep.subr.mxu0 0.0
    %968 = vmatpush1.xpose.msra.mxu0 %v963
    %969 = vmatprep.subr.mxu0 0.0
    %970 = vmatpush1.xpose.msra.mxu0 %v965
    %971 = vmatprep.subr.mxu0 0.0
    %972 = vmatpush1.xpose.msra.mxu0 0.0
    %973 = vmatprep.subr.mxu0 0.0
    %974 = vmatpush1.xpose.msra.mxu0 0.0
    %975 = vmatprep.subr.mxu0 0.0
    %976 = vmatpush1.xpose.msra.mxu0 0.0
    %977 = vmatprep.subr.mxu0 0.0
    %978 = vmatpush1.xpose.msra.mxu0 0.0
    %979 = vmatprep.subr.mxu0 0.0
    %980 = vmatpush1.xpose.msra.mxu0 0.0
    %981 = vmatprep.subr.mxu0 0.0
    %982 = vmatpush1.xpose.msra.mxu0 0.0
    %983 = vmatprep.subr.mxu0 0.0
    %984 = vmatpush1.xpose.msra.mxu0 0.0
    %985 = vmatprep.subr.mxu0 0.0
    %986 = vmatpush1.xpose.msra.mxu0 0.0
    %987 = vmatprep.subr.mxu0 0.0
    %988 = vmatpush1.xpose.msra.mxu0 0.0
    %989 = vmatprep.subr.mxu0 0.0
    %990 = vmatpush1.xpose.msra.mxu0 0.0
    %991 = vmatprep.subr.mxu0 0.0
    %992 = vmatpush1.xpose.msra.mxu0 0.0
    %993 = vmatprep.subr.mxu0 0.0
    %994 = vmatpush1.xpose.msra.mxu0 0.0
    %995 = vmatprep.subr.mxu0 0.0
    %996 = vmatpush1.xpose.msra.mxu0 0.0
    %997 = vmatprep.subr.mxu0 0.0
    %998 = vmatpush1.xpose.msra.mxu0 0.0
    %999 = vmatprep.subr.mxu0 0.0
    %1000 = vmatpush1.xpose.msra.mxu0 0.0
    %1001 = vmatprep.subr.mxu0 0.0
    %1002 = vmatpush1.xpose.msra.mxu0 0.0
    %1003 = vmatprep.subr.mxu0 0.0
    %1004 = vmatpush1.xpose.msra.mxu0 0.0
    %1005 = vmatprep.subr.mxu0 0.0
    %1006 = vmatpush1.xpose.msra.mxu0 0.0
    %1007 = vmatprep.subr.mxu0 0.0
    %1008 = vmatpush1.xpose.msra.mxu0 0.0
    %1009 = vmatprep.subr.mxu0 0.0
    %1010 = vmatpush1.xpose.msra.mxu0 0.0
    %1011 = vmatprep.subr.mxu0 0.0
    %1012 = vmatpush1.xpose.msra.mxu0 0.0
    %1013 = vmatprep.subr.mxu0 0.0
    %1014 = vmatpush1.xpose.msra.mxu0 0.0
    %1015 = vmatprep.subr.mxu0 0.0
    %1016 = vmatpush1.xpose.msra.mxu0 0.0
    %1017 = vmatprep.subr.mxu0 0.0
    %1018 = vmatpush1.xpose.msra.mxu0 0.0
    %1019 = vmatprep.subr.mxu0 0.0
    %1020 = vmatpush1.xpose.msra.mxu0 0.0
    %1021 = vmatprep.subr.mxu0 0.0
    %1022 = vmatpush1.xpose.msra.mxu0 0.0
    %1023 = vmatprep.subr.mxu0 0.0
    %1024 = vmatpush1.xpose.msra.mxu0 0.0
    %1025 = vmatprep.subr.mxu0 0.0
    %1026 = vmatpush1.xpose.msra.mxu0 0.0
    %1027 = vmatprep.subr.mxu0 0.0
    %1028 = vmatpush1.xpose.msra.mxu0 0.0
    %1029 = vmatprep.subr.mxu0 0.0
    %1030 = vmatpush1.xpose.msra.mxu0 0.0
    %1031 = vmatprep.mubr.f32.mxu0 0.0
    %1032 = vmatmul.mubr.f32.gmra.mrb[0].mxu0 %v958
    %v1033 = vpop.f32.mrb[0].mxu0
    %v1034 = vadd.f32 0.0, %v1033
    %v1035 = vpop.f32.mrb[0].mxu0
    %1036 = vmatprep.mubr.f32.mxu0 0.0
    %1037 = vmatmul.mubr.f32.gmra.mrb[0].mxu0 %v961
    %v1038 = vpop.f32.mrb[0].mxu0
    %v1039 = vadd.f32 0.0, %v1038
    %v1040 = vpop.f32.mrb[0].mxu0
    %1041 = vdwg.mxu0
    %v1042 = vmul.f32 %v1034, 0.35355338
    %v1043 = vmul.f32 %v1039, 0.35355338
    %v1044 = vadd.f32 %v1042, %v274
    %v1045 = vadd.f32 %v1043, %v275
    %v1046 = vsel %vm383, %v1044, -inf
    %1047 = vmax.xlane.f32.xlu0 %v1046
    %v1048 = vpop.xlane.xlu0 %1047
    %v1049 = vsel %vm383, %v1045, -inf
    %1050 = vmax.xlane.f32.xlu0 %v1049
    %v1051 = vpop.xlane.xlu0 %1050
    %v1052 = vsub.f32 %v1044, %v1048
    %v1053 = vsub.f32 %v1045, %v1051
    %v1054 = vmul.f32 %v1052, 1.442695
    %v1055 = vpow.pop %v1054
    %v1056 = vmul.f32 %v1053, 1.442695
    %v1057 = vpow.pop %v1056
    %v1058 = vsel %vm383, %v1055, 0.0
    %1059 = vadd.xlane.f32.xlu0 %v1058
    %v1060 = vpop.xlane.xlu0 %1059
    %v1061 = vsel %vm383, %v1057, 0.0
    %1062 = vadd.xlane.f32.xlu0 %v1061
    %v1063 = vpop.xlane.xlu0 %1062
    %v1064 = vrcp.pop %v1060
    %v1065 = vrcp.pop %v1063
    %v1066 = vmul.f32 %v1060, %v1064
    %v1067 = vmul.f32 %v1063, %v1065
    %v1068 = vsub.f32 2.0, %v1066
    %v1069 = vsub.f32 2.0, %v1067
    %v1070 = vmul.f32 %v1064, %v1068
    %v1071 = vmul.f32 %v1065, %v1069
    %v1072 = vmul.f32 %v1055, %v1070
    %v1073 = vmul.f32 %v1057, %v1071
    %v1074 = vadd.f32 %v852, %v1072
    %v1075 = vadd.f32 %v853, %v1073
    %v1076 = vmul.f32 %v266, %v942
    %v1077 = vmul.f32 %v271, %v942
    %v1079 = vsel %vm383, %v1072, 0
    %v1082 = vsel %vm383, %v1073, 0
    %1084 = vmatprep.subr.mxu0 0.0
    %1085 = vmatpush1.msra.mxu0 %v1076
    %1086 = vmatprep.subr.mxu0 0.0
    %1087 = vmatpush1.msra.mxu0 %v1077
    %1088 = vmatprep.subr.mxu0 0.0
    %1089 = vmatpush1.msra.mxu0 0.0
    %1090 = vmatprep.subr.mxu0 0.0
    %1091 = vmatpush1.msra.mxu0 0.0
    %1092 = vmatprep.subr.mxu0 0.0
    %1093 = vmatpush1.msra.mxu0 0.0
    %1094 = vmatprep.subr.mxu0 0.0
    %1095 = vmatpush1.msra.mxu0 0.0
    %1096 = vmatprep.subr.mxu0 0.0
    %1097 = vmatpush1.msra.mxu0 0.0
    %1098 = vmatprep.subr.mxu0 0.0
    %1099 = vmatpush1.msra.mxu0 0.0
    %1100 = vmatprep.subr.mxu0 0.0
    %1101 = vmatpush1.msra.mxu0 0.0
    %1102 = vmatprep.subr.mxu0 0.0
    %1103 = vmatpush1.msra.mxu0 0.0
    %1104 = vmatprep.subr.mxu0 0.0
    %1105 = vmatpush1.msra.mxu0 0.0
    %1106 = vmatprep.subr.mxu0 0.0
    %1107 = vmatpush1.msra.mxu0 0.0
    %1108 = vmatprep.subr.mxu0 0.0
    %1109 = vmatpush1.msra.mxu0 0.0
    %1110 = vmatprep.subr.mxu0 0.0
    %1111 = vmatpush1.msra.mxu0 0.0
    %1112 = vmatprep.subr.mxu0 0.0
    %1113 = vmatpush1.msra.mxu0 0.0
    %1114 = vmatprep.subr.mxu0 0.0
    %1115 = vmatpush1.msra.mxu0 0.0
    %1116 = vmatprep.subr.mxu0 0.0
    %1117 = vmatpush1.msra.mxu0 0.0
    %1118 = vmatprep.subr.mxu0 0.0
    %1119 = vmatpush1.msra.mxu0 0.0
    %1120 = vmatprep.subr.mxu0 0.0
    %1121 = vmatpush1.msra.mxu0 0.0
    %1122 = vmatprep.subr.mxu0 0.0
    %1123 = vmatpush1.msra.mxu0 0.0
    %1124 = vmatprep.subr.mxu0 0.0
    %1125 = vmatpush1.msra.mxu0 0.0
    %1126 = vmatprep.subr.mxu0 0.0
    %1127 = vmatpush1.msra.mxu0 0.0
    %1128 = vmatprep.subr.mxu0 0.0
    %1129 = vmatpush1.msra.mxu0 0.0
    %1130 = vmatprep.subr.mxu0 0.0
    %1131 = vmatpush1.msra.mxu0 0.0
    %1132 = vmatprep.subr.mxu0 0.0
    %1133 = vmatpush1.msra.mxu0 0.0
    %1134 = vmatprep.subr.mxu0 0.0
    %1135 = vmatpush1.msra.mxu0 0.0
    %1136 = vmatprep.subr.mxu0 0.0
    %1137 = vmatpush1.msra.mxu0 0.0
    %1138 = vmatprep.subr.mxu0 0.0
    %1139 = vmatpush1.msra.mxu0 0.0
    %1140 = vmatprep.subr.mxu0 0.0
    %1141 = vmatpush1.msra.mxu0 0.0
    %1142 = vmatprep.subr.mxu0 0.0
    %1143 = vmatpush1.msra.mxu0 0.0
    %1144 = vmatprep.subr.mxu0 0.0
    %1145 = vmatpush1.msra.mxu0 0.0
    %1146 = vmatprep.subr.mxu0 0.0
    %1147 = vmatpush1.msra.mxu0 0.0
    %1148 = vmatprep.mubr.f32.mxu0 0.0
    %1149 = vmatmul.mubr.f32.gmra.mrb[0].mxu0 %v1079
    %v1150 = vpop.f32.mrb[0].mxu0
    %v1151 = vadd.f32 0.0, %v1150
    %v1152 = vpop.f32.mrb[0].mxu0
    %1153 = vmatprep.mubr.f32.mxu0 0.0
    %1154 = vmatmul.mubr.f32.gmra.mrb[0].mxu0 %v1082
    %v1155 = vpop.f32.mrb[0].mxu0
    %v1156 = vadd.f32 0.0, %v1155
    %v1157 = vpop.f32.mrb[0].mxu0
    %1158 = vdwg.mxu0
    %v1159 = vadd.f32 %v937, %v1151
    %v1160 = vadd.f32 %v938, %v1156
    %v1161 = vlaneseq
    %v1162 = vshrl.u32 %v1161, 7
    %v1163 = vsub.s32 1, %v1162
    %v1164 = vrot.slane %v62, %v1163
    %v1166 = vsel %vm107, %v1159, 0
    %v1169 = vsel %vm107, %v1160, 0
    %1171 = vmatprep.subr.mxu0 0.0
    %1172 = vmatpush1.msra.mxu0 %v69
    %1173 = vmatprep.subr.mxu0 0.0
    %1174 = vmatpush1.msra.mxu0 %v70
    %1175 = vmatprep.subr.mxu0 0.0
    %1176 = vmatpush1.msra.mxu0 %v71
    %1177 = vmatprep.subr.mxu0 0.0
    %1178 = vmatpush1.msra.mxu0 %v72
    %1179 = vmatprep.subr.mxu0 0.0
    %1180 = vmatpush1.msra.mxu0 0.0
    %1181 = vmatprep.subr.mxu0 0.0
    %1182 = vmatpush1.msra.mxu0 0.0
    %1183 = vmatprep.subr.mxu0 0.0
    %1184 = vmatpush1.msra.mxu0 0.0
    %1185 = vmatprep.subr.mxu0 0.0
    %1186 = vmatpush1.msra.mxu0 0.0
    %1187 = vmatprep.subr.mxu0 0.0
    %1188 = vmatpush1.msra.mxu0 0.0
    %1189 = vmatprep.subr.mxu0 0.0
    %1190 = vmatpush1.msra.mxu0 0.0
    %1191 = vmatprep.subr.mxu0 0.0
    %1192 = vmatpush1.msra.mxu0 0.0
    %1193 = vmatprep.subr.mxu0 0.0
    %1194 = vmatpush1.msra.mxu0 0.0
    %1195 = vmatprep.subr.mxu0 0.0
    %1196 = vmatpush1.msra.mxu0 0.0
    %1197 = vmatprep.subr.mxu0 0.0
    %1198 = vmatpush1.msra.mxu0 0.0
    %1199 = vmatprep.subr.mxu0 0.0
    %1200 = vmatpush1.msra.mxu0 0.0
    %1201 = vmatprep.subr.mxu0 0.0
    %1202 = vmatpush1.msra.mxu0 0.0
    %1203 = vmatprep.subr.mxu0 0.0
    %1204 = vmatpush1.msra.mxu0 0.0
    %1205 = vmatprep.subr.mxu0 0.0
    %1206 = vmatpush1.msra.mxu0 0.0
    %1207 = vmatprep.subr.mxu0 0.0
    %1208 = vmatpush1.msra.mxu0 0.0
    %1209 = vmatprep.subr.mxu0 0.0
    %1210 = vmatpush1.msra.mxu0 0.0
    %1211 = vmatprep.subr.mxu0 0.0
    %1212 = vmatpush1.msra.mxu0 0.0
    %1213 = vmatprep.subr.mxu0 0.0
    %1214 = vmatpush1.msra.mxu0 0.0
    %1215 = vmatprep.subr.mxu0 0.0
    %1216 = vmatpush1.msra.mxu0 0.0
    %1217 = vmatprep.subr.mxu0 0.0
    %1218 = vmatpush1.msra.mxu0 0.0
    %1219 = vmatprep.subr.mxu0 0.0
    %1220 = vmatpush1.msra.mxu0 0.0
    %1221 = vmatprep.subr.mxu0 0.0
    %1222 = vmatpush1.msra.mxu0 0.0
    %1223 = vmatprep.subr.mxu0 0.0
    %1224 = vmatpush1.msra.mxu0 0.0
    %1225 = vmatprep.subr.mxu0 0.0
    %1226 = vmatpush1.msra.mxu0 0.0
    %1227 = vmatprep.subr.mxu0 0.0
    %1228 = vmatpush1.msra.mxu0 0.0
    %1229 = vmatprep.subr.mxu0 0.0
    %1230 = vmatpush1.msra.mxu0 0.0
    %1231 = vmatprep.subr.mxu0 0.0
    %1232 = vmatpush1.msra.mxu0 0.0
    %1233 = vmatprep.subr.mxu0 0.0
    %1234 = vmatpush1.msra.mxu0 0.0
    %1235 = vmatprep.mubr.f32.mxu0 0.0
    %1236 = vmatmul.mubr.f32.gmra.mrb[0].mxu0 %v1166
    %v1237 = vpop.f32.mrb[0].mxu0
    %v1238 = vadd.f32 %v1164, %v1237
    %v1239 = vpop.f32.mrb[0].mxu0
    %1240 = vmatprep.mubr.f32.mxu0 0.0
    %1241 = vmatmul.mubr.f32.gmra.mrb[0].mxu0 %v1169
    %v1242 = vpop.f32.mrb[0].mxu0
    %v1243 = vadd.f32 %v1164, %v1242
    %v1244 = vpop.f32.mrb[0].mxu0
    %1245 = vdwg.mxu0
    %v1246 = vadd.f32 %v60, %v1238
    %v1247 = vadd.f32 %v61, %v1243
    %v1248 = vsel %vm107, %v1246, 0.0
    %1249 = vadd.xlane.f32.xlu0 %v1248
    %v1250 = vpop.xlane.xlu0 %1249
    %v1251 = vsel %vm107, %v1247, 0.0
    %1252 = vadd.xlane.f32.xlu0 %v1251
    %v1253 = vpop.xlane.xlu0 %1252
    %v1254 = vrcp.pop 32.0
    %v1255 = vmul.f32 %v1250, %v1254
    %v1256 = vmul.f32 %v1253, %v1254
    %v1257 = vsub.f32 %v1246, %v1255
    %v1258 = vsub.f32 %v1247, %v1256
    %v1259 = vmul.f32 %v1257, %v1257
    %v1260 = vmul.f32 %v1258, %v1258
    %v1261 = vsel %vm107, %v1259, 0.0
    %1262 = vadd.xlane.f32.xlu0 %v1261
    %v1263 = vpop.xlane.xlu0 %1262
    %v1264 = vsel %vm107, %v1260, 0.0
    %1265 = vadd.xlane.f32.xlu0 %v1264
    %v1266 = vpop.xlane.xlu0 %1265
    %v1267 = vmul.f32 %v1263, %v1254
    %v1268 = vmul.f32 %v1266, %v1254
    %v1269 = vadd.f32 %v1267, 1e-05
    %v1270 = vadd.f32 %v1268, 1e-05
    %v1271 = vrsqrt.pop %v1269
    %v1272 = vrsqrt.pop %v1270
    %v1273 = vmul.f32 %v1257, %v1271
    %v1274 = vmul.f32 %v1258, %v1272
    %v1275 = vlaneseq
    %v1276 = vshrl.u32 %v1275, 7
    %v1277 = vsub.s32 7, %v1276
    %v1278 = vrot.slane %v62, %v1277
    %v1279 = vmul.f32 %v1273, %v1278
    %v1280 = vmul.f32 %v1274, %v1278
    %v1281 = vlaneseq
    %v1282 = vshrl.u32 %v1281, 7
    %v1283 = vsub.s32 0, %v1282
    %v1284 = vrot.slane %v63, %v1283
    %v1285 = vadd.f32 %v1279, %v1284
    %v1286 = vadd.f32 %v1280, %v1284
    %v1287 = vmul.f32 %v1074, 0.25
    %v1288 = vmul.f32 %v1075, 0.25
    %vm1289 = vcmask 64512
    %1290 = vst.msk [vmem:[#allocation4] sm:$0xff] %vm1289, %v1287
    %1292 = vrot.lane.b32.xlu0 %v1288, 120
    %v1293 = vpop.permute.xlu0 %1292
    %s1295 = scalar_lea.vmem [#allocation4], 8
    %1296 = vst.msk [vmem:[%s1295] sm:$0xff] %vm1289, %v1293
    %v1297 = vld [vmem:[%s5] sm:$0xff]
    %v1298 = vld [vmem:[%s2] sm:$0xff]
    %v1299 = vld [vmem:[%s2 + $0x8] sm:$0xff]
    %v1300 = vadd.f32 %v1285, %v1298
    %v1301 = vadd.f32 %v1286, %v1299
    %v1303 = vsel %vm383, %v1297, 0
    %1305 = vmatprep.subr.mxu0 0.0
    %1306 = vmatpush1.msra.mxu0 %v1300
    %1307 = vmatprep.subr.mxu0 0.0
    %1308 = vmatpush1.msra.mxu0 %v1301
    %1309 = vmatprep.subr.mxu0 0.0
    %1310 = vmatpush1.msra.mxu0 0.0
    %1311 = vmatprep.subr.mxu0 0.0
    %1312 = vmatpush1.msra.mxu0 0.0
    %1313 = vmatprep.subr.mxu0 0.0
    %1314 = vmatpush1.msra.mxu0 0.0
    %1315 = vmatprep.subr.mxu0 0.0
    %1316 = vmatpush1.msra.mxu0 0.0
    %1317 = vmatprep.subr.mxu0 0.0
    %1318 = vmatpush1.msra.mxu0 0.0
    %1319 = vmatprep.subr.mxu0 0.0
    %1320 = vmatpush1.msra.mxu0 0.0
    %1321 = vmatprep.subr.mxu0 0.0
    %1322 = vmatpush1.msra.mxu0 0.0
    %1323 = vmatprep.subr.mxu0 0.0
    %1324 = vmatpush1.msra.mxu0 0.0
    %1325 = vmatprep.subr.mxu0 0.0
    %1326 = vmatpush1.msra.mxu0 0.0
    %1327 = vmatprep.subr.mxu0 0.0
    %1328 = vmatpush1.msra.mxu0 0.0
    %1329 = vmatprep.subr.mxu0 0.0
    %1330 = vmatpush1.msra.mxu0 0.0
    %1331 = vmatprep.subr.mxu0 0.0
    %1332 = vmatpush1.msra.mxu0 0.0
    %1333 = vmatprep.subr.mxu0 0.0
    %1334 = vmatpush1.msra.mxu0 0.0
    %1335 = vmatprep.subr.mxu0 0.0
    %1336 = vmatpush1.msra.mxu0 0.0
    %1337 = vmatprep.subr.mxu0 0.0
    %1338 = vmatpush1.msra.mxu0 0.0
    %1339 = vmatprep.subr.mxu0 0.0
    %1340 = vmatpush1.msra.mxu0 0.0
    %1341 = vmatprep.subr.mxu0 0.0
    %1342 = vmatpush1.msra.mxu0 0.0
    %1343 = vmatprep.subr.mxu0 0.0
    %1344 = vmatpush1.msra.mxu0 0.0
    %1345 = vmatprep.subr.mxu0 0.0
    %1346 = vmatpush1.msra.mxu0 0.0
    %1347 = vmatprep.subr.mxu0 0.0
    %1348 = vmatpush1.msra.mxu0 0.0
    %1349 = vmatprep.subr.mxu0 0.0
    %1350 = vmatpush1.msra.mxu0 0.0
    %1351 = vmatprep.subr.mxu0 0.0
    %1352 = vmatpush1.msra.mxu0 0.0
    %1353 = vmatprep.subr.mxu0 0.0
    %1354 = vmatpush1.msra.mxu0 0.0
    %1355 = vmatprep.subr.mxu0 0.0
    %1356 = vmatpush1.msra.mxu0 0.0
    %1357 = vmatprep.subr.mxu0 0.0
    %1358 = vmatpush1.msra.mxu0 0.0
    %1359 = vmatprep.subr.mxu0 0.0
    %1360 = vmatpush1.msra.mxu0 0.0
    %1361 = vmatprep.subr.mxu0 0.0
    %1362 = vmatpush1.msra.mxu0 0.0
    %1363 = vmatprep.subr.mxu0 0.0
    %1364 = vmatpush1.msra.mxu0 0.0
    %1365 = vmatprep.subr.mxu0 0.0
    %1366 = vmatpush1.msra.mxu0 0.0
    %1367 = vmatprep.subr.mxu0 0.0
    %1368 = vmatpush1.msra.mxu0 0.0
    %1369 = vmatprep.mubr.f32.mxu0 0.0
    %1370 = vmatmul.mubr.f32.gmra.mrb[0].mxu0 %v1303
    %v1371 = vpop.f32.mrb[0].mxu0
    %v1372 = vadd.f32 0.0, %v1371
    %v1373 = vpop.f32.mrb[0].mxu0
    %1374 = vdwg.mxu0
    %v1375 = vlaneseq
    %v1376 = vshrl.u32 %v1375, 7
    %v1377 = vsub.s32 2, %v1376
    %v1378 = vrot.slane %v62, %v1377
    %v1380 = vsel %vm107, %v1372, 0
    %1382 = vmatprep.subr.mxu0 0.0
    %1383 = vmatpush1.msra.mxu0 %v74
    %1384 = vmatprep.subr.mxu0 0.0
    %1385 = vmatpush1.msra.mxu0 %v75
    %1386 = vmatprep.subr.mxu0 0.0
    %1387 = vmatpush1.msra.mxu0 %v76
    %1388 = vmatprep.subr.mxu0 0.0
    %1389 = vmatpush1.msra.mxu0 %v77
    %1390 = vmatprep.subr.mxu0 0.0
    %1391 = vmatpush1.msra.mxu0 0.0
    %1392 = vmatprep.subr.mxu0 0.0
    %1393 = vmatpush1.msra.mxu0 0.0
    %1394 = vmatprep.subr.mxu0 0.0
    %1395 = vmatpush1.msra.mxu0 0.0
    %1396 = vmatprep.subr.mxu0 0.0
    %1397 = vmatpush1.msra.mxu0 0.0
    %1398 = vmatprep.subr.mxu0 0.0
    %1399 = vmatpush1.msra.mxu0 0.0
    %1400 = vmatprep.subr.mxu0 0.0
    %1401 = vmatpush1.msra.mxu0 0.0
    %1402 = vmatprep.subr.mxu0 0.0
    %1403 = vmatpush1.msra.mxu0 0.0
    %1404 = vmatprep.subr.mxu0 0.0
    %1405 = vmatpush1.msra.mxu0 0.0
    %1406 = vmatprep.subr.mxu0 0.0
    %1407 = vmatpush1.msra.mxu0 0.0
    %1408 = vmatprep.subr.mxu0 0.0
    %1409 = vmatpush1.msra.mxu0 0.0
    %1410 = vmatprep.subr.mxu0 0.0
    %1411 = vmatpush1.msra.mxu0 0.0
    %1412 = vmatprep.subr.mxu0 0.0
    %1413 = vmatpush1.msra.mxu0 0.0
    %1414 = vmatprep.subr.mxu0 0.0
    %1415 = vmatpush1.msra.mxu0 0.0
    %1416 = vmatprep.subr.mxu0 0.0
    %1417 = vmatpush1.msra.mxu0 0.0
    %1418 = vmatprep.subr.mxu0 0.0
    %1419 = vmatpush1.msra.mxu0 0.0
    %1420 = vmatprep.subr.mxu0 0.0
    %1421 = vmatpush1.msra.mxu0 0.0
    %1422 = vmatprep.subr.mxu0 0.0
    %1423 = vmatpush1.msra.mxu0 0.0
    %1424 = vmatprep.subr.mxu0 0.0
    %1425 = vmatpush1.msra.mxu0 0.0
    %1426 = vmatprep.subr.mxu0 0.0
    %1427 = vmatpush1.msra.mxu0 0.0
    %1428 = vmatprep.subr.mxu0 0.0
    %1429 = vmatpush1.msra.mxu0 0.0
    %1430 = vmatprep.subr.mxu0 0.0
    %1431 = vmatpush1.msra.mxu0 0.0
    %1432 = vmatprep.subr.mxu0 0.0
    %1433 = vmatpush1.msra.mxu0 0.0
    %1434 = vmatprep.subr.mxu0 0.0
    %1435 = vmatpush1.msra.mxu0 0.0
    %1436 = vmatprep.subr.mxu0 0.0
    %1437 = vmatpush1.msra.mxu0 0.0
    %1438 = vmatprep.subr.mxu0 0.0
    %1439 = vmatpush1.msra.mxu0 0.0
    %1440 = vmatprep.subr.mxu0 0.0
    %1441 = vmatpush1.msra.mxu0 0.0
    %1442 = vmatprep.subr.mxu0 0.0
    %1443 = vmatpush1.msra.mxu0 0.0
    %1444 = vmatprep.subr.mxu0 0.0
    %1445 = vmatpush1.msra.mxu0 0.0
    %1446 = vmatprep.mubr.f32.mxu0 0.0
    %1447 = vmatmul.mubr.f32.gmra.mrb[0].mxu0 %v1380
    %v1448 = vpop.f32.mrb[0].mxu0
    %v1449 = vadd.f32 %v1378, %v1448
    %v1450 = vpop.f32.mrb[0].mxu0
    %1451 = vdwg.mxu0
    %v1452 = vld [vmem:[%s3] sm:$0xff]
    %v1453 = vld [vmem:[%s3 + $0x8] sm:$0xff]
    %v1454 = vld [vmem:[%s3 + $0x10] sm:$0xff]
    %v1455 = vld [vmem:[%s3 + $0x18] sm:$0xff]
    %v1456 = vld [vmem:[%s3 + $0x20] sm:$0xff]
    %v1457 = vld [vmem:[%s3 + $0x28] sm:$0xff]
    %v1458 = vld [vmem:[%s3 + $0x30] sm:$0xff]
    %v1459 = vld [vmem:[%s3 + $0x38] sm:$0xff]
    %v1460 = vld [vmem:[%s3 + $0x40] sm:$0xff]
    %v1461 = vld [vmem:[%s3 + $0x48] sm:$0xff]
    %v1462 = vld [vmem:[%s3 + $0x50] sm:$0xff]
    %v1463 = vld [vmem:[%s3 + $0x58] sm:$0xff]
    %v1464 = vld [vmem:[%s3 + $0x60] sm:$0xff]
    %v1465 = vld [vmem:[%s3 + $0x68] sm:$0xff]
    %v1466 = vld [vmem:[%s3 + $0x70] sm:$0xff]
    %v1467 = vld [vmem:[%s3 + $0x78] sm:$0xff]
    %v1468 = vlaneseq
    %v1469 = vshrl.u32 %v1468, 7
    %v1470 = vsub.s32 3, %v1469
    %v1471 = vrot.slane %v62, %v1470
    %v1473 = vsel %vm107, %v1452, 0
    %v1476 = vsel %vm107, %v1453, 0
    %v1479 = vsel %vm107, %v1454, 0
    %v1482 = vsel %vm107, %v1455, 0
    %v1485 = vsel %vm107, %v1456, 0
    %v1488 = vsel %vm107, %v1457, 0
    %v1491 = vsel %vm107, %v1458, 0
    %v1494 = vsel %vm107, %v1459, 0
    %v1497 = vsel %vm107, %v1460, 0
    %v1500 = vsel %vm107, %v1461, 0
    %v1503 = vsel %vm107, %v1462, 0
    %v1506 = vsel %vm107, %v1463, 0
    %v1509 = vsel %vm107, %v1464, 0
    %v1512 = vsel %vm107, %v1465, 0
    %v1515 = vsel %vm107, %v1466, 0
    %v1518 = vsel %vm107, %v1467, 0
    %1520 = vmatprep.subr.mxu0 0.0
    %1521 = vmatpush1.msra.mxu0 %v79
    %1522 = vmatprep.subr.mxu0 0.0
    %1523 = vmatpush1.msra.mxu0 %v80
    %1524 = vmatprep.subr.mxu0 0.0
    %1525 = vmatpush1.msra.mxu0 %v81
    %1526 = vmatprep.subr.mxu0 0.0
    %1527 = vmatpush1.msra.mxu0 %v82
    %1528 = vmatprep.subr.mxu0 0.0
    %1529 = vmatpush1.msra.mxu0 0.0
    %1530 = vmatprep.subr.mxu0 0.0
    %1531 = vmatpush1.msra.mxu0 0.0
    %1532 = vmatprep.subr.mxu0 0.0
    %1533 = vmatpush1.msra.mxu0 0.0
    %1534 = vmatprep.subr.mxu0 0.0
    %1535 = vmatpush1.msra.mxu0 0.0
    %1536 = vmatprep.subr.mxu0 0.0
    %1537 = vmatpush1.msra.mxu0 0.0
    %1538 = vmatprep.subr.mxu0 0.0
    %1539 = vmatpush1.msra.mxu0 0.0
    %1540 = vmatprep.subr.mxu0 0.0
    %1541 = vmatpush1.msra.mxu0 0.0
    %1542 = vmatprep.subr.mxu0 0.0
    %1543 = vmatpush1.msra.mxu0 0.0
    %1544 = vmatprep.subr.mxu0 0.0
    %1545 = vmatpush1.msra.mxu0 0.0
    %1546 = vmatprep.subr.mxu0 0.0
    %1547 = vmatpush1.msra.mxu0 0.0
    %1548 = vmatprep.subr.mxu0 0.0
    %1549 = vmatpush1.msra.mxu0 0.0
    %1550 = vmatprep.subr.mxu0 0.0
    %1551 = vmatpush1.msra.mxu0 0.0
    %1552 = vmatprep.subr.mxu0 0.0
    %1553 = vmatpush1.msra.mxu0 0.0
    %1554 = vmatprep.subr.mxu0 0.0
    %1555 = vmatpush1.msra.mxu0 0.0
    %1556 = vmatprep.subr.mxu0 0.0
    %1557 = vmatpush1.msra.mxu0 0.0
    %1558 = vmatprep.subr.mxu0 0.0
    %1559 = vmatpush1.msra.mxu0 0.0
    %1560 = vmatprep.subr.mxu0 0.0
    %1561 = vmatpush1.msra.mxu0 0.0
    %1562 = vmatprep.subr.mxu0 0.0
    %1563 = vmatpush1.msra.mxu0 0.0
    %1564 = vmatprep.subr.mxu0 0.0
    %1565 = vmatpush1.msra.mxu0 0.0
    %1566 = vmatprep.subr.mxu0 0.0
    %1567 = vmatpush1.msra.mxu0 0.0
    %1568 = vmatprep.subr.mxu0 0.0
    %1569 = vmatpush1.msra.mxu0 0.0
    %1570 = vmatprep.subr.mxu0 0.0
    %1571 = vmatpush1.msra.mxu0 0.0
    %1572 = vmatprep.subr.mxu0 0.0
    %1573 = vmatpush1.msra.mxu0 0.0
    %1574 = vmatprep.subr.mxu0 0.0
    %1575 = vmatpush1.msra.mxu0 0.0
    %1576 = vmatprep.subr.mxu0 0.0
    %1577 = vmatpush1.msra.mxu0 0.0
    %1578 = vmatprep.subr.mxu0 0.0
    %1579 = vmatpush1.msra.mxu0 0.0
    %1580 = vmatprep.subr.mxu0 0.0
    %1581 = vmatpush1.msra.mxu0 0.0
    %1582 = vmatprep.subr.mxu0 0.0
    %1583 = vmatpush1.msra.mxu0 0.0
    %1584 = vmatprep.mubr.f32.mxu0 0.0
    %1585 = vmatmul.mubr.f32.gmra.mrb[0].mxu0 %v1473
    %v1586 = vpop.f32.mrb[0].mxu0
    %v1587 = vadd.f32 %v1471, %v1586
    %v1588 = vpop.f32.mrb[0].mxu0
    %1589 = vmatprep.mubr.f32.mxu0 0.0
    %1590 = vmatmul.mubr.f32.gmra.mrb[0].mxu0 %v1476
    %v1591 = vpop.f32.mrb[0].mxu0
    %v1592 = vadd.f32 %v1471, %v1591
    %v1593 = vpop.f32.mrb[0].mxu0
    %1594 = vmatprep.mubr.f32.mxu0 0.0
    %1595 = vmatmul.mubr.f32.gmra.mrb[0].mxu0 %v1479
    %v1596 = vpop.f32.mrb[0].mxu0
    %v1597 = vadd.f32 %v1471, %v1596
    %v1598 = vpop.f32.mrb[0].mxu0
    %1599 = vmatprep.mubr.f32.mxu0 0.0
    %1600 = vmatmul.mubr.f32.gmra.mrb[0].mxu0 %v1482
    %v1601 = vpop.f32.mrb[0].mxu0
    %v1602 = vadd.f32 %v1471, %v1601
    %v1603 = vpop.f32.mrb[0].mxu0
    %1604 = vmatprep.mubr.f32.mxu0 0.0
    %1605 = vmatmul.mubr.f32.gmra.mrb[0].mxu0 %v1485
    %v1606 = vpop.f32.mrb[0].mxu0
    %v1607 = vadd.f32 %v1471, %v1606
    %v1608 = vpop.f32.mrb[0].mxu0
    %1609 = vmatprep.mubr.f32.mxu0 0.0
    %1610 = vmatmul.mubr.f32.gmra.mrb[0].mxu0 %v1488
    %v1611 = vpop.f32.mrb[0].mxu0
    %v1612 = vadd.f32 %v1471, %v1611
    %v1613 = vpop.f32.mrb[0].mxu0
    %1614 = vmatprep.mubr.f32.mxu0 0.0
    %1615 = vmatmul.mubr.f32.gmra.mrb[0].mxu0 %v1491
    %v1616 = vpop.f32.mrb[0].mxu0
    %v1617 = vadd.f32 %v1471, %v1616
    %v1618 = vpop.f32.mrb[0].mxu0
    %1619 = vmatprep.mubr.f32.mxu0 0.0
    %1620 = vmatmul.mubr.f32.gmra.mrb[0].mxu0 %v1494
    %v1621 = vpop.f32.mrb[0].mxu0
    %v1622 = vadd.f32 %v1471, %v1621
    %v1623 = vpop.f32.mrb[0].mxu0
    %1624 = vmatprep.mubr.f32.mxu0 0.0
    %1625 = vmatmul.mubr.f32.gmra.mrb[0].mxu0 %v1497
    %v1626 = vpop.f32.mrb[0].mxu0
    %v1627 = vadd.f32 %v1471, %v1626
    %v1628 = vpop.f32.mrb[0].mxu0
    %1629 = vmatprep.mubr.f32.mxu0 0.0
    %1630 = vmatmul.mubr.f32.gmra.mrb[0].mxu0 %v1500
    %v1631 = vpop.f32.mrb[0].mxu0
    %v1632 = vadd.f32 %v1471, %v1631
    %v1633 = vpop.f32.mrb[0].mxu0
    %1634 = vmatprep.mubr.f32.mxu0 0.0
    %1635 = vmatmul.mubr.f32.gmra.mrb[0].mxu0 %v1503
    %v1636 = vpop.f32.mrb[0].mxu0
    %v1637 = vadd.f32 %v1471, %v1636
    %v1638 = vpop.f32.mrb[0].mxu0
    %1639 = vmatprep.mubr.f32.mxu0 0.0
    %1640 = vmatmul.mubr.f32.gmra.mrb[0].mxu0 %v1506
    %v1641 = vpop.f32.mrb[0].mxu0
    %v1642 = vadd.f32 %v1471, %v1641
    %v1643 = vpop.f32.mrb[0].mxu0
    %1644 = vmatprep.mubr.f32.mxu0 0.0
    %1645 = vmatmul.mubr.f32.gmra.mrb[0].mxu0 %v1509
    %v1646 = vpop.f32.mrb[0].mxu0
    %v1647 = vadd.f32 %v1471, %v1646
    %v1648 = vpop.f32.mrb[0].mxu0
    %1649 = vmatprep.mubr.f32.mxu0 0.0
    %1650 = vmatmul.mubr.f32.gmra.mrb[0].mxu0 %v1512
    %v1651 = vpop.f32.mrb[0].mxu0
    %v1652 = vadd.f32 %v1471, %v1651
    %v1653 = vpop.f32.mrb[0].mxu0
    %1654 = vmatprep.mubr.f32.mxu0 0.0
    %1655 = vmatmul.mubr.f32.gmra.mrb[0].mxu0 %v1515
    %v1656 = vpop.f32.mrb[0].mxu0
    %v1657 = vadd.f32 %v1471, %v1656
    %v1658 = vpop.f32.mrb[0].mxu0
    %1659 = vmatprep.mubr.f32.mxu0 0.0
    %1660 = vmatmul.mubr.f32.gmra.mrb[0].mxu0 %v1518
    %v1661 = vpop.f32.mrb[0].mxu0
    %v1662 = vadd.f32 %v1471, %v1661
    %v1663 = vpop.f32.mrb[0].mxu0
    %1664 = vdwg.mxu0
    %v1665 = vld [vmem:[%s4] sm:$0xff]
    %v1666 = vld [vmem:[%s4 + $0x8] sm:$0xff]
    %v1667 = vld [vmem:[%s4 + $0x10] sm:$0xff]
    %v1668 = vld [vmem:[%s4 + $0x18] sm:$0xff]
    %v1669 = vld [vmem:[%s4 + $0x20] sm:$0xff]
    %v1670 = vld [vmem:[%s4 + $0x28] sm:$0xff]
    %v1671 = vld [vmem:[%s4 + $0x30] sm:$0xff]
    %v1672 = vld [vmem:[%s4 + $0x38] sm:$0xff]
    %v1673 = vld [vmem:[%s4 + $0x40] sm:$0xff]
    %v1674 = vld [vmem:[%s4 + $0x48] sm:$0xff]
    %v1675 = vld [vmem:[%s4 + $0x50] sm:$0xff]
    %v1676 = vld [vmem:[%s4 + $0x58] sm:$0xff]
    %v1677 = vld [vmem:[%s4 + $0x60] sm:$0xff]
    %v1678 = vld [vmem:[%s4 + $0x68] sm:$0xff]
    %v1679 = vld [vmem:[%s4 + $0x70] sm:$0xff]
    %v1680 = vld [vmem:[%s4 + $0x78] sm:$0xff]
    %v1681 = vlaneseq
    %v1682 = vshrl.u32 %v1681, 7
    %v1683 = vsub.s32 4, %v1682
    %v1684 = vrot.slane %v62, %v1683
    %v1686 = vsel %vm107, %v1665, 0
    %v1689 = vsel %vm107, %v1666, 0
    %v1692 = vsel %vm107, %v1667, 0
    %v1695 = vsel %vm107, %v1668, 0
    %v1698 = vsel %vm107, %v1669, 0
    %v1701 = vsel %vm107, %v1670, 0
    %v1704 = vsel %vm107, %v1671, 0
    %v1707 = vsel %vm107, %v1672, 0
    %v1710 = vsel %vm107, %v1673, 0
    %v1713 = vsel %vm107, %v1674, 0
    %v1716 = vsel %vm107, %v1675, 0
    %v1719 = vsel %vm107, %v1676, 0
    %v1722 = vsel %vm107, %v1677, 0
    %v1725 = vsel %vm107, %v1678, 0
    %v1728 = vsel %vm107, %v1679, 0
    %v1731 = vsel %vm107, %v1680, 0
    %1733 = vmatprep.subr.mxu0 0.0
    %1734 = vmatpush1.msra.mxu0 %v84
    %1735 = vmatprep.subr.mxu0 0.0
    %1736 = vmatpush1.msra.mxu0 %v85
    %1737 = vmatprep.subr.mxu0 0.0
    %1738 = vmatpush1.msra.mxu0 %v86
    %1739 = vmatprep.subr.mxu0 0.0
    %1740 = vmatpush1.msra.mxu0 %v87
    %1741 = vmatprep.subr.mxu0 0.0
    %1742 = vmatpush1.msra.mxu0 0.0
    %1743 = vmatprep.subr.mxu0 0.0
    %1744 = vmatpush1.msra.mxu0 0.0
    %1745 = vmatprep.subr.mxu0 0.0
    %1746 = vmatpush1.msra.mxu0 0.0
    %1747 = vmatprep.subr.mxu0 0.0
    %1748 = vmatpush1.msra.mxu0 0.0
    %1749 = vmatprep.subr.mxu0 0.0
    %1750 = vmatpush1.msra.mxu0 0.0
    %1751 = vmatprep.subr.mxu0 0.0
    %1752 = vmatpush1.msra.mxu0 0.0
    %1753 = vmatprep.subr.mxu0 0.0
    %1754 = vmatpush1.msra.mxu0 0.0
    %1755 = vmatprep.subr.mxu0 0.0
    %1756 = vmatpush1.msra.mxu0 0.0
    %1757 = vmatprep.subr.mxu0 0.0
    %1758 = vmatpush1.msra.mxu0 0.0
    %1759 = vmatprep.subr.mxu0 0.0
    %1760 = vmatpush1.msra.mxu0 0.0
    %1761 = vmatprep.subr.mxu0 0.0
    %1762 = vmatpush1.msra.mxu0 0.0
    %1763 = vmatprep.subr.mxu0 0.0
    %1764 = vmatpush1.msra.mxu0 0.0
    %1765 = vmatprep.subr.mxu0 0.0
    %1766 = vmatpush1.msra.mxu0 0.0
    %1767 = vmatprep.subr.mxu0 0.0
    %1768 = vmatpush1.msra.mxu0 0.0
    %1769 = vmatprep.subr.mxu0 0.0
    %1770 = vmatpush1.msra.mxu0 0.0
    %1771 = vmatprep.subr.mxu0 0.0
    %1772 = vmatpush1.msra.mxu0 0.0
    %1773 = vmatprep.subr.mxu0 0.0
    %1774 = vmatpush1.msra.mxu0 0.0
    %1775 = vmatprep.subr.mxu0 0.0
    %1776 = vmatpush1.msra.mxu0 0.0
    %1777 = vmatprep.subr.mxu0 0.0
    %1778 = vmatpush1.msra.mxu0 0.0
    %1779 = vmatprep.subr.mxu0 0.0
    %1780 = vmatpush1.msra.mxu0 0.0
    %1781 = vmatprep.subr.mxu0 0.0
    %1782 = vmatpush1.msra.mxu0 0.0
    %1783 = vmatprep.subr.mxu0 0.0
    %1784 = vmatpush1.msra.mxu0 0.0
    %1785 = vmatprep.subr.mxu0 0.0
    %1786 = vmatpush1.msra.mxu0 0.0
    %1787 = vmatprep.subr.mxu0 0.0
    %1788 = vmatpush1.msra.mxu0 0.0
    %1789 = vmatprep.subr.mxu0 0.0
    %1790 = vmatpush1.msra.mxu0 0.0
    %1791 = vmatprep.subr.mxu0 0.0
    %1792 = vmatpush1.msra.mxu0 0.0
    %1793 = vmatprep.subr.mxu0 0.0
    %1794 = vmatpush1.msra.mxu0 0.0
    %1795 = vmatprep.subr.mxu0 0.0
    %1796 = vmatpush1.msra.mxu0 0.0
    %1797 = vmatprep.mubr.f32.mxu0 0.0
    %1798 = vmatmul.mubr.f32.gmra.mrb[0].mxu0 %v1686
    %v1799 = vpop.f32.mrb[0].mxu0
    %v1800 = vadd.f32 %v1684, %v1799
    %v1801 = vpop.f32.mrb[0].mxu0
    %1802 = vmatprep.mubr.f32.mxu0 0.0
    %1803 = vmatmul.mubr.f32.gmra.mrb[0].mxu0 %v1689
    %v1804 = vpop.f32.mrb[0].mxu0
    %v1805 = vadd.f32 %v1684, %v1804
    %v1806 = vpop.f32.mrb[0].mxu0
    %1807 = vmatprep.mubr.f32.mxu0 0.0
    %1808 = vmatmul.mubr.f32.gmra.mrb[0].mxu0 %v1692
    %v1809 = vpop.f32.mrb[0].mxu0
    %v1810 = vadd.f32 %v1684, %v1809
    %v1811 = vpop.f32.mrb[0].mxu0
    %1812 = vmatprep.mubr.f32.mxu0 0.0
    %1813 = vmatmul.mubr.f32.gmra.mrb[0].mxu0 %v1695
    %v1814 = vpop.f32.mrb[0].mxu0
    %v1815 = vadd.f32 %v1684, %v1814
    %v1816 = vpop.f32.mrb[0].mxu0
    %1817 = vmatprep.mubr.f32.mxu0 0.0
    %1818 = vmatmul.mubr.f32.gmra.mrb[0].mxu0 %v1698
    %v1819 = vpop.f32.mrb[0].mxu0
    %v1820 = vadd.f32 %v1684, %v1819
    %v1821 = vpop.f32.mrb[0].mxu0
    %1822 = vmatprep.mubr.f32.mxu0 0.0
    %1823 = vmatmul.mubr.f32.gmra.mrb[0].mxu0 %v1701
    %v1824 = vpop.f32.mrb[0].mxu0
    %v1825 = vadd.f32 %v1684, %v1824
    %v1826 = vpop.f32.mrb[0].mxu0
    %1827 = vmatprep.mubr.f32.mxu0 0.0
    %1828 = vmatmul.mubr.f32.gmra.mrb[0].mxu0 %v1704
    %v1829 = vpop.f32.mrb[0].mxu0
    %v1830 = vadd.f32 %v1684, %v1829
    %v1831 = vpop.f32.mrb[0].mxu0
    %1832 = vmatprep.mubr.f32.mxu0 0.0
    %1833 = vmatmul.mubr.f32.gmra.mrb[0].mxu0 %v1707
    %v1834 = vpop.f32.mrb[0].mxu0
    %v1835 = vadd.f32 %v1684, %v1834
    %v1836 = vpop.f32.mrb[0].mxu0
    %1837 = vmatprep.mubr.f32.mxu0 0.0
    %1838 = vmatmul.mubr.f32.gmra.mrb[0].mxu0 %v1710
    %v1839 = vpop.f32.mrb[0].mxu0
    %v1840 = vadd.f32 %v1684, %v1839
    %v1841 = vpop.f32.mrb[0].mxu0
    %1842 = vmatprep.mubr.f32.mxu0 0.0
    %1843 = vmatmul.mubr.f32.gmra.mrb[0].mxu0 %v1713
    %v1844 = vpop.f32.mrb[0].mxu0
    %v1845 = vadd.f32 %v1684, %v1844
    %v1846 = vpop.f32.mrb[0].mxu0
    %1847 = vmatprep.mubr.f32.mxu0 0.0
    %1848 = vmatmul.mubr.f32.gmra.mrb[0].mxu0 %v1716
    %v1849 = vpop.f32.mrb[0].mxu0
    %v1850 = vadd.f32 %v1684, %v1849
    %v1851 = vpop.f32.mrb[0].mxu0
    %1852 = vmatprep.mubr.f32.mxu0 0.0
    %1853 = vmatmul.mubr.f32.gmra.mrb[0].mxu0 %v1719
    %v1854 = vpop.f32.mrb[0].mxu0
    %v1855 = vadd.f32 %v1684, %v1854
    %v1856 = vpop.f32.mrb[0].mxu0
    %1857 = vmatprep.mubr.f32.mxu0 0.0
    %1858 = vmatmul.mubr.f32.gmra.mrb[0].mxu0 %v1722
    %v1859 = vpop.f32.mrb[0].mxu0
    %v1860 = vadd.f32 %v1684, %v1859
    %v1861 = vpop.f32.mrb[0].mxu0
    %1862 = vmatprep.mubr.f32.mxu0 0.0
    %1863 = vmatmul.mubr.f32.gmra.mrb[0].mxu0 %v1725
    %v1864 = vpop.f32.mrb[0].mxu0
    %v1865 = vadd.f32 %v1684, %v1864
    %v1866 = vpop.f32.mrb[0].mxu0
    %1867 = vmatprep.mubr.f32.mxu0 0.0
    %1868 = vmatmul.mubr.f32.gmra.mrb[0].mxu0 %v1728
    %v1869 = vpop.f32.mrb[0].mxu0
    %v1870 = vadd.f32 %v1684, %v1869
    %v1871 = vpop.f32.mrb[0].mxu0
    %1872 = vmatprep.mubr.f32.mxu0 0.0
    %1873 = vmatmul.mubr.f32.gmra.mrb[0].mxu0 %v1731
    %v1874 = vpop.f32.mrb[0].mxu0
    %v1875 = vadd.f32 %v1684, %v1874
    %v1876 = vpop.f32.mrb[0].mxu0
    %1877 = vdwg.mxu0
    %v1878 = vld [vmem:[%s8] sm:$0xff]
    %v1879 = vmul.f32 %v1449, %v279
    %v1880 = vmul.f32 %v1587, %v279
    %v1881 = vmul.f32 %v1592, %v279
    %v1882 = vmul.f32 %v1597, %v279
    %v1883 = vmul.f32 %v1602, %v279
    %v1884 = vmul.f32 %v1607, %v279
    %v1885 = vmul.f32 %v1612, %v279
    %v1886 = vmul.f32 %v1617, %v279
    %v1887 = vmul.f32 %v1622, %v279
    %v1888 = vmul.f32 %v1627, %v279
    %v1889 = vmul.f32 %v1632, %v279
    %v1890 = vmul.f32 %v1637, %v279
    %v1891 = vmul.f32 %v1642, %v279
    %v1892 = vmul.f32 %v1647, %v279
    %v1893 = vmul.f32 %v1652, %v279
    %v1894 = vmul.f32 %v1657, %v279
    %v1895 = vmul.f32 %v1662, %v279
    %v1897 = vsel %vm107, %v1879, 0
    %v1900 = vsel %vm107, %v1880, 0
    %v1903 = vsel %vm107, %v1881, 0
    %v1906 = vsel %vm107, %v1882, 0
    %v1909 = vsel %vm107, %v1883, 0
    %v1912 = vsel %vm107, %v1884, 0
    %v1915 = vsel %vm107, %v1885, 0
    %v1918 = vsel %vm107, %v1886, 0
    %v1921 = vsel %vm107, %v1887, 0
    %v1924 = vsel %vm107, %v1888, 0
    %v1927 = vsel %vm107, %v1889, 0
    %v1930 = vsel %vm107, %v1890, 0
    %v1933 = vsel %vm107, %v1891, 0
    %v1936 = vsel %vm107, %v1892, 0
    %v1939 = vsel %vm107, %v1893, 0
    %v1942 = vsel %vm107, %v1894, 0
    %v1945 = vsel %vm107, %v1895, 0
    %1947 = vmatprep.subr.mxu0 0.0
    %1948 = vmatpush1.xpose.msra.mxu0 %v1900
    %1949 = vmatprep.subr.mxu0 0.0
    %1950 = vmatpush1.xpose.msra.mxu0 %v1903
    %1951 = vmatprep.subr.mxu0 0.0
    %1952 = vmatpush1.xpose.msra.mxu0 %v1906
    %1953 = vmatprep.subr.mxu0 0.0
    %1954 = vmatpush1.xpose.msra.mxu0 %v1909
    %1955 = vmatprep.subr.mxu0 0.0
    %1956 = vmatpush1.xpose.msra.mxu0 %v1912
    %1957 = vmatprep.subr.mxu0 0.0
    %1958 = vmatpush1.xpose.msra.mxu0 %v1915
    %1959 = vmatprep.subr.mxu0 0.0
    %1960 = vmatpush1.xpose.msra.mxu0 %v1918
    %1961 = vmatprep.subr.mxu0 0.0
    %1962 = vmatpush1.xpose.msra.mxu0 %v1921
    %1963 = vmatprep.subr.mxu0 0.0
    %1964 = vmatpush1.xpose.msra.mxu0 %v1924
    %1965 = vmatprep.subr.mxu0 0.0
    %1966 = vmatpush1.xpose.msra.mxu0 %v1927
    %1967 = vmatprep.subr.mxu0 0.0
    %1968 = vmatpush1.xpose.msra.mxu0 %v1930
    %1969 = vmatprep.subr.mxu0 0.0
    %1970 = vmatpush1.xpose.msra.mxu0 %v1933
    %1971 = vmatprep.subr.mxu0 0.0
    %1972 = vmatpush1.xpose.msra.mxu0 %v1936
    %1973 = vmatprep.subr.mxu0 0.0
    %1974 = vmatpush1.xpose.msra.mxu0 %v1939
    %1975 = vmatprep.subr.mxu0 0.0
    %1976 = vmatpush1.xpose.msra.mxu0 %v1942
    %1977 = vmatprep.subr.mxu0 0.0
    %1978 = vmatpush1.xpose.msra.mxu0 %v1945
    %1979 = vmatprep.subr.mxu0 0.0
    %1980 = vmatpush1.xpose.msra.mxu0 0.0
    %1981 = vmatprep.subr.mxu0 0.0
    %1982 = vmatpush1.xpose.msra.mxu0 0.0
    %1983 = vmatprep.subr.mxu0 0.0
    %1984 = vmatpush1.xpose.msra.mxu0 0.0
    %1985 = vmatprep.subr.mxu0 0.0
    %1986 = vmatpush1.xpose.msra.mxu0 0.0
    %1987 = vmatprep.subr.mxu0 0.0
    %1988 = vmatpush1.xpose.msra.mxu0 0.0
    %1989 = vmatprep.subr.mxu0 0.0
    %1990 = vmatpush1.xpose.msra.mxu0 0.0
    %1991 = vmatprep.subr.mxu0 0.0
    %1992 = vmatpush1.xpose.msra.mxu0 0.0
    %1993 = vmatprep.subr.mxu0 0.0
    %1994 = vmatpush1.xpose.msra.mxu0 0.0
    %1995 = vmatprep.subr.mxu0 0.0
    %1996 = vmatpush1.xpose.msra.mxu0 0.0
    %1997 = vmatprep.subr.mxu0 0.0
    %1998 = vmatpush1.xpose.msra.mxu0 0.0
    %1999 = vmatprep.subr.mxu0 0.0
    %2000 = vmatpush1.xpose.msra.mxu0 0.0
    %2001 = vmatprep.subr.mxu0 0.0
    %2002 = vmatpush1.xpose.msra.mxu0 0.0
    %2003 = vmatprep.subr.mxu0 0.0
    %2004 = vmatpush1.xpose.msra.mxu0 0.0
    %2005 = vmatprep.subr.mxu0 0.0
    %2006 = vmatpush1.xpose.msra.mxu0 0.0
    %2007 = vmatprep.subr.mxu0 0.0
    %2008 = vmatpush1.xpose.msra.mxu0 0.0
    %2009 = vmatprep.subr.mxu0 0.0
    %2010 = vmatpush1.xpose.msra.mxu0 0.0
    %2011 = vmatprep.mubr.f32.mxu0 0.0
    %2012 = vmatmul.mubr.f32.gmra.mrb[0].mxu0 %v1897
    %v2013 = vpop.f32.mrb[0].mxu0
    %v2014 = vadd.f32 0.0, %v2013
    %v2015 = vpop.f32.mrb[0].mxu0
    %2016 = vdwg.mxu0
    %v2017 = vmul.f32 %v2014, 0.35355338
    %v2018 = vadd.f32 %v2017, %v1878
    %2019 = vmax.xlane.f32.xlu0 %v2018
    %v2020 = vpop.xlane.xlu0 %2019
    %v2021 = vsub.f32 %v2018, %v2020
    %v2022 = vmul.f32 %v2021, 1.442695
    %v2023 = vpow.pop %v2022
    %2024 = vadd.xlane.f32.xlu0 %v2023
    %v2025 = vpop.xlane.xlu0 %2024
    %v2026 = vrcp.pop %v2025
    %v2027 = vmul.f32 %v2025, %v2026
    %v2028 = vsub.f32 2.0, %v2027
    %v2029 = vmul.f32 %v2026, %v2028
    %v2030 = vmul.f32 %v2023, %v2029
    %v2031 = vmul.f32 %v1800, %v279
    %v2032 = vmul.f32 %v1805, %v279
    %v2033 = vmul.f32 %v1810, %v279
    %v2034 = vmul.f32 %v1815, %v279
    %v2035 = vmul.f32 %v1820, %v279
    %v2036 = vmul.f32 %v1825, %v279
    %v2037 = vmul.f32 %v1830, %v279
    %v2038 = vmul.f32 %v1835, %v279
    %v2039 = vmul.f32 %v1840, %v279
    %v2040 = vmul.f32 %v1845, %v279
    %v2041 = vmul.f32 %v1850, %v279
    %v2042 = vmul.f32 %v1855, %v279
    %v2043 = vmul.f32 %v1860, %v279
    %v2044 = vmul.f32 %v1865, %v279
    %v2045 = vmul.f32 %v1870, %v279
    %v2046 = vmul.f32 %v1875, %v279
    %v2047 = vmul.f32 %v1449, %v419
    %v2048 = vmul.f32 %v1587, %v419
    %v2049 = vmul.f32 %v1592, %v419
    %v2050 = vmul.f32 %v1597, %v419
    %v2051 = vmul.f32 %v1602, %v419
    %v2052 = vmul.f32 %v1607, %v419
    %v2053 = vmul.f32 %v1612, %v419
    %v2054 = vmul.f32 %v1617, %v419
    %v2055 = vmul.f32 %v1622, %v419
    %v2056 = vmul.f32 %v1627, %v419
    %v2057 = vmul.f32 %v1632, %v419
    %v2058 = vmul.f32 %v1637, %v419
    %v2059 = vmul.f32 %v1642, %v419
    %v2060 = vmul.f32 %v1647, %v419
    %v2061 = vmul.f32 %v1652, %v419
    %v2062 = vmul.f32 %v1657, %v419
    %v2063 = vmul.f32 %v1662, %v419
    %v2065 = vsel %vm107, %v2047, 0
    %v2068 = vsel %vm107, %v2048, 0
    %v2071 = vsel %vm107, %v2049, 0
    %v2074 = vsel %vm107, %v2050, 0
    %v2077 = vsel %vm107, %v2051, 0
    %v2080 = vsel %vm107, %v2052, 0
    %v2083 = vsel %vm107, %v2053, 0
    %v2086 = vsel %vm107, %v2054, 0
    %v2089 = vsel %vm107, %v2055, 0
    %v2092 = vsel %vm107, %v2056, 0
    %v2095 = vsel %vm107, %v2057, 0
    %v2098 = vsel %vm107, %v2058, 0
    %v2101 = vsel %vm107, %v2059, 0
    %v2104 = vsel %vm107, %v2060, 0
    %v2107 = vsel %vm107, %v2061, 0
    %v2110 = vsel %vm107, %v2062, 0
    %v2113 = vsel %vm107, %v2063, 0
    %2115 = vmatprep.subr.mxu0 0.0
    %2116 = vmatpush1.xpose.msra.mxu0 %v2068
    %2117 = vmatprep.subr.mxu0 0.0
    %2118 = vmatpush1.xpose.msra.mxu0 %v2071
    %2119 = vmatprep.subr.mxu0 0.0
    %2120 = vmatpush1.xpose.msra.mxu0 %v2074
    %2121 = vmatprep.subr.mxu0 0.0
    %2122 = vmatpush1.xpose.msra.mxu0 %v2077
    %2123 = vmatprep.subr.mxu0 0.0
    %2124 = vmatpush1.xpose.msra.mxu0 %v2080
    %2125 = vmatprep.subr.mxu0 0.0
    %2126 = vmatpush1.xpose.msra.mxu0 %v2083
    %2127 = vmatprep.subr.mxu0 0.0
    %2128 = vmatpush1.xpose.msra.mxu0 %v2086
    %2129 = vmatprep.subr.mxu0 0.0
    %2130 = vmatpush1.xpose.msra.mxu0 %v2089
    %2131 = vmatprep.subr.mxu0 0.0
    %2132 = vmatpush1.xpose.msra.mxu0 %v2092
    %2133 = vmatprep.subr.mxu0 0.0
    %2134 = vmatpush1.xpose.msra.mxu0 %v2095
    %2135 = vmatprep.subr.mxu0 0.0
    %2136 = vmatpush1.xpose.msra.mxu0 %v2098
    %2137 = vmatprep.subr.mxu0 0.0
    %2138 = vmatpush1.xpose.msra.mxu0 %v2101
    %2139 = vmatprep.subr.mxu0 0.0
    %2140 = vmatpush1.xpose.msra.mxu0 %v2104
    %2141 = vmatprep.subr.mxu0 0.0
    %2142 = vmatpush1.xpose.msra.mxu0 %v2107
    %2143 = vmatprep.subr.mxu0 0.0
    %2144 = vmatpush1.xpose.msra.mxu0 %v2110
    %2145 = vmatprep.subr.mxu0 0.0
    %2146 = vmatpush1.xpose.msra.mxu0 %v2113
    %2147 = vmatprep.subr.mxu0 0.0
    %2148 = vmatpush1.xpose.msra.mxu0 0.0
    %2149 = vmatprep.subr.mxu0 0.0
    %2150 = vmatpush1.xpose.msra.mxu0 0.0
    %2151 = vmatprep.subr.mxu0 0.0
    %2152 = vmatpush1.xpose.msra.mxu0 0.0
    %2153 = vmatprep.subr.mxu0 0.0
    %2154 = vmatpush1.xpose.msra.mxu0 0.0
    %2155 = vmatprep.subr.mxu0 0.0
    %2156 = vmatpush1.xpose.msra.mxu0 0.0
    %2157 = vmatprep.subr.mxu0 0.0
    %2158 = vmatpush1.xpose.msra.mxu0 0.0
    %2159 = vmatprep.subr.mxu0 0.0
    %2160 = vmatpush1.xpose.msra.mxu0 0.0
    %2161 = vmatprep.subr.mxu0 0.0
    %2162 = vmatpush1.xpose.msra.mxu0 0.0
    %2163 = vmatprep.subr.mxu0 0.0
    %2164 = vmatpush1.xpose.msra.mxu0 0.0
    %2165 = vmatprep.subr.mxu0 0.0
    %2166 = vmatpush1.xpose.msra.mxu0 0.0
    %2167 = vmatprep.subr.mxu0 0.0
    %2168 = vmatpush1.xpose.msra.mxu0 0.0
    %2169 = vmatprep.subr.mxu0 0.0
    %2170 = vmatpush1.xpose.msra.mxu0 0.0
    %2171 = vmatprep.subr.mxu0 0.0
    %2172 = vmatpush1.xpose.msra.mxu0 0.0
    %2173 = vmatprep.subr.mxu0 0.0
    %2174 = vmatpush1.xpose.msra.mxu0 0.0
    %2175 = vmatprep.subr.mxu0 0.0
    %2176 = vmatpush1.xpose.msra.mxu0 0.0
    %2177 = vmatprep.subr.mxu0 0.0
    %2178 = vmatpush1.xpose.msra.mxu0 0.0
    %2179 = vmatprep.mubr.f32.mxu0 0.0
    %2180 = vmatmul.mubr.f32.gmra.mrb[0].mxu0 %v2065
    %v2181 = vpop.f32.mrb[0].mxu0
    %v2182 = vadd.f32 0.0, %v2181
    %v2183 = vpop.f32.mrb[0].mxu0
    %2184 = vdwg.mxu0
    %v2185 = vmul.f32 %v2182, 0.35355338
    %v2186 = vadd.f32 %v2185, %v1878
    %2187 = vmax.xlane.f32.xlu0 %v2186
    %v2188 = vpop.xlane.xlu0 %2187
    %v2189 = vsub.f32 %v2186, %v2188
    %v2190 = vmul.f32 %v2189, 1.442695
    %v2191 = vpow.pop %v2190
    %2192 = vadd.xlane.f32.xlu0 %v2191
    %v2193 = vpop.xlane.xlu0 %2192
    %v2194 = vrcp.pop %v2193
    %v2195 = vmul.f32 %v2193, %v2194
    %v2196 = vsub.f32 2.0, %v2195
    %v2197 = vmul.f32 %v2194, %v2196
    %v2198 = vmul.f32 %v2191, %v2197
    %v2199 = vmul.f32 %v1800, %v419
    %v2200 = vmul.f32 %v1805, %v419
    %v2201 = vmul.f32 %v1810, %v419
    %v2202 = vmul.f32 %v1815, %v419
    %v2203 = vmul.f32 %v1820, %v419
    %v2204 = vmul.f32 %v1825, %v419
    %v2205 = vmul.f32 %v1830, %v419
    %v2206 = vmul.f32 %v1835, %v419
    %v2207 = vmul.f32 %v1840, %v419
    %v2208 = vmul.f32 %v1845, %v419
    %v2209 = vmul.f32 %v1850, %v419
    %v2210 = vmul.f32 %v1855, %v419
    %v2211 = vmul.f32 %v1860, %v419
    %v2212 = vmul.f32 %v1865, %v419
    %v2213 = vmul.f32 %v1870, %v419
    %v2214 = vmul.f32 %v1875, %v419
    %2215 = vmatprep.subr.mxu0 0.0
    %2216 = vmatpush1.msra.mxu0 %v2199
    %2217 = vmatprep.subr.mxu0 0.0
    %2218 = vmatpush1.msra.mxu0 %v2200
    %2219 = vmatprep.subr.mxu0 0.0
    %2220 = vmatpush1.msra.mxu0 %v2201
    %2221 = vmatprep.subr.mxu0 0.0
    %2222 = vmatpush1.msra.mxu0 %v2202
    %2223 = vmatprep.subr.mxu0 0.0
    %2224 = vmatpush1.msra.mxu0 %v2203
    %2225 = vmatprep.subr.mxu0 0.0
    %2226 = vmatpush1.msra.mxu0 %v2204
    %2227 = vmatprep.subr.mxu0 0.0
    %2228 = vmatpush1.msra.mxu0 %v2205
    %2229 = vmatprep.subr.mxu0 0.0
    %2230 = vmatpush1.msra.mxu0 %v2206
    %2231 = vmatprep.subr.mxu0 0.0
    %2232 = vmatpush1.msra.mxu0 %v2207
    %2233 = vmatprep.subr.mxu0 0.0
    %2234 = vmatpush1.msra.mxu0 %v2208
    %2235 = vmatprep.subr.mxu0 0.0
    %2236 = vmatpush1.msra.mxu0 %v2209
    %2237 = vmatprep.subr.mxu0 0.0
    %2238 = vmatpush1.msra.mxu0 %v2210
    %2239 = vmatprep.subr.mxu0 0.0
    %2240 = vmatpush1.msra.mxu0 %v2211
    %2241 = vmatprep.subr.mxu0 0.0
    %2242 = vmatpush1.msra.mxu0 %v2212
    %2243 = vmatprep.subr.mxu0 0.0
    %2244 = vmatpush1.msra.mxu0 %v2213
    %2245 = vmatprep.subr.mxu0 0.0
    %2246 = vmatpush1.msra.mxu0 %v2214
    %2247 = vmatprep.subr.mxu0 0.0
    %2248 = vmatpush1.msra.mxu0 0.0
    %2249 = vmatprep.subr.mxu0 0.0
    %2250 = vmatpush1.msra.mxu0 0.0
    %2251 = vmatprep.subr.mxu0 0.0
    %2252 = vmatpush1.msra.mxu0 0.0
    %2253 = vmatprep.subr.mxu0 0.0
    %2254 = vmatpush1.msra.mxu0 0.0
    %2255 = vmatprep.subr.mxu0 0.0
    %2256 = vmatpush1.msra.mxu0 0.0
    %2257 = vmatprep.subr.mxu0 0.0
    %2258 = vmatpush1.msra.mxu0 0.0
    %2259 = vmatprep.subr.mxu0 0.0
    %2260 = vmatpush1.msra.mxu0 0.0
    %2261 = vmatprep.subr.mxu0 0.0
    %2262 = vmatpush1.msra.mxu0 0.0
    %2263 = vmatprep.subr.mxu0 0.0
    %2264 = vmatpush1.msra.mxu0 0.0
    %2265 = vmatprep.subr.mxu0 0.0
    %2266 = vmatpush1.msra.mxu0 0.0
    %2267 = vmatprep.subr.mxu0 0.0
    %2268 = vmatpush1.msra.mxu0 0.0
    %2269 = vmatprep.subr.mxu0 0.0
    %2270 = vmatpush1.msra.mxu0 0.0
    %2271 = vmatprep.subr.mxu0 0.0
    %2272 = vmatpush1.msra.mxu0 0.0
    %2273 = vmatprep.subr.mxu0 0.0
    %2274 = vmatpush1.msra.mxu0 0.0
    %2275 = vmatprep.subr.mxu0 0.0
    %2276 = vmatpush1.msra.mxu0 0.0
    %2277 = vmatprep.subr.mxu0 0.0
    %2278 = vmatpush1.msra.mxu0 0.0
    %2279 = vmatprep.mubr.f32.mxu0 0.0
    %2280 = vmatmul.mubr.f32.gmra.mrb[0].mxu0 %v2198
    %v2281 = vpop.f32.mrb[0].mxu0
    %v2282 = vadd.f32 0.0, %v2281
    %v2283 = vpop.f32.mrb[0].mxu0
    %2284 = vdwg.mxu0
    %2285 = vmatprep.subr.mxu0 0.0
    %2286 = vmatpush1.msra.mxu0 %v2031
    %2287 = vmatprep.subr.mxu0 0.0
    %2288 = vmatpush1.msra.mxu0 %v2032
    %2289 = vmatprep.subr.mxu0 0.0
    %2290 = vmatpush1.msra.mxu0 %v2033
    %2291 = vmatprep.subr.mxu0 0.0
    %2292 = vmatpush1.msra.mxu0 %v2034
    %2293 = vmatprep.subr.mxu0 0.0
    %2294 = vmatpush1.msra.mxu0 %v2035
    %2295 = vmatprep.subr.mxu0 0.0
    %2296 = vmatpush1.msra.mxu0 %v2036
    %2297 = vmatprep.subr.mxu0 0.0
    %2298 = vmatpush1.msra.mxu0 %v2037
    %2299 = vmatprep.subr.mxu0 0.0
    %2300 = vmatpush1.msra.mxu0 %v2038
    %2301 = vmatprep.subr.mxu0 0.0
    %2302 = vmatpush1.msra.mxu0 %v2039
    %2303 = vmatprep.subr.mxu0 0.0
    %2304 = vmatpush1.msra.mxu0 %v2040
    %2305 = vmatprep.subr.mxu0 0.0
    %2306 = vmatpush1.msra.mxu0 %v2041
    %2307 = vmatprep.subr.mxu0 0.0
    %2308 = vmatpush1.msra.mxu0 %v2042
    %2309 = vmatprep.subr.mxu0 0.0
    %2310 = vmatpush1.msra.mxu0 %v2043
    %2311 = vmatprep.subr.mxu0 0.0
    %2312 = vmatpush1.msra.mxu0 %v2044
    %2313 = vmatprep.subr.mxu0 0.0
    %2314 = vmatpush1.msra.mxu0 %v2045
    %2315 = vmatprep.subr.mxu0 0.0
    %2316 = vmatpush1.msra.mxu0 %v2046
    %2317 = vmatprep.subr.mxu0 0.0
    %2318 = vmatpush1.msra.mxu0 0.0
    %2319 = vmatprep.subr.mxu0 0.0
    %2320 = vmatpush1.msra.mxu0 0.0
    %2321 = vmatprep.subr.mxu0 0.0
    %2322 = vmatpush1.msra.mxu0 0.0
    %2323 = vmatprep.subr.mxu0 0.0
    %2324 = vmatpush1.msra.mxu0 0.0
    %2325 = vmatprep.subr.mxu0 0.0
    %2326 = vmatpush1.msra.mxu0 0.0
    %2327 = vmatprep.subr.mxu0 0.0
    %2328 = vmatpush1.msra.mxu0 0.0
    %2329 = vmatprep.subr.mxu0 0.0
    %2330 = vmatpush1.msra.mxu0 0.0
    %2331 = vmatprep.subr.mxu0 0.0
    %2332 = vmatpush1.msra.mxu0 0.0
    %2333 = vmatprep.subr.mxu0 0.0
    %2334 = vmatpush1.msra.mxu0 0.0
    %2335 = vmatprep.subr.mxu0 0.0
    %2336 = vmatpush1.msra.mxu0 0.0
    %2337 = vmatprep.subr.mxu0 0.0
    %2338 = vmatpush1.msra.mxu0 0.0
    %2339 = vmatprep.subr.mxu0 0.0
    %2340 = vmatpush1.msra.mxu0 0.0
    %2341 = vmatprep.subr.mxu0 0.0
    %2342 = vmatpush1.msra.mxu0 0.0
    %2343 = vmatprep.subr.mxu0 0.0
    %2344 = vmatpush1.msra.mxu0 0.0
    %2345 = vmatprep.subr.mxu0 0.0
    %2346 = vmatpush1.msra.mxu0 0.0
    %2347 = vmatprep.subr.mxu0 0.0
    %2348 = vmatpush1.msra.mxu0 0.0
    %2349 = vmatprep.mubr.f32.mxu0 0.0
    %2350 = vmatmul.mubr.f32.gmra.mrb[0].mxu0 %v2030
    %v2351 = vpop.f32.mrb[0].mxu0
    %v2352 = vadd.f32 %v2282, %v2351
    %v2353 = vpop.f32.mrb[0].mxu0
    %2354 = vdwg.mxu0
    %v2355 = vmul.f32 %v1449, %v720
    %v2356 = vmul.f32 %v1587, %v720
    %v2357 = vmul.f32 %v1592, %v720
    %v2358 = vmul.f32 %v1597, %v720
    %v2359 = vmul.f32 %v1602, %v720
    %v2360 = vmul.f32 %v1607, %v720
    %v2361 = vmul.f32 %v1612, %v720
    %v2362 = vmul.f32 %v1617, %v720
    %v2363 = vmul.f32 %v1622, %v720
    %v2364 = vmul.f32 %v1627, %v720
    %v2365 = vmul.f32 %v1632, %v720
    %v2366 = vmul.f32 %v1637, %v720
    %v2367 = vmul.f32 %v1642, %v720
    %v2368 = vmul.f32 %v1647, %v720
    %v2369 = vmul.f32 %v1652, %v720
    %v2370 = vmul.f32 %v1657, %v720
    %v2371 = vmul.f32 %v1662, %v720
    %v2373 = vsel %vm107, %v2355, 0
    %v2376 = vsel %vm107, %v2356, 0
    %v2379 = vsel %vm107, %v2357, 0
    %v2382 = vsel %vm107, %v2358, 0
    %v2385 = vsel %vm107, %v2359, 0
    %v2388 = vsel %vm107, %v2360, 0
    %v2391 = vsel %vm107, %v2361, 0
    %v2394 = vsel %vm107, %v2362, 0
    %v2397 = vsel %vm107, %v2363, 0
    %v2400 = vsel %vm107, %v2364, 0
    %v2403 = vsel %vm107, %v2365, 0
    %v2406 = vsel %vm107, %v2366, 0
    %v2409 = vsel %vm107, %v2367, 0
    %v2412 = vsel %vm107, %v2368, 0
    %v2415 = vsel %vm107, %v2369, 0
    %v2418 = vsel %vm107, %v2370, 0
    %v2421 = vsel %vm107, %v2371, 0
    %2423 = vmatprep.subr.mxu0 0.0
    %2424 = vmatpush1.xpose.msra.mxu0 %v2376
    %2425 = vmatprep.subr.mxu0 0.0
    %2426 = vmatpush1.xpose.msra.mxu0 %v2379
    %2427 = vmatprep.subr.mxu0 0.0
    %2428 = vmatpush1.xpose.msra.mxu0 %v2382
    %2429 = vmatprep.subr.mxu0 0.0
    %2430 = vmatpush1.xpose.msra.mxu0 %v2385
    %2431 = vmatprep.subr.mxu0 0.0
    %2432 = vmatpush1.xpose.msra.mxu0 %v2388
    %2433 = vmatprep.subr.mxu0 0.0
    %2434 = vmatpush1.xpose.msra.mxu0 %v2391
    %2435 = vmatprep.subr.mxu0 0.0
    %2436 = vmatpush1.xpose.msra.mxu0 %v2394
    %2437 = vmatprep.subr.mxu0 0.0
    %2438 = vmatpush1.xpose.msra.mxu0 %v2397
    %2439 = vmatprep.subr.mxu0 0.0
    %2440 = vmatpush1.xpose.msra.mxu0 %v2400
    %2441 = vmatprep.subr.mxu0 0.0
    %2442 = vmatpush1.xpose.msra.mxu0 %v2403
    %2443 = vmatprep.subr.mxu0 0.0
    %2444 = vmatpush1.xpose.msra.mxu0 %v2406
    %2445 = vmatprep.subr.mxu0 0.0
    %2446 = vmatpush1.xpose.msra.mxu0 %v2409
    %2447 = vmatprep.subr.mxu0 0.0
    %2448 = vmatpush1.xpose.msra.mxu0 %v2412
    %2449 = vmatprep.subr.mxu0 0.0
    %2450 = vmatpush1.xpose.msra.mxu0 %v2415
    %2451 = vmatprep.subr.mxu0 0.0
    %2452 = vmatpush1.xpose.msra.mxu0 %v2418
    %2453 = vmatprep.subr.mxu0 0.0
    %2454 = vmatpush1.xpose.msra.mxu0 %v2421
    %2455 = vmatprep.subr.mxu0 0.0
    %2456 = vmatpush1.xpose.msra.mxu0 0.0
    %2457 = vmatprep.subr.mxu0 0.0
    %2458 = vmatpush1.xpose.msra.mxu0 0.0
    %2459 = vmatprep.subr.mxu0 0.0
    %2460 = vmatpush1.xpose.msra.mxu0 0.0
    %2461 = vmatprep.subr.mxu0 0.0
    %2462 = vmatpush1.xpose.msra.mxu0 0.0
    %2463 = vmatprep.subr.mxu0 0.0
    %2464 = vmatpush1.xpose.msra.mxu0 0.0
    %2465 = vmatprep.subr.mxu0 0.0
    %2466 = vmatpush1.xpose.msra.mxu0 0.0
    %2467 = vmatprep.subr.mxu0 0.0
    %2468 = vmatpush1.xpose.msra.mxu0 0.0
    %2469 = vmatprep.subr.mxu0 0.0
    %2470 = vmatpush1.xpose.msra.mxu0 0.0
    %2471 = vmatprep.subr.mxu0 0.0
    %2472 = vmatpush1.xpose.msra.mxu0 0.0
    %2473 = vmatprep.subr.mxu0 0.0
    %2474 = vmatpush1.xpose.msra.mxu0 0.0
    %2475 = vmatprep.subr.mxu0 0.0
    %2476 = vmatpush1.xpose.msra.mxu0 0.0
    %2477 = vmatprep.subr.mxu0 0.0
    %2478 = vmatpush1.xpose.msra.mxu0 0.0
    %2479 = vmatprep.subr.mxu0 0.0
    %2480 = vmatpush1.xpose.msra.mxu0 0.0
    %2481 = vmatprep.subr.mxu0 0.0
    %2482 = vmatpush1.xpose.msra.mxu0 0.0
    %2483 = vmatprep.subr.mxu0 0.0
    %2484 = vmatpush1.xpose.msra.mxu0 0.0
    %2485 = vmatprep.subr.mxu0 0.0
    %2486 = vmatpush1.xpose.msra.mxu0 0.0
    %2487 = vmatprep.mubr.f32.mxu0 0.0
    %2488 = vmatmul.mubr.f32.gmra.mrb[0].mxu0 %v2373
    %v2489 = vpop.f32.mrb[0].mxu0
    %v2490 = vadd.f32 0.0, %v2489
    %v2491 = vpop.f32.mrb[0].mxu0
    %2492 = vdwg.mxu0
    %v2493 = vmul.f32 %v2490, 0.35355338
    %v2494 = vadd.f32 %v2493, %v1878
    %2495 = vmax.xlane.f32.xlu0 %v2494
    %v2496 = vpop.xlane.xlu0 %2495
    %v2497 = vsub.f32 %v2494, %v2496
    %v2498 = vmul.f32 %v2497, 1.442695
    %v2499 = vpow.pop %v2498
    %2500 = vadd.xlane.f32.xlu0 %v2499
    %v2501 = vpop.xlane.xlu0 %2500
    %v2502 = vrcp.pop %v2501
    %v2503 = vmul.f32 %v2501, %v2502
    %v2504 = vsub.f32 2.0, %v2503
    %v2505 = vmul.f32 %v2502, %v2504
    %v2506 = vmul.f32 %v2499, %v2505
    %v2507 = vmul.f32 %v1800, %v720
    %v2508 = vmul.f32 %v1805, %v720
    %v2509 = vmul.f32 %v1810, %v720
    %v2510 = vmul.f32 %v1815, %v720
    %v2511 = vmul.f32 %v1820, %v720
    %v2512 = vmul.f32 %v1825, %v720
    %v2513 = vmul.f32 %v1830, %v720
    %v2514 = vmul.f32 %v1835, %v720
    %v2515 = vmul.f32 %v1840, %v720
    %v2516 = vmul.f32 %v1845, %v720
    %v2517 = vmul.f32 %v1850, %v720
    %v2518 = vmul.f32 %v1855, %v720
    %v2519 = vmul.f32 %v1860, %v720
    %v2520 = vmul.f32 %v1865, %v720
    %v2521 = vmul.f32 %v1870, %v720
    %v2522 = vmul.f32 %v1875, %v720
    %2523 = vmatprep.subr.mxu0 0.0
    %2524 = vmatpush1.msra.mxu0 %v2507
    %2525 = vmatprep.subr.mxu0 0.0
    %2526 = vmatpush1.msra.mxu0 %v2508
    %2527 = vmatprep.subr.mxu0 0.0
    %2528 = vmatpush1.msra.mxu0 %v2509
    %2529 = vmatprep.subr.mxu0 0.0
    %2530 = vmatpush1.msra.mxu0 %v2510
    %2531 = vmatprep.subr.mxu0 0.0
    %2532 = vmatpush1.msra.mxu0 %v2511
    %2533 = vmatprep.subr.mxu0 0.0
    %2534 = vmatpush1.msra.mxu0 %v2512
    %2535 = vmatprep.subr.mxu0 0.0
    %2536 = vmatpush1.msra.mxu0 %v2513
    %2537 = vmatprep.subr.mxu0 0.0
    %2538 = vmatpush1.msra.mxu0 %v2514
    %2539 = vmatprep.subr.mxu0 0.0
    %2540 = vmatpush1.msra.mxu0 %v2515
    %2541 = vmatprep.subr.mxu0 0.0
    %2542 = vmatpush1.msra.mxu0 %v2516
    %2543 = vmatprep.subr.mxu0 0.0
    %2544 = vmatpush1.msra.mxu0 %v2517
    %2545 = vmatprep.subr.mxu0 0.0
    %2546 = vmatpush1.msra.mxu0 %v2518
    %2547 = vmatprep.subr.mxu0 0.0
    %2548 = vmatpush1.msra.mxu0 %v2519
    %2549 = vmatprep.subr.mxu0 0.0
    %2550 = vmatpush1.msra.mxu0 %v2520
    %2551 = vmatprep.subr.mxu0 0.0
    %2552 = vmatpush1.msra.mxu0 %v2521
    %2553 = vmatprep.subr.mxu0 0.0
    %2554 = vmatpush1.msra.mxu0 %v2522
    %2555 = vmatprep.subr.mxu0 0.0
    %2556 = vmatpush1.msra.mxu0 0.0
    %2557 = vmatprep.subr.mxu0 0.0
    %2558 = vmatpush1.msra.mxu0 0.0
    %2559 = vmatprep.subr.mxu0 0.0
    %2560 = vmatpush1.msra.mxu0 0.0
    %2561 = vmatprep.subr.mxu0 0.0
    %2562 = vmatpush1.msra.mxu0 0.0
    %2563 = vmatprep.subr.mxu0 0.0
    %2564 = vmatpush1.msra.mxu0 0.0
    %2565 = vmatprep.subr.mxu0 0.0
    %2566 = vmatpush1.msra.mxu0 0.0
    %2567 = vmatprep.subr.mxu0 0.0
    %2568 = vmatpush1.msra.mxu0 0.0
    %2569 = vmatprep.subr.mxu0 0.0
    %2570 = vmatpush1.msra.mxu0 0.0
    %2571 = vmatprep.subr.mxu0 0.0
    %2572 = vmatpush1.msra.mxu0 0.0
    %2573 = vmatprep.subr.mxu0 0.0
    %2574 = vmatpush1.msra.mxu0 0.0
    %2575 = vmatprep.subr.mxu0 0.0
    %2576 = vmatpush1.msra.mxu0 0.0
    %2577 = vmatprep.subr.mxu0 0.0
    %2578 = vmatpush1.msra.mxu0 0.0
    %2579 = vmatprep.subr.mxu0 0.0
    %2580 = vmatpush1.msra.mxu0 0.0
    %2581 = vmatprep.subr.mxu0 0.0
    %2582 = vmatpush1.msra.mxu0 0.0
    %2583 = vmatprep.subr.mxu0 0.0
    %2584 = vmatpush1.msra.mxu0 0.0
    %2585 = vmatprep.subr.mxu0 0.0
    %2586 = vmatpush1.msra.mxu0 0.0
    %2587 = vmatprep.mubr.f32.mxu0 0.0
    %2588 = vmatmul.mubr.f32.gmra.mrb[0].mxu0 %v2506
    %v2589 = vpop.f32.mrb[0].mxu0
    %v2590 = vadd.f32 0.0, %v2589
    %v2591 = vpop.f32.mrb[0].mxu0
    %2592 = vdwg.mxu0
    %v2593 = vadd.f32 %v2352, %v2590
    %v2594 = vmul.f32 %v1449, %v942
    %v2595 = vmul.f32 %v1587, %v942
    %v2596 = vmul.f32 %v1592, %v942
    %v2597 = vmul.f32 %v1597, %v942
    %v2598 = vmul.f32 %v1602, %v942
    %v2599 = vmul.f32 %v1607, %v942
    %v2600 = vmul.f32 %v1612, %v942
    %v2601 = vmul.f32 %v1617, %v942
    %v2602 = vmul.f32 %v1622, %v942
    %v2603 = vmul.f32 %v1627, %v942
    %v2604 = vmul.f32 %v1632, %v942
    %v2605 = vmul.f32 %v1637, %v942
    %v2606 = vmul.f32 %v1642, %v942
    %v2607 = vmul.f32 %v1647, %v942
    %v2608 = vmul.f32 %v1652, %v942
    %v2609 = vmul.f32 %v1657, %v942
    %v2610 = vmul.f32 %v1662, %v942
    %v2612 = vsel %vm107, %v2594, 0
    %v2615 = vsel %vm107, %v2595, 0
    %v2618 = vsel %vm107, %v2596, 0
    %v2621 = vsel %vm107, %v2597, 0
    %v2624 = vsel %vm107, %v2598, 0
    %v2627 = vsel %vm107, %v2599, 0
    %v2630 = vsel %vm107, %v2600, 0
    %v2633 = vsel %vm107, %v2601, 0
    %v2636 = vsel %vm107, %v2602, 0
    %v2639 = vsel %vm107, %v2603, 0
    %v2642 = vsel %vm107, %v2604, 0
    %v2645 = vsel %vm107, %v2605, 0
    %v2648 = vsel %vm107, %v2606, 0
    %v2651 = vsel %vm107, %v2607, 0
    %v2654 = vsel %vm107, %v2608, 0
    %v2657 = vsel %vm107, %v2609, 0
    %v2660 = vsel %vm107, %v2610, 0
    %2662 = vmatprep.subr.mxu0 0.0
    %2663 = vmatpush1.xpose.msra.mxu0 %v2615
    %2664 = vmatprep.subr.mxu0 0.0
    %2665 = vmatpush1.xpose.msra.mxu0 %v2618
    %2666 = vmatprep.subr.mxu0 0.0
    %2667 = vmatpush1.xpose.msra.mxu0 %v2621
    %2668 = vmatprep.subr.mxu0 0.0
    %2669 = vmatpush1.xpose.msra.mxu0 %v2624
    %2670 = vmatprep.subr.mxu0 0.0
    %2671 = vmatpush1.xpose.msra.mxu0 %v2627
    %2672 = vmatprep.subr.mxu0 0.0
    %2673 = vmatpush1.xpose.msra.mxu0 %v2630
    %2674 = vmatprep.subr.mxu0 0.0
    %2675 = vmatpush1.xpose.msra.mxu0 %v2633
    %2676 = vmatprep.subr.mxu0 0.0
    %2677 = vmatpush1.xpose.msra.mxu0 %v2636
    %2678 = vmatprep.subr.mxu0 0.0
    %2679 = vmatpush1.xpose.msra.mxu0 %v2639
    %2680 = vmatprep.subr.mxu0 0.0
    %2681 = vmatpush1.xpose.msra.mxu0 %v2642
    %2682 = vmatprep.subr.mxu0 0.0
    %2683 = vmatpush1.xpose.msra.mxu0 %v2645
    %2684 = vmatprep.subr.mxu0 0.0
    %2685 = vmatpush1.xpose.msra.mxu0 %v2648
    %2686 = vmatprep.subr.mxu0 0.0
    %2687 = vmatpush1.xpose.msra.mxu0 %v2651
    %2688 = vmatprep.subr.mxu0 0.0
    %2689 = vmatpush1.xpose.msra.mxu0 %v2654
    %2690 = vmatprep.subr.mxu0 0.0
    %2691 = vmatpush1.xpose.msra.mxu0 %v2657
    %2692 = vmatprep.subr.mxu0 0.0
    %2693 = vmatpush1.xpose.msra.mxu0 %v2660
    %2694 = vmatprep.subr.mxu0 0.0
    %2695 = vmatpush1.xpose.msra.mxu0 0.0
    %2696 = vmatprep.subr.mxu0 0.0
    %2697 = vmatpush1.xpose.msra.mxu0 0.0
    %2698 = vmatprep.subr.mxu0 0.0
    %2699 = vmatpush1.xpose.msra.mxu0 0.0
    %2700 = vmatprep.subr.mxu0 0.0
    %2701 = vmatpush1.xpose.msra.mxu0 0.0
    %2702 = vmatprep.subr.mxu0 0.0
    %2703 = vmatpush1.xpose.msra.mxu0 0.0
    %2704 = vmatprep.subr.mxu0 0.0
    %2705 = vmatpush1.xpose.msra.mxu0 0.0
    %2706 = vmatprep.subr.mxu0 0.0
    %2707 = vmatpush1.xpose.msra.mxu0 0.0
    %2708 = vmatprep.subr.mxu0 0.0
    %2709 = vmatpush1.xpose.msra.mxu0 0.0
    %2710 = vmatprep.subr.mxu0 0.0
    %2711 = vmatpush1.xpose.msra.mxu0 0.0
    %2712 = vmatprep.subr.mxu0 0.0
    %2713 = vmatpush1.xpose.msra.mxu0 0.0
    %2714 = vmatprep.subr.mxu0 0.0
    %2715 = vmatpush1.xpose.msra.mxu0 0.0
    %2716 = vmatprep.subr.mxu0 0.0
    %2717 = vmatpush1.xpose.msra.mxu0 0.0
    %2718 = vmatprep.subr.mxu0 0.0
    %2719 = vmatpush1.xpose.msra.mxu0 0.0
    %2720 = vmatprep.subr.mxu0 0.0
    %2721 = vmatpush1.xpose.msra.mxu0 0.0
    %2722 = vmatprep.subr.mxu0 0.0
    %2723 = vmatpush1.xpose.msra.mxu0 0.0
    %2724 = vmatprep.subr.mxu0 0.0
    %2725 = vmatpush1.xpose.msra.mxu0 0.0
    %2726 = vmatprep.mubr.f32.mxu0 0.0
    %2727 = vmatmul.mubr.f32.gmra.mrb[0].mxu0 %v2612
    %v2728 = vpop.f32.mrb[0].mxu0
    %v2729 = vadd.f32 0.0, %v2728
    %v2730 = vpop.f32.mrb[0].mxu0
    %2731 = vdwg.mxu0
    %v2732 = vmul.f32 %v2729, 0.35355338
    %v2733 = vadd.f32 %v2732, %v1878
    %2734 = vmax.xlane.f32.xlu0 %v2733
    %v2735 = vpop.xlane.xlu0 %2734
    %v2736 = vsub.f32 %v2733, %v2735
    %v2737 = vmul.f32 %v2736, 1.442695
    %v2738 = vpow.pop %v2737
    %2739 = vadd.xlane.f32.xlu0 %v2738
    %v2740 = vpop.xlane.xlu0 %2739
    %v2741 = vrcp.pop %v2740
    %v2742 = vmul.f32 %v2740, %v2741
    %v2743 = vsub.f32 2.0, %v2742
    %v2744 = vmul.f32 %v2741, %v2743
    %v2745 = vmul.f32 %v2738, %v2744
    %v2746 = vmul.f32 %v1800, %v942
    %v2747 = vmul.f32 %v1805, %v942
    %v2748 = vmul.f32 %v1810, %v942
    %v2749 = vmul.f32 %v1815, %v942
    %v2750 = vmul.f32 %v1820, %v942
    %v2751 = vmul.f32 %v1825, %v942
    %v2752 = vmul.f32 %v1830, %v942
    %v2753 = vmul.f32 %v1835, %v942
    %v2754 = vmul.f32 %v1840, %v942
    %v2755 = vmul.f32 %v1845, %v942
    %v2756 = vmul.f32 %v1850, %v942
    %v2757 = vmul.f32 %v1855, %v942
    %v2758 = vmul.f32 %v1860, %v942
    %v2759 = vmul.f32 %v1865, %v942
    %v2760 = vmul.f32 %v1870, %v942
    %v2761 = vmul.f32 %v1875, %v942
    %2762 = vmatprep.subr.mxu0 0.0
    %2763 = vmatpush1.msra.mxu0 %v2746
    %2764 = vmatprep.subr.mxu0 0.0
    %2765 = vmatpush1.msra.mxu0 %v2747
    %2766 = vmatprep.subr.mxu0 0.0
    %2767 = vmatpush1.msra.mxu0 %v2748
    %2768 = vmatprep.subr.mxu0 0.0
    %2769 = vmatpush1.msra.mxu0 %v2749
    %2770 = vmatprep.subr.mxu0 0.0
    %2771 = vmatpush1.msra.mxu0 %v2750
    %2772 = vmatprep.subr.mxu0 0.0
    %2773 = vmatpush1.msra.mxu0 %v2751
    %2774 = vmatprep.subr.mxu0 0.0
    %2775 = vmatpush1.msra.mxu0 %v2752
    %2776 = vmatprep.subr.mxu0 0.0
    %2777 = vmatpush1.msra.mxu0 %v2753
    %2778 = vmatprep.subr.mxu0 0.0
    %2779 = vmatpush1.msra.mxu0 %v2754
    %2780 = vmatprep.subr.mxu0 0.0
    %2781 = vmatpush1.msra.mxu0 %v2755
    %2782 = vmatprep.subr.mxu0 0.0
    %2783 = vmatpush1.msra.mxu0 %v2756
    %2784 = vmatprep.subr.mxu0 0.0
    %2785 = vmatpush1.msra.mxu0 %v2757
    %2786 = vmatprep.subr.mxu0 0.0
    %2787 = vmatpush1.msra.mxu0 %v2758
    %2788 = vmatprep.subr.mxu0 0.0
    %2789 = vmatpush1.msra.mxu0 %v2759
    %2790 = vmatprep.subr.mxu0 0.0
    %2791 = vmatpush1.msra.mxu0 %v2760
    %2792 = vmatprep.subr.mxu0 0.0
    %2793 = vmatpush1.msra.mxu0 %v2761
    %2794 = vmatprep.subr.mxu0 0.0
    %2795 = vmatpush1.msra.mxu0 0.0
    %2796 = vmatprep.subr.mxu0 0.0
    %2797 = vmatpush1.msra.mxu0 0.0
    %2798 = vmatprep.subr.mxu0 0.0
    %2799 = vmatpush1.msra.mxu0 0.0
    %2800 = vmatprep.subr.mxu0 0.0
    %2801 = vmatpush1.msra.mxu0 0.0
    %2802 = vmatprep.subr.mxu0 0.0
    %2803 = vmatpush1.msra.mxu0 0.0
    %2804 = vmatprep.subr.mxu0 0.0
    %2805 = vmatpush1.msra.mxu0 0.0
    %2806 = vmatprep.subr.mxu0 0.0
    %2807 = vmatpush1.msra.mxu0 0.0
    %2808 = vmatprep.subr.mxu0 0.0
    %2809 = vmatpush1.msra.mxu0 0.0
    %2810 = vmatprep.subr.mxu0 0.0
    %2811 = vmatpush1.msra.mxu0 0.0
    %2812 = vmatprep.subr.mxu0 0.0
    %2813 = vmatpush1.msra.mxu0 0.0
    %2814 = vmatprep.subr.mxu0 0.0
    %2815 = vmatpush1.msra.mxu0 0.0
    %2816 = vmatprep.subr.mxu0 0.0
    %2817 = vmatpush1.msra.mxu0 0.0
    %2818 = vmatprep.subr.mxu0 0.0
    %2819 = vmatpush1.msra.mxu0 0.0
    %2820 = vmatprep.subr.mxu0 0.0
    %2821 = vmatpush1.msra.mxu0 0.0
    %2822 = vmatprep.subr.mxu0 0.0
    %2823 = vmatpush1.msra.mxu0 0.0
    %2824 = vmatprep.subr.mxu0 0.0
    %2825 = vmatpush1.msra.mxu0 0.0
    %2826 = vmatprep.mubr.f32.mxu0 0.0
    %2827 = vmatmul.mubr.f32.gmra.mrb[0].mxu0 %v2745
    %v2828 = vpop.f32.mrb[0].mxu0
    %v2829 = vadd.f32 0.0, %v2828
    %v2830 = vpop.f32.mrb[0].mxu0
    %2831 = vdwg.mxu0
    %v2832 = vadd.f32 %v2593, %v2829
    %v2833 = vlaneseq
    %v2834 = vshrl.u32 %v2833, 7
    %v2835 = vsub.s32 5, %v2834
    %v2836 = vrot.slane %v62, %v2835
    %v2838 = vsel %vm107, %v2832, 0
    %2840 = vmatprep.subr.mxu0 0.0
    %2841 = vmatpush1.msra.mxu0 %v89
    %2842 = vmatprep.subr.mxu0 0.0
    %2843 = vmatpush1.msra.mxu0 %v90
    %2844 = vmatprep.subr.mxu0 0.0
    %2845 = vmatpush1.msra.mxu0 %v91
    %2846 = vmatprep.subr.mxu0 0.0
    %2847 = vmatpush1.msra.mxu0 %v92
    %2848 = vmatprep.subr.mxu0 0.0
    %2849 = vmatpush1.msra.mxu0 0.0
    %2850 = vmatprep.subr.mxu0 0.0
    %2851 = vmatpush1.msra.mxu0 0.0
    %2852 = vmatprep.subr.mxu0 0.0
    %2853 = vmatpush1.msra.mxu0 0.0
    %2854 = vmatprep.subr.mxu0 0.0
    %2855 = vmatpush1.msra.mxu0 0.0
    %2856 = vmatprep.subr.mxu0 0.0
    %2857 = vmatpush1.msra.mxu0 0.0
    %2858 = vmatprep.subr.mxu0 0.0
    %2859 = vmatpush1.msra.mxu0 0.0
    %2860 = vmatprep.subr.mxu0 0.0
    %2861 = vmatpush1.msra.mxu0 0.0
    %2862 = vmatprep.subr.mxu0 0.0
    %2863 = vmatpush1.msra.mxu0 0.0
    %2864 = vmatprep.subr.mxu0 0.0
    %2865 = vmatpush1.msra.mxu0 0.0
    %2866 = vmatprep.subr.mxu0 0.0
    %2867 = vmatpush1.msra.mxu0 0.0
    %2868 = vmatprep.subr.mxu0 0.0
    %2869 = vmatpush1.msra.mxu0 0.0
    %2870 = vmatprep.subr.mxu0 0.0
    %2871 = vmatpush1.msra.mxu0 0.0
    %2872 = vmatprep.subr.mxu0 0.0
    %2873 = vmatpush1.msra.mxu0 0.0
    %2874 = vmatprep.subr.mxu0 0.0
    %2875 = vmatpush1.msra.mxu0 0.0
    %2876 = vmatprep.subr.mxu0 0.0
    %2877 = vmatpush1.msra.mxu0 0.0
    %2878 = vmatprep.subr.mxu0 0.0
    %2879 = vmatpush1.msra.mxu0 0.0
    %2880 = vmatprep.subr.mxu0 0.0
    %2881 = vmatpush1.msra.mxu0 0.0
    %2882 = vmatprep.subr.mxu0 0.0
    %2883 = vmatpush1.msra.mxu0 0.0
    %2884 = vmatprep.subr.mxu0 0.0
    %2885 = vmatpush1.msra.mxu0 0.0
    %2886 = vmatprep.subr.mxu0 0.0
    %2887 = vmatpush1.msra.mxu0 0.0
    %2888 = vmatprep.subr.mxu0 0.0
    %2889 = vmatpush1.msra.mxu0 0.0
    %2890 = vmatprep.subr.mxu0 0.0
    %2891 = vmatpush1.msra.mxu0 0.0
    %2892 = vmatprep.subr.mxu0 0.0
    %2893 = vmatpush1.msra.mxu0 0.0
    %2894 = vmatprep.subr.mxu0 0.0
    %2895 = vmatpush1.msra.mxu0 0.0
    %2896 = vmatprep.subr.mxu0 0.0
    %2897 = vmatpush1.msra.mxu0 0.0
    %2898 = vmatprep.subr.mxu0 0.0
    %2899 = vmatpush1.msra.mxu0 0.0
    %2900 = vmatprep.subr.mxu0 0.0
    %2901 = vmatpush1.msra.mxu0 0.0
    %2902 = vmatprep.subr.mxu0 0.0
    %2903 = vmatpush1.msra.mxu0 0.0
    %2904 = vmatprep.mubr.f32.mxu0 0.0
    %2905 = vmatmul.mubr.f32.gmra.mrb[0].mxu0 %v2838
    %v2906 = vpop.f32.mrb[0].mxu0
    %v2907 = vadd.f32 %v2836, %v2906
    %v2908 = vpop.f32.mrb[0].mxu0
    %2909 = vdwg.mxu0
    %v2910 = vld [vmem:[%s6] sm:$0xff]
    %v2911 = vld [vmem:[%s6 + $0x8] sm:$0xff]
    %v2913 = vsel %vm1289, %v2910, 0
    %v2916 = vsel %vm1289, %v2911, 0
    %2918 = vmatprep.subr.mxu0 0.0
    %2919 = vmatpush1.msra.mxu0 %v2907
    %2920 = vmatprep.subr.mxu0 0.0
    %2921 = vmatpush1.msra.mxu0 0.0
    %2922 = vmatprep.subr.mxu0 0.0
    %2923 = vmatpush1.msra.mxu0 0.0
    %2924 = vmatprep.subr.mxu0 0.0
    %2925 = vmatpush1.msra.mxu0 0.0
    %2926 = vmatprep.subr.mxu0 0.0
    %2927 = vmatpush1.msra.mxu0 0.0
    %2928 = vmatprep.subr.mxu0 0.0
    %2929 = vmatpush1.msra.mxu0 0.0
    %2930 = vmatprep.subr.mxu0 0.0
    %2931 = vmatpush1.msra.mxu0 0.0
    %2932 = vmatprep.subr.mxu0 0.0
    %2933 = vmatpush1.msra.mxu0 0.0
    %2934 = vmatprep.subr.mxu0 0.0
    %2935 = vmatpush1.msra.mxu0 0.0
    %2936 = vmatprep.subr.mxu0 0.0
    %2937 = vmatpush1.msra.mxu0 0.0
    %2938 = vmatprep.subr.mxu0 0.0
    %2939 = vmatpush1.msra.mxu0 0.0
    %2940 = vmatprep.subr.mxu0 0.0
    %2941 = vmatpush1.msra.mxu0 0.0
    %2942 = vmatprep.subr.mxu0 0.0
    %2943 = vmatpush1.msra.mxu0 0.0
    %2944 = vmatprep.subr.mxu0 0.0
    %2945 = vmatpush1.msra.mxu0 0.0
    %2946 = vmatprep.subr.mxu0 0.0
    %2947 = vmatpush1.msra.mxu0 0.0
    %2948 = vmatprep.subr.mxu0 0.0
    %2949 = vmatpush1.msra.mxu0 0.0
    %2950 = vmatprep.subr.mxu0 0.0
    %2951 = vmatpush1.msra.mxu0 0.0
    %2952 = vmatprep.subr.mxu0 0.0
    %2953 = vmatpush1.msra.mxu0 0.0
    %2954 = vmatprep.subr.mxu0 0.0
    %2955 = vmatpush1.msra.mxu0 0.0
    %2956 = vmatprep.subr.mxu0 0.0
    %2957 = vmatpush1.msra.mxu0 0.0
    %2958 = vmatprep.subr.mxu0 0.0
    %2959 = vmatpush1.msra.mxu0 0.0
    %2960 = vmatprep.subr.mxu0 0.0
    %2961 = vmatpush1.msra.mxu0 0.0
    %2962 = vmatprep.subr.mxu0 0.0
    %2963 = vmatpush1.msra.mxu0 0.0
    %2964 = vmatprep.subr.mxu0 0.0
    %2965 = vmatpush1.msra.mxu0 0.0
    %2966 = vmatprep.subr.mxu0 0.0
    %2967 = vmatpush1.msra.mxu0 0.0
    %2968 = vmatprep.subr.mxu0 0.0
    %2969 = vmatpush1.msra.mxu0 0.0
    %2970 = vmatprep.subr.mxu0 0.0
    %2971 = vmatpush1.msra.mxu0 0.0
    %2972 = vmatprep.subr.mxu0 0.0
    %2973 = vmatpush1.msra.mxu0 0.0
    %2974 = vmatprep.subr.mxu0 0.0
    %2975 = vmatpush1.msra.mxu0 0.0
    %2976 = vmatprep.subr.mxu0 0.0
    %2977 = vmatpush1.msra.mxu0 0.0
    %2978 = vmatprep.subr.mxu0 0.0
    %2979 = vmatpush1.msra.mxu0 0.0
    %2980 = vmatprep.subr.mxu0 0.0
    %2981 = vmatpush1.msra.mxu0 0.0
    %2982 = vmatprep.mubr.f32.mxu0 0.0
    %2983 = vmatmul.mubr.f32.gmra.mrb[0].mxu0 %v2913
    %v2984 = vpop.f32.mrb[0].mxu0
    %v2985 = vadd.f32 0.0, %v2984
    %v2986 = vpop.f32.mrb[0].mxu0
    %2987 = vmatprep.mubr.f32.mxu0 0.0
    %2988 = vmatmul.mubr.f32.gmra.mrb[0].mxu0 %v2916
    %v2989 = vpop.f32.mrb[0].mxu0
    %v2990 = vadd.f32 0.0, %v2989
    %v2991 = vpop.f32.mrb[0].mxu0
    %2992 = vdwg.mxu0
    %v2993 = vadd.f32 %v1285, %v2985
    %v2994 = vadd.f32 %v1286, %v2990
    %v2995 = vsel %vm107, %v2993, 0.0
    %2996 = vadd.xlane.f32.xlu0 %v2995
    %v2997 = vpop.xlane.xlu0 %2996
    %v2998 = vsel %vm107, %v2994, 0.0
    %2999 = vadd.xlane.f32.xlu0 %v2998
    %v3000 = vpop.xlane.xlu0 %2999
    %v3001 = vmul.f32 %v2997, %v1254
    %v3002 = vmul.f32 %v3000, %v1254
    %v3003 = vsub.f32 %v2993, %v3001
    %v3004 = vsub.f32 %v2994, %v3002
    %v3005 = vmul.f32 %v3003, %v3003
    %v3006 = vmul.f32 %v3004, %v3004
    %v3007 = vsel %vm107, %v3005, 0.0
    %3008 = vadd.xlane.f32.xlu0 %v3007
    %v3009 = vpop.xlane.xlu0 %3008
    %v3010 = vsel %vm107, %v3006, 0.0
    %3011 = vadd.xlane.f32.xlu0 %v3010
    %v3012 = vpop.xlane.xlu0 %3011
    %v3013 = vmul.f32 %v3009, %v1254
    %v3014 = vmul.f32 %v3012, %v1254
    %v3015 = vadd.f32 %v3013, 1e-05
    %v3016 = vadd.f32 %v3014, 1e-05
    %v3017 = vrsqrt.pop %v3015
    %v3018 = vrsqrt.pop %v3016
    %v3019 = vmul.f32 %v3003, %v3017
    %v3020 = vmul.f32 %v3004, %v3018
    %v3021 = vlaneseq
    %v3022 = vshrl.u32 %v3021, 7
    %v3023 = vsub.s32 1, %v3022
    %v3024 = vrot.slane %v63, %v3023
    %v3025 = vmul.f32 %v3019, %v3024
    %v3026 = vmul.f32 %v3020, %v3024
    %v3027 = vlaneseq
    %v3028 = vshrl.u32 %v3027, 7
    %v3029 = vsub.s32 2, %v3028
    %v3030 = vrot.slane %v63, %v3029
    %v3031 = vadd.f32 %v3025, %v3030
    %v3032 = vadd.f32 %v3026, %v3030
    %v3033 = vld [vmem:[%s13] sm:$0xff]
    %v3034 = vld [vmem:[%s13 + $0x8] sm:$0xff]
    %v3035 = vld [vmem:[%s13 + $0x10] sm:$0xff]
    %v3036 = vld [vmem:[%s13 + $0x18] sm:$0xff]
    %v3037 = vld [vmem:[%s14] sm:$0x1]
    %v3039 = vlaneseq
    %v3040 = vshrl.u32 %v3039, 7
    %v3041 = vsub.s32 0, %v3040
    %v3042 = vrot.slane %v3037, %v3041
    %v3045 = vsel %vm107, %v3031, 0
    %v3048 = vsel %vm107, %v3032, 0
    %3050 = vmatprep.subr.mxu0 0.0
    %3051 = vmatpush1.msra.mxu0 %v3033
    %3052 = vmatprep.subr.mxu0 0.0
    %3053 = vmatpush1.msra.mxu0 %v3034
    %3054 = vmatprep.subr.mxu0 0.0
    %3055 = vmatpush1.msra.mxu0 %v3035
    %3056 = vmatprep.subr.mxu0 0.0
    %3057 = vmatpush1.msra.mxu0 %v3036
    %3058 = vmatprep.subr.mxu0 0.0
    %3059 = vmatpush1.msra.mxu0 0.0
    %3060 = vmatprep.subr.mxu0 0.0
    %3061 = vmatpush1.msra.mxu0 0.0
    %3062 = vmatprep.subr.mxu0 0.0
    %3063 = vmatpush1.msra.mxu0 0.0
    %3064 = vmatprep.subr.mxu0 0.0
    %3065 = vmatpush1.msra.mxu0 0.0
    %3066 = vmatprep.subr.mxu0 0.0
    %3067 = vmatpush1.msra.mxu0 0.0
    %3068 = vmatprep.subr.mxu0 0.0
    %3069 = vmatpush1.msra.mxu0 0.0
    %3070 = vmatprep.subr.mxu0 0.0
    %3071 = vmatpush1.msra.mxu0 0.0
    %3072 = vmatprep.subr.mxu0 0.0
    %3073 = vmatpush1.msra.mxu0 0.0
    %3074 = vmatprep.subr.mxu0 0.0
    %3075 = vmatpush1.msra.mxu0 0.0
    %3076 = vmatprep.subr.mxu0 0.0
    %3077 = vmatpush1.msra.mxu0 0.0
    %3078 = vmatprep.subr.mxu0 0.0
    %3079 = vmatpush1.msra.mxu0 0.0
    %3080 = vmatprep.subr.mxu0 0.0
    %3081 = vmatpush1.msra.mxu0 0.0
    %3082 = vmatprep.subr.mxu0 0.0
    %3083 = vmatpush1.msra.mxu0 0.0
    %3084 = vmatprep.subr.mxu0 0.0
    %3085 = vmatpush1.msra.mxu0 0.0
    %3086 = vmatprep.subr.mxu0 0.0
    %3087 = vmatpush1.msra.mxu0 0.0
    %3088 = vmatprep.subr.mxu0 0.0
    %3089 = vmatpush1.msra.mxu0 0.0
    %3090 = vmatprep.subr.mxu0 0.0
    %3091 = vmatpush1.msra.mxu0 0.0
    %3092 = vmatprep.subr.mxu0 0.0
    %3093 = vmatpush1.msra.mxu0 0.0
    %3094 = vmatprep.subr.mxu0 0.0
    %3095 = vmatpush1.msra.mxu0 0.0
    %3096 = vmatprep.subr.mxu0 0.0
    %3097 = vmatpush1.msra.mxu0 0.0
    %3098 = vmatprep.subr.mxu0 0.0
    %3099 = vmatpush1.msra.mxu0 0.0
    %3100 = vmatprep.subr.mxu0 0.0
    %3101 = vmatpush1.msra.mxu0 0.0
    %3102 = vmatprep.subr.mxu0 0.0
    %3103 = vmatpush1.msra.mxu0 0.0
    %3104 = vmatprep.subr.mxu0 0.0
    %3105 = vmatpush1.msra.mxu0 0.0
    %3106 = vmatprep.subr.mxu0 0.0
    %3107 = vmatpush1.msra.mxu0 0.0
    %3108 = vmatprep.subr.mxu0 0.0
    %3109 = vmatpush1.msra.mxu0 0.0
    %3110 = vmatprep.subr.mxu0 0.0
    %3111 = vmatpush1.msra.mxu0 0.0
    %3112 = vmatprep.subr.mxu0 0.0
    %3113 = vmatpush1.msra.mxu0 0.0
    %3114 = vmatprep.mubr.f32.mxu0 0.0
    %3115 = vmatmul.mubr.f32.gmra.mrb[0].mxu0 %v3045
    %v3116 = vpop.f32.mrb[0].mxu0
    %v3117 = vadd.f32 %v3042, %v3116
    %v3118 = vpop.f32.mrb[0].mxu0
    %3119 = vmatprep.mubr.f32.mxu0 0.0
    %3120 = vmatmul.mubr.f32.gmra.mrb[0].mxu0 %v3048
    %v3121 = vpop.f32.mrb[0].mxu0
    %v3122 = vadd.f32 %v3042, %v3121
    %v3123 = vpop.f32.mrb[0].mxu0
    %3124 = vdwg.mxu0
    %v3125 = vmax.f32 %v3117, 0.0
    %v3126 = vmax.f32 %v3122, 0.0
    %v3127 = vld [vmem:[%s15] sm:$0xff]
    %v3128 = vld [vmem:[%s15 + $0x8] sm:$0xff]
    %v3129 = vld [vmem:[%s15 + $0x10] sm:$0xff]
    %v3130 = vld [vmem:[%s15 + $0x18] sm:$0xff]
    %v3131 = vld [vmem:[%s15 + $0x20] sm:$0xff]
    %v3132 = vld [vmem:[%s15 + $0x28] sm:$0xff]
    %v3133 = vld [vmem:[%s15 + $0x30] sm:$0xff]
    %v3134 = vld [vmem:[%s15 + $0x38] sm:$0xff]
    %v3135 = vlaneseq
    %v3136 = vshrl.u32 %v3135, 7
    %v3137 = vsub.s32 6, %v3136
    %v3138 = vrot.slane %v62, %v3137
    %vm3139 = vcmask 523264
    %v3141 = vsel %vm3139, %v3125, 0
    %v3144 = vsel %vm3139, %v3126, 0
    %3146 = vmatprep.subr.mxu0 0.0
    %3147 = vmatpush1.msra.mxu0 %v3127
    %3148 = vmatprep.subr.mxu0 0.0
    %3149 = vmatpush1.msra.mxu0 %v3128
    %3150 = vmatprep.subr.mxu0 0.0
    %3151 = vmatpush1.msra.mxu0 %v3129
    %3152 = vmatprep.subr.mxu0 0.0
    %3153 = vmatpush1.msra.mxu0 %v3130
    %3154 = vmatprep.subr.mxu0 0.0
    %3155 = vmatpush1.msra.mxu0 %v3131
    %3156 = vmatprep.subr.mxu0 0.0
    %3157 = vmatpush1.msra.mxu0 %v3132
    %3158 = vmatprep.subr.mxu0 0.0
    %3159 = vmatpush1.msra.mxu0 %v3133
    %3160 = vmatprep.subr.mxu0 0.0
    %3161 = vmatpush1.msra.mxu0 %v3134
    %3162 = vmatprep.subr.mxu0 0.0
    %3163 = vmatpush1.msra.mxu0 0.0
    %3164 = vmatprep.subr.mxu0 0.0
    %3165 = vmatpush1.msra.mxu0 0.0
    %3166 = vmatprep.subr.mxu0 0.0
    %3167 = vmatpush1.msra.mxu0 0.0
    %3168 = vmatprep.subr.mxu0 0.0
    %3169 = vmatpush1.msra.mxu0 0.0
    %3170 = vmatprep.subr.mxu0 0.0
    %3171 = vmatpush1.msra.mxu0 0.0
    %3172 = vmatprep.subr.mxu0 0.0
    %3173 = vmatpush1.msra.mxu0 0.0
    %3174 = vmatprep.subr.mxu0 0.0
    %3175 = vmatpush1.msra.mxu0 0.0
    %3176 = vmatprep.subr.mxu0 0.0
    %3177 = vmatpush1.msra.mxu0 0.0
    %3178 = vmatprep.subr.mxu0 0.0
    %3179 = vmatpush1.msra.mxu0 0.0
    %3180 = vmatprep.subr.mxu0 0.0
    %3181 = vmatpush1.msra.mxu0 0.0
    %3182 = vmatprep.subr.mxu0 0.0
    %3183 = vmatpush1.msra.mxu0 0.0
    %3184 = vmatprep.subr.mxu0 0.0
    %3185 = vmatpush1.msra.mxu0 0.0
    %3186 = vmatprep.subr.mxu0 0.0
    %3187 = vmatpush1.msra.mxu0 0.0
    %3188 = vmatprep.subr.mxu0 0.0
    %3189 = vmatpush1.msra.mxu0 0.0
    %3190 = vmatprep.subr.mxu0 0.0
    %3191 = vmatpush1.msra.mxu0 0.0
    %3192 = vmatprep.subr.mxu0 0.0
    %3193 = vmatpush1.msra.mxu0 0.0
    %3194 = vmatprep.subr.mxu0 0.0
    %3195 = vmatpush1.msra.mxu0 0.0
    %3196 = vmatprep.subr.mxu0 0.0
    %3197 = vmatpush1.msra.mxu0 0.0
    %3198 = vmatprep.subr.mxu0 0.0
    %3199 = vmatpush1.msra.mxu0 0.0
    %3200 = vmatprep.subr.mxu0 0.0
    %3201 = vmatpush1.msra.mxu0 0.0
    %3202 = vmatprep.subr.mxu0 0.0
    %3203 = vmatpush1.msra.mxu0 0.0
    %3204 = vmatprep.subr.mxu0 0.0
    %3205 = vmatpush1.msra.mxu0 0.0
    %3206 = vmatprep.subr.mxu0 0.0
    %3207 = vmatpush1.msra.mxu0 0.0
    %3208 = vmatprep.subr.mxu0 0.0
    %3209 = vmatpush1.msra.mxu0 0.0
    %3210 = vmatprep.mubr.f32.mxu0 0.0
    %3211 = vmatmul.mubr.f32.gmra.mrb[0].mxu0 %v3141
    %v3212 = vpop.f32.mrb[0].mxu0
    %v3213 = vadd.f32 %v3138, %v3212
    %v3214 = vpop.f32.mrb[0].mxu0
    %3215 = vmatprep.mubr.f32.mxu0 0.0
    %3216 = vmatmul.mubr.f32.gmra.mrb[0].mxu0 %v3144
    %v3217 = vpop.f32.mrb[0].mxu0
    %v3218 = vadd.f32 %v3138, %v3217
    %v3219 = vpop.f32.mrb[0].mxu0
    %3220 = vdwg.mxu0
    %v3221 = vadd.f32 %v3031, %v3213
    %v3222 = vadd.f32 %v3032, %v3218
    %v3223 = vsel %vm107, %v3221, 0.0
    %3224 = vadd.xlane.f32.xlu0 %v3223
    %v3225 = vpop.xlane.xlu0 %3224
    %v3226 = vsel %vm107, %v3222, 0.0
    %3227 = vadd.xlane.f32.xlu0 %v3226
    %v3228 = vpop.xlane.xlu0 %3227
    %v3229 = vmul.f32 %v3225, %v1254
    %v3230 = vmul.f32 %v3228, %v1254
    %v3231 = vsub.f32 %v3221, %v3229
    %v3232 = vsub.f32 %v3222, %v3230
    %v3233 = vmul.f32 %v3231, %v3231
    %v3234 = vmul.f32 %v3232, %v3232
    %v3235 = vsel %vm107, %v3233, 0.0
    %3236 = vadd.xlane.f32.xlu0 %v3235
    %v3237 = vpop.xlane.xlu0 %3236
    %v3238 = vsel %vm107, %v3234, 0.0
    %3239 = vadd.xlane.f32.xlu0 %v3238
    %v3240 = vpop.xlane.xlu0 %3239
    %v3241 = vmul.f32 %v3237, %v1254
    %v3242 = vmul.f32 %v3240, %v1254
    %v3243 = vadd.f32 %v3241, 1e-05
    %v3244 = vadd.f32 %v3242, 1e-05
    %v3245 = vrsqrt.pop %v3243
    %v3246 = vrsqrt.pop %v3244
    %v3247 = vmul.f32 %v3231, %v3245
    %v3248 = vmul.f32 %v3232, %v3246
    %v3249 = vlaneseq
    %v3250 = vshrl.u32 %v3249, 7
    %v3251 = vsub.s32 3, %v3250
    %v3252 = vrot.slane %v63, %v3251
    %v3253 = vmul.f32 %v3247, %v3252
    %v3254 = vmul.f32 %v3248, %v3252
    %v3255 = vlaneseq
    %v3256 = vshrl.u32 %v3255, 7
    %v3257 = vsub.s32 4, %v3256
    %v3258 = vrot.slane %v63, %v3257
    %v3259 = vadd.f32 %v3253, %v3258
    %v3260 = vadd.f32 %v3254, %v3258
    %3261 = vst.msk [vmem:[#allocation2] sm:$0xff] %vm107, %v3259
    %3262 = vst.msk [vmem:[#allocation2 + $0x8] sm:$0xff] %vm107, %v3260
    // Predicated region
    $region70: #{tpu_custom_call.1} parent=1 // pred_check
      _
    $region71: #{tpu_custom_call.1} parent=1 // pred_check_branch
      %3264 = sbr.rel (0) target = $region73
    $region72: #{tpu_custom_call.1} parent=1 // pred_region
      %s3266 = ssub.s32 256, 256
      %3267 = vsyncadd [#allocation3], %s3266
      %s3268 = sshll.u32 [#allocation2], 4
      %s3269 = int_to_ptr.vmem [resolvable:$true] %s3268
      %3274 = dma.vmem_to_hbm [thread:$0]  %s3269, 256, %s17, [#allocation3], 128, 128, 8
    $region73: #{tpu_custom_call.1} parent=1 // pred_fallthru
      _
    // Predicated region
    $region74: #{tpu_custom_call.1} parent=1 // pred_check
      _
    $region75: #{tpu_custom_call.1} parent=1 // pred_check_branch
      %3276 = sbr.rel (0) target = $region77
    $region76: #{tpu_custom_call.1} parent=1 // pred_region
      %s3278 = ssub.s32 256, 256
      %3279 = vsyncadd [#allocation5], %s3278
      %s3280 = sshll.u32 [#allocation4], 4
      %s3281 = int_to_ptr.vmem [resolvable:$true] %s3280
      %3286 = dma.vmem_to_hbm [thread:$0]  %s3281, 256, %s18, [#allocation5], 128, 128, 8
    $region77: #{tpu_custom_call.1} parent=1 // pred_fallthru
      _
    // Predicated region
    $region78: #{tpu_custom_call.1} parent=1 // pred_check
      _
    $region79: #{tpu_custom_call.1} parent=1 // pred_check_branch
      %3288 = sbr.rel (0) target = $region81
    $region80: #{tpu_custom_call.1} parent=1 // pred_region
      %3289 = dma.done [#allocation3], 256
    $region81: #{tpu_custom_call.1} parent=1 // pred_fallthru
      _
    // Predicated region
    $region82: #{tpu_custom_call.1} parent=1 // pred_check
      _
    $region83: #{tpu_custom_call.1} parent=1 // pred_check_branch
      %3291 = sbr.rel (0) target = $region85
    $region84: #{tpu_custom_call.1} parent=1 // pred_region
      %3292 = dma.done [#allocation5], 256
    $region85: #{tpu_custom_call.1} parent=1 // pred_fallthru
      _
    %3293 = vsyncpa [#allocation3], 1
    %3294 = vsyncpa [#allocation5], 1

</llo_original>
